<compile_context>
chip_gen: v7x
topology: tpu7x:2x2x1
jax: 0.10.0
libtpu: 0.0.40
codegen_flags: <defaults>
</compile_context>

<pallas_src>
import functools

import jax
import jax.numpy as jnp
from jax.experimental import pallas as pl
from jax.experimental.pallas import tpu as pltpu

H1 = 1024                    # first hidden width (fixed by the module)
H2 = 4096                    # second hidden width (fixed by the module)
TK = 2048                    # streaming block along the 4096 hidden dim
NC = 2                       # leading "parallel" axis: weight-stream split across TCs (v7x)
KT_HALF = H2 // (NC * TK)    # inner reduction steps per core (= 1 here)


def labelnet_kernel(x_ref, w1_ref, b1_ref, w2q_ref, w2s_ref, b2_ref, wch_ref,
                    out_ref, feat1_ref):
    k = pl.program_id(1)

    @pl.when(k == 0)
    def _init():
        # features1 = relu(x @ W1 + b1), kept resident in VMEM as a bf16 MXU operand.
        h1 = jnp.dot(x_ref[...], w1_ref[...], preferred_element_type=jnp.float32)
        feat1_ref[...] = jnp.maximum(h1 + b1_ref[...], 0.0).astype(feat1_ref.dtype)
        out_ref[...] = jnp.zeros_like(out_ref)

    # Second layer block: int8 W2 upcast to bf16 (exact for int8 values); the
    # per-output-channel dequant scale is applied to the (B, TK) result, then
    # bias + ReLU, re-rounded to bf16 as the operand of the fused head matmul.
    f2 = jnp.dot(feat1_ref[...], w2q_ref[...].astype(jnp.bfloat16),
                 preferred_element_type=jnp.float32)
    f2 = jnp.maximum(f2 * w2s_ref[...] + b2_ref[...], 0.0).astype(jnp.bfloat16)

    # Fused classifier|hash partial matmul over this TK slice of the hidden dim,
    # accumulated in the resident f32 output block (bias/tanh/softmax in wrapper).
    out_ref[...] += jnp.dot(f2, wch_ref[...], preferred_element_type=jnp.float32)


def prepare_params(params):
    """One-time packing to the kernel layout (hoisted off the per-call path).

    W2 -> int8 + per-output-channel f32 scale (halves the dominant HBM stream).
    Wc|Wh fused to one bf16 [H2, L+C] weight; biases stay f32.
    """
    w1, b1, w2, b2, wc, bc, wh, bh = params

    # Symmetric per-output-channel int8 quantization of W2.
    w2_absmax = jnp.max(jnp.abs(w2), axis=0, keepdims=True)          # (1, H2)
    w2_scale = jnp.maximum(w2_absmax, 1e-12) / 127.0                 # (1, H2) f32
    w2_q = jnp.clip(jnp.round(w2 / w2_scale), -127, 127).astype(jnp.int8)

    wch = jnp.concatenate([wc, wh], axis=1).astype(jnp.bfloat16)      # [H2, L + C]
    bch = jnp.concatenate([bc, bh], axis=1)                           # [1,  L + C] f32
    return (w1.astype(jnp.bfloat16), b1, w2_q, w2_scale, b2, wch, bch)


@functools.partial(jax.jit, static_argnames=("label_size", "code_length"))
def labelnet_forward(x, prepared, *, label_size, code_length):
    w1, b1, w2q, w2s, b2, wch, bch = prepared
    B, d_in = x.shape
    L, C = label_size, code_length

    x_bf = x.astype(jnp.bfloat16)

    # Advisory cost estimate: memory-heavy, compute-light.
    flops = 2 * B * (d_in * H1 + H1 * H2 + H2 * (L + C))
    bytes_accessed = (B * d_in * 2            # x (bf16)
                      + d_in * H1 * 2 + H1 * 4          # W1 bf16, b1 f32
                      + H1 * H2 * 1 + H2 * 4 + H2 * 4   # W2 int8, scales f32, b2 f32
                      + H2 * (L + C) * 2                # Wc|Wh bf16
                      + NC * B * (L + C) * 4)           # per-core partial outputs

    grid_spec = pltpu.PrefetchScalarGridSpec(
        num_scalar_prefetch=0,
        grid=(NC, KT_HALF),
        in_specs=[
            pl.BlockSpec((B, d_in), lambda c, k: (0, 0)),                  # x (resident)
            pl.BlockSpec((d_in, H1), lambda c, k: (0, 0)),                 # W1 bf16
            pl.BlockSpec((1, H1), lambda c, k: (0, 0)),                    # b1 f32
            pl.BlockSpec((H1, TK), lambda c, k: (0, c * KT_HALF + k)),     # W2 int8 block
            pl.BlockSpec((1, TK), lambda c, k: (0, c * KT_HALF + k)),      # W2 scales
            pl.BlockSpec((1, TK), lambda c, k: (0, c * KT_HALF + k)),      # b2 block
            pl.BlockSpec((TK, L + C), lambda c, k: (c * KT_HALF + k, 0)),  # Wc|Wh block
        ],
        # One lane-packed (B, L+C) pre-activation slab per core; leading dim squeezed.
        out_specs=pl.BlockSpec((None, B, L + C), lambda c, k: (c, 0, 0)),
        scratch_shapes=[
            pltpu.VMEM((B, H1), jnp.bfloat16),        # features1 (MXU operand)
        ],
    )

    partials = pl.pallas_call(
        labelnet_kernel,
        out_shape=jax.ShapeDtypeStruct((NC, B, L + C), jnp.float32),
        grid_spec=grid_spec,
        compiler_params=pltpu.CompilerParams(
            dimension_semantics=("parallel", "arbitrary"),
            vmem_limit_bytes=40 << 20,    # actual per-core footprint ~5 MiB; fits v7x
        ),
        cost_estimate=pl.CostEstimate(
            flops=flops, transcendentals=0, bytes_accessed=bytes_accessed),
    )(x_bf, w1, b1, w2q, w2s, b2, wch)

    # Epilogue in XLA: sum per-core partials, add fused bias, split heads.
    full = partials.sum(axis=0) + bch                  # (B, L + C) f32
    label_pre = full[:, :L]
    hash_code = jnp.tanh(full[:, L:])
    label_predict = jax.nn.softmax(label_pre, axis=1)
    return label_pre, hash_code, label_predict


def init_params(key, input_size, code_length, label_size):
    """Deterministic init mimicking torch.nn.Linear default (U[-1/sqrt(fan_in), +])."""
    ks = jax.random.split(key, 8)

    def lin(kw, kb, fan_in, fan_out):
        bound = 1.0 / jnp.sqrt(fan_in)
        w = jax.random.uniform(kw, (fan_in, fan_out), jnp.float32, -bound, bound)
        b = jax.random.uniform(kb, (1, fan_out), jnp.float32, -bound, bound)
        return w, b

    w1, b1 = lin(ks[0], ks[1], input_size, H1)
    w2, b2 = lin(ks[2], ks[3], H1, H2)
    wc, bc = lin(ks[4], ks[5], H2, label_size)
    wh, bh = lin(ks[6], ks[7], H2, code_length)
    return (w1, b1, w2, b2, wc, bc, wh, bh)


def labelnet_reference(x, params):
    w1, b1, w2, b2, wc, bc, wh, bh = params
    f1 = jnp.maximum(x @ w1 + b1, 0.0)
    f2 = jnp.maximum(f1 @ w2 + b2, 0.0)
    label_pre = f2 @ wc + bc
    hash_code = jnp.tanh(f2 @ wh + bh)
    label_predict = jax.nn.softmax(label_pre, axis=1)
    return label_pre, hash_code, label_predict


if __name__ == "__main__":
    batch = 8
    input_size = 32      # e.g. number of input label features
    code_length = 16
    label_size = 16

    key = jax.random.PRNGKey(0)
    kx, kp = jax.random.split(key)
    x = jax.random.normal(kx, (batch, input_size), jnp.float32)
    params = init_params(kp, input_size, code_length, label_size)
    prepared = prepare_params(params)

    label_pre, hash_code, label_predict = labelnet_forward(
        x, prepared, label_size=label_size, code_length=code_length)
    jax.block_until_ready((label_pre, hash_code, label_predict))

    # f32 reference; tolerances loosened because the kernel streams bf16 / int8 weights.
    ref_pre, ref_hash, ref_prob = labelnet_reference(x, params)
    assert jnp.allclose(label_pre, ref_pre, atol=5e-2, rtol=5e-2)
    assert jnp.allclose(hash_code, ref_hash, atol=5e-2, rtol=5e-2)
    assert jnp.allclose(label_predict, ref_prob, atol=1e-2, rtol=5e-2)

    print("KERNEL_OK")
</pallas_src>

<mosaic_0001>
module attributes {stable_mosaic.version = 11 : i64} {
  func.func @labelnet_kernel(%arg0: i32, %arg1: i32, %arg2: memref<8x32xbf16, #tpu.memory_space<vmem>>, %arg3: memref<32x1024xbf16, #tpu.memory_space<vmem>>, %arg4: memref<1x1024xf32, #tpu.memory_space<vmem>>, %arg5: memref<1024x2048xi8, #tpu.memory_space<vmem>>, %arg6: memref<1x2048xf32, #tpu.memory_space<vmem>>, %arg7: memref<1x2048xf32, #tpu.memory_space<vmem>>, %arg8: memref<2048x32xbf16, #tpu.memory_space<vmem>>, %arg9: memref<1x8x32xf32, #tpu.memory_space<vmem>>, %arg10: memref<8x1024xbf16, #tpu.memory_space<vmem>>) attributes {dimension_semantics = [#tpu.dimension_semantics<parallel>, #tpu.dimension_semantics<arbitrary>], iteration_bounds = array<i64: 2, 1>, scalar_prefetch = 0 : i64, scratch_operands = 1 : i64, tpu.core_type = #tpu.core_type<tc>, window_params = [{pipeline_mode = #tpu.pipeline_mode<synchronous>, transform_indices = @transform_0, window_bounds = array<i64: 8, 32>}, {pipeline_mode = #tpu.pipeline_mode<synchronous>, transform_indices = @transform_1, window_bounds = array<i64: 32, 1024>}, {pipeline_mode = #tpu.pipeline_mode<synchronous>, transform_indices = @transform_2, window_bounds = array<i64: 1, 1024>}, {transform_indices = @transform_3, window_bounds = array<i64: 1024, 2048>}, {transform_indices = @transform_4, window_bounds = array<i64: 1, 2048>}, {transform_indices = @transform_5, window_bounds = array<i64: 1, 2048>}, {transform_indices = @transform_6, window_bounds = array<i64: 2048, 32>}, {transform_indices = @transform_7, window_bounds = array<i64: 1, 8, 32>}]} {
    %c0_i32 = arith.constant 0 : i32
    %0 = arith.cmpi eq, %arg1, %c0_i32 : i32
    %1 = arith.extui %0 : i1 to i32
    %c0_i32_0 = arith.constant 0 : i32
    %2 = arith.cmpi ne, %1, %c0_i32_0 : i32
    scf.if %2 {
      %c0_18 = arith.constant 0 : index
      %c0_19 = arith.constant 0 : index
      %24 = vector.load %arg2[%c0_18, %c0_19] : memref<8x32xbf16, #tpu.memory_space<vmem>>, vector<8x32xbf16>
      %c0_20 = arith.constant 0 : index
      %c0_21 = arith.constant 0 : index
      %25 = vector.load %arg3[%c0_20, %c0_21] : memref<32x1024xbf16, #tpu.memory_space<vmem>>, vector<32x1024xbf16>
      %cst_22 = arith.constant dense<0.000000e+00> : vector<8x1024xf32>
      %26 = tpu.matmul %24, %25, %cst_22 {dimension_numbers = #tpu.dot_dimension_numbers<[1], [0], [0], [1], [0, 0, 1, 1], [], []>} : vector<8x32xbf16>, vector<32x1024xbf16>, vector<8x1024xf32> -> vector<8x1024xf32>
      %c0_23 = arith.constant 0 : index
      %c0_24 = arith.constant 0 : index
      %27 = vector.load %arg4[%c0_23, %c0_24] : memref<1x1024xf32, #tpu.memory_space<vmem>>, vector<1x1024xf32>
      %28 = vector.broadcast %27 : vector<1x1024xf32> to vector<8x1024xf32>
      %29 = arith.addf %26, %28 : vector<8x1024xf32>
      %cst_25 = arith.constant 0.000000e+00 : f32
      %30 = vector.broadcast %cst_25 : f32 to vector<8x1024xf32>
      %31 = arith.maximumf %29, %30 : vector<8x1024xf32>
      %32 = arith.truncf %31 : vector<8x1024xf32> to vector<8x1024xbf16>
      %c0_26 = arith.constant 0 : index
      %c0_27 = arith.constant 0 : index
      %33 = vector.load %arg10[%c0_26, %c0_27] : memref<8x1024xbf16, #tpu.memory_space<vmem>>, vector<8x1024xbf16>
      tpu.vector_store %arg10[%c0_26, %c0_27], %32 {strides = array<i32>} : memref<8x1024xbf16, #tpu.memory_space<vmem>>, vector<8x1024xbf16>,
      %cst_28 = arith.constant 0.000000e+00 : f32
      %34 = vector.broadcast %cst_28 : f32 to vector<8x32xf32>
      %c0_29 = arith.constant 0 : index
      %c0_30 = arith.constant 0 : index
      %c0_31 = arith.constant 0 : index
      %35 = vector.load %arg9[%c0_29, %c0_30, %c0_31] : memref<1x8x32xf32, #tpu.memory_space<vmem>>, vector<1x8x32xf32>
      %36 = vector.shape_cast %35 : vector<1x8x32xf32> to vector<8x32xf32>
      %37 = vector.shape_cast %34 : vector<8x32xf32> to vector<1x8x32xf32>
      tpu.vector_store %arg9[%c0_29, %c0_30, %c0_31], %37 {strides = array<i32>} : memref<1x8x32xf32, #tpu.memory_space<vmem>>, vector<1x8x32xf32>,
    } else {
    }
    %c0 = arith.constant 0 : index
    %c0_1 = arith.constant 0 : index
    %3 = vector.load %arg10[%c0, %c0_1] : memref<8x1024xbf16, #tpu.memory_space<vmem>>, vector<8x1024xbf16>
    %c0_2 = arith.constant 0 : index
    %c0_3 = arith.constant 0 : index
    %4 = vector.load %arg5[%c0_2, %c0_3] : memref<1024x2048xi8, #tpu.memory_space<vmem>>, vector<1024x2048xi8>
    %5 = arith.sitofp %4 : vector<1024x2048xi8> to vector<1024x2048xbf16>
    %cst = arith.constant dense<0.000000e+00> : vector<8x2048xf32>
    %6 = tpu.matmul %3, %5, %cst {dimension_numbers = #tpu.dot_dimension_numbers<[1], [0], [0], [1], [0, 0, 1, 1], [], []>} : vector<8x1024xbf16>, vector<1024x2048xbf16>, vector<8x2048xf32> -> vector<8x2048xf32>
    %c0_4 = arith.constant 0 : index
    %c0_5 = arith.constant 0 : index
    %7 = vector.load %arg6[%c0_4, %c0_5] : memref<1x2048xf32, #tpu.memory_space<vmem>>, vector<1x2048xf32>
    %8 = vector.broadcast %7 : vector<1x2048xf32> to vector<8x2048xf32>
    %9 = arith.mulf %6, %8 : vector<8x2048xf32>
    %c0_6 = arith.constant 0 : index
    %c0_7 = arith.constant 0 : index
    %10 = vector.load %arg7[%c0_6, %c0_7] : memref<1x2048xf32, #tpu.memory_space<vmem>>, vector<1x2048xf32>
    %11 = vector.broadcast %10 : vector<1x2048xf32> to vector<8x2048xf32>
    %12 = arith.addf %9, %11 : vector<8x2048xf32>
    %cst_8 = arith.constant 0.000000e+00 : f32
    %13 = vector.broadcast %cst_8 : f32 to vector<8x2048xf32>
    %14 = arith.maximumf %12, %13 : vector<8x2048xf32>
    %15 = arith.truncf %14 : vector<8x2048xf32> to vector<8x2048xbf16>
    %c0_9 = arith.constant 0 : index
    %c0_10 = arith.constant 0 : index
    %c0_11 = arith.constant 0 : index
    %16 = vector.load %arg9[%c0_9, %c0_10, %c0_11] : memref<1x8x32xf32, #tpu.memory_space<vmem>>, vector<1x8x32xf32>
    %17 = vector.shape_cast %16 : vector<1x8x32xf32> to vector<8x32xf32>
    %c0_12 = arith.constant 0 : index
    %c0_13 = arith.constant 0 : index
    %18 = vector.load %arg8[%c0_12, %c0_13] : memref<2048x32xbf16, #tpu.memory_space<vmem>>, vector<2048x32xbf16>
    %cst_14 = arith.constant dense<0.000000e+00> : vector<8x32xf32>
    %19 = tpu.matmul %15, %18, %cst_14 {dimension_numbers = #tpu.dot_dimension_numbers<[1], [0], [0], [1], [0, 0, 1, 1], [], []>} : vector<8x2048xbf16>, vector<2048x32xbf16>, vector<8x32xf32> -> vector<8x32xf32>
    %20 = arith.addf %17, %19 : vector<8x32xf32>
    %c0_15 = arith.constant 0 : index
    %c0_16 = arith.constant 0 : index
    %c0_17 = arith.constant 0 : index
    %21 = vector.load %arg9[%c0_15, %c0_16, %c0_17] : memref<1x8x32xf32, #tpu.memory_space<vmem>>, vector<1x8x32xf32>
    %22 = vector.shape_cast %21 : vector<1x8x32xf32> to vector<8x32xf32>
    %23 = vector.shape_cast %20 : vector<8x32xf32> to vector<1x8x32xf32>
    tpu.vector_store %arg9[%c0_15, %c0_16, %c0_17], %23 {strides = array<i32>} : memref<1x8x32xf32, #tpu.memory_space<vmem>>, vector<1x8x32xf32>,
    return
  }
  func.func @transform_0(%arg0: i32, %arg1: i32) -> (i32, i32) {
    %c0_i32 = arith.constant 0 : i32
    %c0_i32_0 = arith.constant 0 : i32
    %c0_i32_1 = arith.constant 0 : i32
    return %c0_i32, %c0_i32_0 : i32, i32
  }
  func.func @transform_1(%arg0: i32, %arg1: i32) -> (i32, i32) {
    %c0_i32 = arith.constant 0 : i32
    %c0_i32_0 = arith.constant 0 : i32
    %c0_i32_1 = arith.constant 0 : i32
    return %c0_i32, %c0_i32_0 : i32, i32
  }
  func.func @transform_2(%arg0: i32, %arg1: i32) -> (i32, i32) {
    %c0_i32 = arith.constant 0 : i32
    %c0_i32_0 = arith.constant 0 : i32
    %c0_i32_1 = arith.constant 0 : i32
    return %c0_i32, %c0_i32_0 : i32, i32
  }
  func.func @transform_3(%arg0: i32, %arg1: i32) -> (i32, i32) {
    %c1_i32 = arith.constant 1 : i32
    %0 = arith.muli %arg0, %c1_i32 : i32
    %1 = arith.addi %0, %arg1 : i32
    %c0_i32 = arith.constant 0 : i32
    %c0_i32_0 = arith.constant 0 : i32
    return %c0_i32, %1 : i32, i32
  }
  func.func @transform_4(%arg0: i32, %arg1: i32) -> (i32, i32) {
    %c1_i32 = arith.constant 1 : i32
    %0 = arith.muli %arg0, %c1_i32 : i32
    %1 = arith.addi %0, %arg1 : i32
    %c0_i32 = arith.constant 0 : i32
    %c0_i32_0 = arith.constant 0 : i32
    return %c0_i32, %1 : i32, i32
  }
  func.func @transform_5(%arg0: i32, %arg1: i32) -> (i32, i32) {
    %c1_i32 = arith.constant 1 : i32
    %0 = arith.muli %arg0, %c1_i32 : i32
    %1 = arith.addi %0, %arg1 : i32
    %c0_i32 = arith.constant 0 : i32
    %c0_i32_0 = arith.constant 0 : i32
    return %c0_i32, %1 : i32, i32
  }
  func.func @transform_6(%arg0: i32, %arg1: i32) -> (i32, i32) {
    %c1_i32 = arith.constant 1 : i32
    %0 = arith.muli %arg0, %c1_i32 : i32
    %1 = arith.addi %0, %arg1 : i32
    %c0_i32 = arith.constant 0 : i32
    %c0_i32_0 = arith.constant 0 : i32
    return %1, %c0_i32 : i32, i32
  }
  func.func @transform_7(%arg0: i32, %arg1: i32) -> (i32, i32, i32) {
    %c0_i32 = arith.constant 0 : i32
    %c0_i32_0 = arith.constant 0 : i32
    %c0_i32_1 = arith.constant 0 : i32
    return %arg0, %c0_i32, %c0_i32_0 : i32, i32, i32
  }
}

</mosaic_0001>

<llo_original>
// kernel: labelnet_forward.1
$region0: #{labelnet_forward.1}
  #allocation0 [shape = 'u32[]', space=smem, size = 0x4, offset = 0x4, fixed_abs, tag = 'smem constant byte address 0x4 - core index']
  #allocation1 [shape = 'u32[144,128]{1,0:T(1,128)}', space=vmem, size = 0x12000, scoped, tag = 'internal scratch']
  #allocation2 [shape = 'bf16[8,1024]{1,0:T(8,128)(2,1)}', space=vmem, size = 0x4000, scoped, tag = 'scratch operand']
  %s0 = inlined_call_operand.vmem [shape: bf16[8,32], index: 0, kind: input, shape index: {}]
  %s1 = inlined_call_operand.hbm [shape: bf16[32,1024], index: 1, kind: input, shape index: {}]
  %s2 = inlined_call_operand.hbm [shape: f32[1,1024], index: 2, kind: input, shape index: {}]
  %s3 = inlined_call_operand.hbm [shape: s8[1024,4096], index: 3, kind: input, shape index: {}]
  %s4 = inlined_call_operand.hbm [shape: f32[1,4096], index: 4, kind: input, shape index: {}]
  %s5 = inlined_call_operand.hbm [shape: f32[1,4096], index: 5, kind: input, shape index: {}]
  %s6 = inlined_call_operand.vmem [shape: bf16[4096,32], index: 6, kind: input, shape index: {}]
  %s7 = inlined_call_operand.vmem [shape: f32[2,8,32], index: 7, kind: output, shape index: {}]
  %s8 = sld [smem:[#allocation0]]
  $region85: #{labelnet_forward.1} parent=0
    _
  %s10 = ssub.s32 1, %s8
  %s11 = scalar_select 0, %s10, %s8
  $region1: #{labelnet_forward.1} parent=0
    #allocation3 [shape = 'u8[65536]{0}', space=vmem, size = 0x10000, scoped, tag = 'input window, operand 1, single buffered']
    #allocation4 [shape = 's32[2]{0}', space=sflag, size = 0x8, scoped, tag = 'scoped memory for labelnet_forward.1']
    #allocation5 [shape = 'u8[4096]{0}', space=vmem, size = 0x1000, scoped, tag = 'input window, operand 2, single buffered']
    #allocation6 [shape = 's32[1]{0}', space=sflag, size = 0x4, scoped, tag = 'scoped memory for labelnet_forward.1']
    #allocation7 [shape = 'u8[4194304]{0}', space=vmem, size = 0x400000, scoped, tag = 'input window, operand 3']
    #allocation8 [shape = 'u8[16384]{0}', space=vmem, size = 0x4000, scoped, tag = 'input window, operand 4']
    #allocation9 [shape = 'u8[16384]{0}', space=vmem, size = 0x4000, scoped, tag = 'input window, operand 5']
    %12 = vsyncpa [#allocation4], 0
    %13 = vsyncpa [#allocation6], 0
    loop: start=0, step=1, limit=4
    $region2: #{labelnet_forward.1} parent=1 // loop_pre_header
      _
    $region3: #{labelnet_forward.1} parent=1 // loop_header
      %s15 = sphi 0, %s19
      %p16 = scmp.ge.s32.totalorder %s15, 4
      %s22 = sphi 0, %s34
      %s23 = sphi 0, %s30
      %s24 = sphi 0, %s22
      %s25 = sphi 0, %s23
      %s26 = sphi 0, %s24
      %s27 = sphi 0, %s25
      %s35 = sphi 0, %s35
      %s37 = sphi 0, %s35
      %s38 = sphi 0, %s37
      %s52 = sphi 0, %s38
      %s56 = sphi 0, %s56
      %s58 = sphi 0, %s56
      %s59 = sphi 0, %s58
      %s73 = sphi 0, %s59
      %s77 = sphi 0, %s77
      %s79 = sphi 0, %s77
      %s80 = sphi 0, %s79
      %s94 = sphi 0, %s80
      %s102 = sphi 0, %s104
      %s105 = sphi 0, %s102
      %s106 = sphi 0, %s105
      %s122 = sphi 0, %s106
      %s130 = sphi 0, %s132
      %s133 = sphi 0, %s130
      %s134 = sphi 0, %s133
      %s150 = sphi 0, %s134
      %s158 = sphi 0, %s160
      %s161 = sphi 0, %s158
      %s162 = sphi 0, %s161
      %s178 = sphi 0, %s162
      %s186 = sphi 0, %s188
      %s189 = sphi 0, %s186
      %s190 = sphi 0, %s189
      %s206 = sphi 0, %s190
      %s212 = sphi 0, %s214
      %s215 = sphi 0, %s212
      %s216 = sphi 0, %s215
      %s232 = sphi 0, %s216
    $region4: #{labelnet_forward.1} parent=1 // loop_header_branch
      %18 = sbr.rel (%p16) target = $region8
    $region5: #{labelnet_forward.1} parent=1 // loop_body
      %s20 = ssub.s32 %s15, 1
      %s21 = ssub.s32 %s15, 2
      %s28 = sadd.s32 1, %s23
      %p29 = scmp.ge.s32.totalorder %s28, 1
      %s30 = scalar_select %p29, 0, %s28
      %s31 = sadd.s32 1, %s22
      %s32 = scalar_select %p29, %s31, %s22
      %p33 = scmp.ge.s32.totalorder %s32, 2
      %s34 = scalar_select %p33, 0, %s32
      %s36 = sadd.s32 %s35, 1
      %p39 = scmp.eq.s32.totalorder %s15, 1
      %p40 = scmp.ne.s32.totalorder %s35, %s37
      %p41 = scmp.eq.s32.totalorder %s15, 0
      %p42 = por %p40, %p41
      %p43 = scmp.ne.s32.totalorder %s35, %s37
      %p44 = scmp.eq.s32.totalorder %s20, 1
      %p45 = por %p43, %p44
      %p46 = scmp.ne.s32.totalorder %s37, %s38
      %p47 = scmp.eq.s32.totalorder %s20, 0
      %p48 = por %p46, %p47
      %p49 = scmp.ne.s32.totalorder %s37, %s38
      %p50 = scmp.eq.s32.totalorder %s21, 1
      %p51 = por %p49, %p50
      %p53 = scmp.ne.s32.totalorder %s38, %s52
      %p54 = scmp.eq.s32.totalorder %s21, 0
      %p55 = por %p53, %p54
      %s57 = sadd.s32 %s56, 1
      %p60 = scmp.eq.s32.totalorder %s15, 1
      %p61 = scmp.ne.s32.totalorder %s56, %s58
      %p62 = scmp.eq.s32.totalorder %s15, 0
      %p63 = por %p61, %p62
      %p64 = scmp.ne.s32.totalorder %s56, %s58
      %p65 = scmp.eq.s32.totalorder %s20, 1
      %p66 = por %p64, %p65
      %p67 = scmp.ne.s32.totalorder %s58, %s59
      %p68 = scmp.eq.s32.totalorder %s20, 0
      %p69 = por %p67, %p68
      %p70 = scmp.ne.s32.totalorder %s58, %s59
      %p71 = scmp.eq.s32.totalorder %s21, 1
      %p72 = por %p70, %p71
      %p74 = scmp.ne.s32.totalorder %s59, %s73
      %p75 = scmp.eq.s32.totalorder %s21, 0
      %p76 = por %p74, %p75
      %s78 = sadd.s32 %s77, 1
      %p81 = scmp.eq.s32.totalorder %s15, 1
      %p82 = scmp.ne.s32.totalorder %s77, %s79
      %p83 = scmp.eq.s32.totalorder %s15, 0
      %p84 = por %p82, %p83
      %p85 = scmp.ne.s32.totalorder %s77, %s79
      %p86 = scmp.eq.s32.totalorder %s20, 1
      %p87 = por %p85, %p86
      %p88 = scmp.ne.s32.totalorder %s79, %s80
      %p89 = scmp.eq.s32.totalorder %s20, 0
      %p90 = por %p88, %p89
      %p91 = scmp.ne.s32.totalorder %s79, %s80
      %p92 = scmp.eq.s32.totalorder %s21, 1
      %p93 = por %p91, %p92
      %p95 = scmp.ne.s32.totalorder %s80, %s94
      %p96 = scmp.eq.s32.totalorder %s21, 0
      %p97 = por %p95, %p96
      %s98 = sadd.s32 %s22, %s23
      %s99 = sadd.s32 %s34, %s30
      %s100 = ssub.s32 %s98, %s99
      %p101 = scmp.eq.s32.totalorder %s100, 0
      %s103 = sadd.s32 %s102, 1
      %s104 = scalar_select %p101, %s102, %s103
      %p107 = pneg %p101
      %p108 = scmp.eq.s32.totalorder %s15, 1
      %p109 = por %p107, %p108
      %p110 = scmp.ne.s32.totalorder %s102, %s105
      %p111 = scmp.eq.s32.totalorder %s15, 0
      %p112 = por %p110, %p111
      %p113 = scmp.ne.s32.totalorder %s102, %s105
      %p114 = scmp.eq.s32.totalorder %s20, 1
      %p115 = por %p113, %p114
      %p116 = scmp.ne.s32.totalorder %s105, %s106
      %p117 = scmp.eq.s32.totalorder %s20, 0
      %p118 = por %p116, %p117
      %p119 = scmp.ne.s32.totalorder %s105, %s106
      %p120 = scmp.eq.s32.totalorder %s21, 1
      %p121 = por %p119, %p120
      %p123 = scmp.ne.s32.totalorder %s106, %s122
      %p124 = scmp.eq.s32.totalorder %s21, 0
      %p125 = por %p123, %p124
      %s126 = sadd.s32 %s22, %s23
      %s127 = sadd.s32 %s34, %s30
      %s128 = ssub.s32 %s126, %s127
      %p129 = scmp.eq.s32.totalorder %s128, 0
      %s131 = sadd.s32 %s130, 1
      %s132 = scalar_select %p129, %s130, %s131
      %p135 = pneg %p129
      %p136 = scmp.eq.s32.totalorder %s15, 1
      %p137 = por %p135, %p136
      %p138 = scmp.ne.s32.totalorder %s130, %s133
      %p139 = scmp.eq.s32.totalorder %s15, 0
      %p140 = por %p138, %p139
      %p141 = scmp.ne.s32.totalorder %s130, %s133
      %p142 = scmp.eq.s32.totalorder %s20, 1
      %p143 = por %p141, %p142
      %p144 = scmp.ne.s32.totalorder %s133, %s134
      %p145 = scmp.eq.s32.totalorder %s20, 0
      %p146 = por %p144, %p145
      %p147 = scmp.ne.s32.totalorder %s133, %s134
      %p148 = scmp.eq.s32.totalorder %s21, 1
      %p149 = por %p147, %p148
      %p151 = scmp.ne.s32.totalorder %s134, %s150
      %p152 = scmp.eq.s32.totalorder %s21, 0
      %p153 = por %p151, %p152
      %s154 = sadd.s32 %s22, %s23
      %s155 = sadd.s32 %s34, %s30
      %s156 = ssub.s32 %s154, %s155
      %p157 = scmp.eq.s32.totalorder %s156, 0
      %s159 = sadd.s32 %s158, 1
      %s160 = scalar_select %p157, %s158, %s159
      %p163 = pneg %p157
      %p164 = scmp.eq.s32.totalorder %s15, 1
      %p165 = por %p163, %p164
      %p166 = scmp.ne.s32.totalorder %s158, %s161
      %p167 = scmp.eq.s32.totalorder %s15, 0
      %p168 = por %p166, %p167
      %p169 = scmp.ne.s32.totalorder %s158, %s161
      %p170 = scmp.eq.s32.totalorder %s20, 1
      %p171 = por %p169, %p170
      %p172 = scmp.ne.s32.totalorder %s161, %s162
      %p173 = scmp.eq.s32.totalorder %s20, 0
      %p174 = por %p172, %p173
      %p175 = scmp.ne.s32.totalorder %s161, %s162
      %p176 = scmp.eq.s32.totalorder %s21, 1
      %p177 = por %p175, %p176
      %p179 = scmp.ne.s32.totalorder %s162, %s178
      %p180 = scmp.eq.s32.totalorder %s21, 0
      %p181 = por %p179, %p180
      %s182 = sadd.s32 %s22, %s23
      %s183 = sadd.s32 %s34, %s30
      %s184 = ssub.s32 %s182, %s183
      %p185 = scmp.eq.s32.totalorder %s184, 0
      %s187 = sadd.s32 %s186, 1
      %s188 = scalar_select %p185, %s186, %s187
      %p191 = pneg %p185
      %p192 = scmp.eq.s32.totalorder %s15, 1
      %p193 = por %p191, %p192
      %p194 = scmp.ne.s32.totalorder %s186, %s189
      %p195 = scmp.eq.s32.totalorder %s15, 0
      %p196 = por %p194, %p195
      %p197 = scmp.ne.s32.totalorder %s186, %s189
      %p198 = scmp.eq.s32.totalorder %s20, 1
      %p199 = por %p197, %p198
      %p200 = scmp.ne.s32.totalorder %s189, %s190
      %p201 = scmp.eq.s32.totalorder %s20, 0
      %p202 = por %p200, %p201
      %p203 = scmp.ne.s32.totalorder %s189, %s190
      %p204 = scmp.eq.s32.totalorder %s21, 1
      %p205 = por %p203, %p204
      %p207 = scmp.ne.s32.totalorder %s190, %s206
      %p208 = scmp.eq.s32.totalorder %s21, 0
      %p209 = por %p207, %p208
      %s210 = ssub.s32 %s22, %s34
      %p211 = scmp.eq.s32.totalorder %s210, 0
      %s213 = sadd.s32 %s212, 1
      %s214 = scalar_select %p211, %s212, %s213
      %p217 = pneg %p211
      %p218 = scmp.eq.s32.totalorder %s15, 1
      %p219 = por %p217, %p218
      %p220 = scmp.ne.s32.totalorder %s212, %s215
      %p221 = scmp.eq.s32.totalorder %s15, 0
      %p222 = por %p220, %p221
      %p223 = scmp.ne.s32.totalorder %s212, %s215
      %p224 = scmp.eq.s32.totalorder %s20, 1
      %p225 = por %p223, %p224
      %p226 = scmp.ne.s32.totalorder %s215, %s216
      %p227 = scmp.eq.s32.totalorder %s20, 0
      %p228 = por %p226, %p227
      %p229 = scmp.ne.s32.totalorder %s215, %s216
      %p230 = scmp.eq.s32.totalorder %s21, 1
      %p231 = por %p229, %p230
      %p233 = scmp.ne.s32.totalorder %s216, %s232
      %p234 = scmp.eq.s32.totalorder %s21, 0
      %p235 = por %p233, %p234
      %p236 = scmp.le.s32.totalorder 1, %s15
      %p237 = scmp.lt.s32.totalorder %s15, 3
      %p238 = pnand %p236, %p237
      %p239 = pneg %p238
      // Predicated region
      $region9: #{labelnet_forward.1} parent=5 // pred_check
        _
      $region10: #{labelnet_forward.1} parent=5 // pred_check_branch
        %241 = sbr.rel (%p238) target = $region12
      $region11: #{labelnet_forward.1} parent=5 // pred_region
        %s242 = ssub.s32 %s15, 1
        // Predicated region
        $region13: #{labelnet_forward.1} parent=11 // pred_check
          %p243 = pneg %p48
        $region14: #{labelnet_forward.1} parent=11 // pred_check_branch
          %245 = sbr.rel (%p243) target = $region16
        $region15: #{labelnet_forward.1} parent=11 // pred_region
          _
        $region16: #{labelnet_forward.1} parent=11 // pred_fallthru
          _
        // Predicated region
        $region17: #{labelnet_forward.1} parent=11 // pred_check
          %p246 = pneg %p69
        $region18: #{labelnet_forward.1} parent=11 // pred_check_branch
          %248 = sbr.rel (%p246) target = $region20
        $region19: #{labelnet_forward.1} parent=11 // pred_region
          %s250 = ssub.s32 2048, 2048
          %251 = vsyncadd [#allocation4], %s250
          %s252 = sshll.u32 [#allocation3], 4
          %s253 = int_to_ptr.vmem [resolvable:$true] %s252
          %258 = dma.hbm_to_vmem [thread:$0]  %s1, 2048, %s253, [#allocation4], 512, 512, 32
        $region20: #{labelnet_forward.1} parent=11 // pred_fallthru
          _
        // Predicated region
        $region21: #{labelnet_forward.1} parent=11 // pred_check
          %p259 = pneg %p90
        $region22: #{labelnet_forward.1} parent=11 // pred_check_branch
          %261 = sbr.rel (%p259) target = $region24
        $region23: #{labelnet_forward.1} parent=11 // pred_region
          %s263 = ssub.s32 128, 128
          %264 = vsyncadd [#allocation6], %s263
          %s266 = sshll.u32 [#allocation5], 4
          %s267 = int_to_ptr.vmem [resolvable:$true] %s266
          %269 = dma.hbm_to_vmem [thread:$0]  %s2, 128, %s267, [#allocation6]
        $region24: #{labelnet_forward.1} parent=11 // pred_fallthru
          _
      $region12: #{labelnet_forward.1} parent=5 // pred_fallthru
        _
      %p270 = scmp.lt.s32.totalorder %s15, 2
      // Predicated region
      $region25: #{labelnet_forward.1} parent=5 // pred_check
        %p271 = pneg %p270
      $region26: #{labelnet_forward.1} parent=5 // pred_check_branch
        %273 = sbr.rel (%p271) target = $region28
      $region27: #{labelnet_forward.1} parent=5 // pred_region
        // Predicated region
        $region29: #{labelnet_forward.1} parent=27 // pred_check
          %p274 = pneg %p112
        $region30: #{labelnet_forward.1} parent=27 // pred_check_branch
          %276 = sbr.rel (%p274) target = $region32
        $region31: #{labelnet_forward.1} parent=27 // pred_region
          %s277 = sand.u32 %s15, 1
          %s278 = scalar_lea.sflag [#allocation4], %s277
          %s279 = sand.u32 %s102, 1
          %s280 = smul.addr %s279, 4096
          %s281 = scalar_lea.vmem [#allocation7], %s280
          %s282 = sadd.s32 %s22, %s23
          %s283 = smul.u32 16, %s282
          %s285 = ssub.s32 65536, 65536
          %286 = vsyncadd %s278, %s285
          %s287 = smul.addr %s283, 128
          %s288 = scalar_lea.hbm %s3, %s287
          %s289 = sshll.u32 %s281, 4
          %s290 = int_to_ptr.vmem [resolvable:$true] %s289
          %295 = dma.hbm_to_vmem [thread:$0]  %s288, 65536, %s290, %s278, 4096, 2048, 128
        $region32: #{labelnet_forward.1} parent=27 // pred_fallthru
          _
        // Predicated region
        $region33: #{labelnet_forward.1} parent=27 // pred_check
          %p296 = pneg %p140
        $region34: #{labelnet_forward.1} parent=27 // pred_check_branch
          %298 = sbr.rel (%p296) target = $region36
        $region35: #{labelnet_forward.1} parent=27 // pred_region
          %s299 = sand.u32 %s15, 1
          %s300 = scalar_lea.sflag [#allocation4], %s299
          %s301 = sand.u32 %s130, 1
          %s302 = smul.addr %s301, 16
          %s303 = scalar_lea.vmem [#allocation8], %s302
          %s304 = sadd.s32 %s22, %s23
          %s305 = smul.u32 16, %s304
          %s307 = ssub.s32 256, 256
          %308 = vsyncadd %s300, %s307
          %s309 = smul.addr %s305, 16
          %s310 = scalar_lea.hbm %s4, %s309
          %s312 = sshll.u32 %s303, 4
          %s313 = int_to_ptr.vmem [resolvable:$true] %s312
          %315 = dma.hbm_to_vmem [thread:$0]  %s310, 256, %s313, %s300
        $region36: #{labelnet_forward.1} parent=27 // pred_fallthru
          _
        // Predicated region
        $region37: #{labelnet_forward.1} parent=27 // pred_check
          %p316 = pneg %p168
        $region38: #{labelnet_forward.1} parent=27 // pred_check_branch
          %318 = sbr.rel (%p316) target = $region40
        $region39: #{labelnet_forward.1} parent=27 // pred_region
          %s319 = sand.u32 %s15, 1
          %s320 = scalar_lea.sflag [#allocation4], %s319
          %s321 = sand.u32 %s158, 1
          %s322 = smul.addr %s321, 16
          %s323 = scalar_lea.vmem [#allocation9], %s322
          %s324 = sadd.s32 %s22, %s23
          %s325 = smul.u32 16, %s324
          %s327 = ssub.s32 256, 256
          %328 = vsyncadd %s320, %s327
          %s329 = smul.addr %s325, 16
          %s330 = scalar_lea.hbm %s5, %s329
          %s332 = sshll.u32 %s323, 4
          %s333 = int_to_ptr.vmem [resolvable:$true] %s332
          %335 = dma.hbm_to_vmem [thread:$0]  %s330, 256, %s333, %s320
        $region40: #{labelnet_forward.1} parent=27 // pred_fallthru
          _
        // Predicated region
        $region41: #{labelnet_forward.1} parent=27 // pred_check
          %p336 = pneg %p196
        $region42: #{labelnet_forward.1} parent=27 // pred_check_branch
          %338 = sbr.rel (%p336) target = $region44
        $region43: #{labelnet_forward.1} parent=27 // pred_region
          %s339 = sadd.s32 %s22, %s23
          %s340 = smul.u32 256, %s339
          %p341 = scmp.lt.s32.totalorder %s340, 511
          %s342 = scalar_select %p341, %s340, 511
          %s343 = smul.addr %s342, 4
          %s344 = scalar_lea.vmem %s6, %s343
          %s345 = sadd.s32 %s22, %s23
          %s346 = smul.u32 256, %s345
        $region44: #{labelnet_forward.1} parent=27 // pred_fallthru
          _
      $region28: #{labelnet_forward.1} parent=5 // pred_fallthru
        _
      %p347 = scmp.le.s32.totalorder 1, %s15
      %p348 = scmp.lt.s32.totalorder %s15, 3
      %p349 = pnand %p347, %p348
      %p350 = pneg %p349
      // Predicated region
      $region45: #{labelnet_forward.1} parent=5 // pred_check
        _
      $region46: #{labelnet_forward.1} parent=5 // pred_check_branch
        %352 = sbr.rel (%p349) target = $region48
      $region47: #{labelnet_forward.1} parent=5 // pred_region
        %s353 = ssub.s32 %s15, 1
        // Predicated region
        $region49: #{labelnet_forward.1} parent=47 // pred_check
          %p354 = pneg %p69
        $region50: #{labelnet_forward.1} parent=47 // pred_check_branch
          %356 = sbr.rel (%p354) target = $region52
        $region51: #{labelnet_forward.1} parent=47 // pred_region
          %357 = dma.done [#allocation4], 2048
        $region52: #{labelnet_forward.1} parent=47 // pred_fallthru
          _
        // Predicated region
        $region53: #{labelnet_forward.1} parent=47 // pred_check
          %p358 = pneg %p90
        $region54: #{labelnet_forward.1} parent=47 // pred_check_branch
          %360 = sbr.rel (%p358) target = $region56
        $region55: #{labelnet_forward.1} parent=47 // pred_region
          %361 = dma.done [#allocation6], 128
        $region56: #{labelnet_forward.1} parent=47 // pred_fallthru
          _
        %s362 = sand.u32 %s20, 1
        %s363 = scalar_lea.sflag [#allocation4], %s362
        %s364 = sand.u32 %s105, 1
        %s365 = smul.addr %s364, 4096
        %s366 = scalar_lea.vmem [#allocation7], %s365
        // Predicated region
        $region57: #{labelnet_forward.1} parent=47 // pred_check
          %p367 = pneg %p118
        $region58: #{labelnet_forward.1} parent=47 // pred_check_branch
          %369 = sbr.rel (%p367) target = $region60
        $region59: #{labelnet_forward.1} parent=47 // pred_region
          %370 = dma.done %s363, 65536
        $region60: #{labelnet_forward.1} parent=47 // pred_fallthru
          _
        %s371 = sand.u32 %s20, 1
        %s372 = scalar_lea.sflag [#allocation4], %s371
        %s373 = sand.u32 %s133, 1
        %s374 = smul.addr %s373, 16
        %s375 = scalar_lea.vmem [#allocation8], %s374
        // Predicated region
        $region61: #{labelnet_forward.1} parent=47 // pred_check
          %p376 = pneg %p146
        $region62: #{labelnet_forward.1} parent=47 // pred_check_branch
          %378 = sbr.rel (%p376) target = $region64
        $region63: #{labelnet_forward.1} parent=47 // pred_region
          %379 = dma.done %s372, 256
        $region64: #{labelnet_forward.1} parent=47 // pred_fallthru
          _
        %s380 = sand.u32 %s20, 1
        %s381 = scalar_lea.sflag [#allocation4], %s380
        %s382 = sand.u32 %s161, 1
        %s383 = smul.addr %s382, 16
        %s384 = scalar_lea.vmem [#allocation9], %s383
        // Predicated region
        $region65: #{labelnet_forward.1} parent=47 // pred_check
          %p385 = pneg %p174
        $region66: #{labelnet_forward.1} parent=47 // pred_check_branch
          %387 = sbr.rel (%p385) target = $region68
        $region67: #{labelnet_forward.1} parent=47 // pred_region
          %388 = dma.done %s381, 256
        $region68: #{labelnet_forward.1} parent=47 // pred_fallthru
          _
        %p389 = pneg %p48
        %p390 = pneg %p45
        %p391 = pneg %p69
        %p392 = pneg %p66
        %p393 = pneg %p90
        %p394 = pneg %p87
        %s395 = sand.u32 %s20, 1
        %s396 = scalar_lea.sflag [#allocation4], %s395
        %s397 = sand.u32 %s105, 1
        %s398 = smul.addr %s397, 4096
        %s399 = scalar_lea.vmem [#allocation7], %s398
        %p400 = pneg %p118
        %p401 = pneg %p115
        %s402 = sand.u32 %s20, 1
        %s403 = scalar_lea.sflag [#allocation4], %s402
        %s404 = sand.u32 %s133, 1
        %s405 = smul.addr %s404, 16
        %s406 = scalar_lea.vmem [#allocation8], %s405
        %p407 = pneg %p146
        %p408 = pneg %p143
        %s409 = sand.u32 %s20, 1
        %s410 = scalar_lea.sflag [#allocation4], %s409
        %s411 = sand.u32 %s161, 1
        %s412 = smul.addr %s411, 16
        %s413 = scalar_lea.vmem [#allocation9], %s412
        %p414 = pneg %p174
        %p415 = pneg %p171
        %s416 = sadd.s32 %s24, %s25
        %s417 = smul.u32 256, %s416
        %p418 = scmp.lt.s32.totalorder %s417, 511
        %s419 = scalar_select %p418, %s417, 511
        %s420 = smul.addr %s419, 4
        %s421 = scalar_lea.vmem %s6, %s420
        %p422 = pneg %p202
        %p423 = pneg %p199
        %p424 = pneg %p228
        %p425 = pneg %p225
        %p426 = scmp.lt.s32.totalorder %s24, 1
        %s427 = scalar_select %p426, %s24, 1
        %s428 = smul.addr %s427, 8
        %s429 = scalar_lea.vmem %s7, %s428
        %s430 = sadd.s32 %s24, %s25
        %s431 = smul.u32 16, %s430
        %s432 = sadd.s32 %s24, %s25
        %s433 = smul.u32 16, %s432
        %s434 = sadd.s32 %s24, %s25
        %s435 = smul.u32 16, %s434
        %s436 = sadd.s32 %s24, %s25
        %s437 = smul.u32 256, %s436
        %p438 = scmp.lt.s32.totalorder %s437, 511
        %s439 = scalar_select %p438, %s437, 511
        %s440 = smul.addr %s439, 4
        %s441 = scalar_lea.vmem %s6, %s440
        %s442 = sadd.s32 %s24, %s25
        %s443 = smul.u32 256, %s442
        %p444 = scmp.lt.s32.totalorder %s24, 1
        %s445 = scalar_select %p444, %s24, 1
        %s446 = smul.addr %s445, 8
        %s447 = scalar_lea.vmem %s7, %s446
        %p449 = scmp.eq.s32.totalorder %s25, 0
        // Predicated region
        $region69: #{labelnet_forward.1} parent=47 // pred_check
          %p450 = pneg %p449
        $region70: #{labelnet_forward.1} parent=47 // pred_check_branch
          %452 = sbr.rel (%p450) target = $region72
        $region71: #{labelnet_forward.1} parent=47 // pred_region
          %v453 = vld [vmem:[%s0] sm:$0xf]
          %v454 = vld [vmem:[#allocation3] sm:$0xff]
          %v455 = vld [vmem:[#allocation3 + $0x8] sm:$0xff]
          %v456 = vld [vmem:[#allocation3 + $0x10] sm:$0xff]
          %v457 = vld [vmem:[#allocation3 + $0x18] sm:$0xff]
          %v458 = vld [vmem:[#allocation3 + $0x20] sm:$0xff]
          %v459 = vld [vmem:[#allocation3 + $0x28] sm:$0xff]
          %v460 = vld [vmem:[#allocation3 + $0x30] sm:$0xff]
          %v461 = vld [vmem:[#allocation3 + $0x38] sm:$0xff]
          %v462 = vld [vmem:[#allocation3 + $0x40] sm:$0xff]
          %v463 = vld [vmem:[#allocation3 + $0x48] sm:$0xff]
          %v464 = vld [vmem:[#allocation3 + $0x50] sm:$0xff]
          %v465 = vld [vmem:[#allocation3 + $0x58] sm:$0xff]
          %v466 = vld [vmem:[#allocation3 + $0x60] sm:$0xff]
          %v467 = vld [vmem:[#allocation3 + $0x68] sm:$0xff]
          %v468 = vld [vmem:[#allocation3 + $0x70] sm:$0xff]
          %v469 = vld [vmem:[#allocation3 + $0x78] sm:$0xff]
          %v470 = vld [vmem:[#allocation5] sm:$0xff]
          %v472 = vlaneseq
          %v473 = vshrl.u32 %v472, 7
          %v474 = vsub.s32 0, %v473
          %v475 = vrot.slane %v470, %v474
          %v476 = vlaneseq
          %v477 = vshrl.u32 %v476, 7
          %v478 = vsub.s32 1, %v477
          %v479 = vrot.slane %v470, %v478
          %v480 = vlaneseq
          %v481 = vshrl.u32 %v480, 7
          %v482 = vsub.s32 2, %v481
          %v483 = vrot.slane %v470, %v482
          %v484 = vlaneseq
          %v485 = vshrl.u32 %v484, 7
          %v486 = vsub.s32 3, %v485
          %v487 = vrot.slane %v470, %v486
          %v488 = vlaneseq
          %v489 = vshrl.u32 %v488, 7
          %v490 = vsub.s32 4, %v489
          %v491 = vrot.slane %v470, %v490
          %v492 = vlaneseq
          %v493 = vshrl.u32 %v492, 7
          %v494 = vsub.s32 5, %v493
          %v495 = vrot.slane %v470, %v494
          %v496 = vlaneseq
          %v497 = vshrl.u32 %v496, 7
          %v498 = vsub.s32 6, %v497
          %v499 = vrot.slane %v470, %v498
          %v500 = vlaneseq
          %v501 = vshrl.u32 %v500, 7
          %v502 = vsub.s32 7, %v501
          %v503 = vrot.slane %v470, %v502
          %v528 = vunpack.c.l.b16 %v454
          %v529 = vunpack.c.h.b16 %v454
          %v530 = vunpack.c.l.b16 %v455
          %v531 = vunpack.c.h.b16 %v455
          %v532 = vunpack.c.l.b16 %v456
          %v533 = vunpack.c.h.b16 %v456
          %v534 = vunpack.c.l.b16 %v457
          %v535 = vunpack.c.h.b16 %v457
          %v536 = vunpack.c.l.b16 %v458
          %v537 = vunpack.c.h.b16 %v458
          %v538 = vunpack.c.l.b16 %v459
          %v539 = vunpack.c.h.b16 %v459
          %v540 = vunpack.c.l.b16 %v460
          %v541 = vunpack.c.h.b16 %v460
          %v542 = vunpack.c.l.b16 %v461
          %v543 = vunpack.c.h.b16 %v461
          %v544 = vunpack.c.l.b16 %v462
          %v545 = vunpack.c.h.b16 %v462
          %v546 = vunpack.c.l.b16 %v463
          %v547 = vunpack.c.h.b16 %v463
          %v548 = vunpack.c.l.b16 %v464
          %v549 = vunpack.c.h.b16 %v464
          %v550 = vunpack.c.l.b16 %v465
          %v551 = vunpack.c.h.b16 %v465
          %v552 = vunpack.c.l.b16 %v466
          %v553 = vunpack.c.h.b16 %v466
          %v554 = vunpack.c.l.b16 %v467
          %v555 = vunpack.c.h.b16 %v467
          %v556 = vunpack.c.l.b16 %v468
          %v557 = vunpack.c.h.b16 %v468
          %v558 = vunpack.c.l.b16 %v469
          %v559 = vunpack.c.h.b16 %v469
          %v560 = vpack.c.b16 %v536, %v528
          %v561 = vpack.c.b16 %v537, %v529
          %v562 = vpack.c.b16 %v538, %v530
          %v563 = vpack.c.b16 %v539, %v531
          %v564 = vpack.c.b16 %v540, %v532
          %v565 = vpack.c.b16 %v541, %v533
          %v566 = vpack.c.b16 %v542, %v534
          %v567 = vpack.c.b16 %v543, %v535
          %v568 = vpack.c.b16 %v552, %v544
          %v569 = vpack.c.b16 %v553, %v545
          %v570 = vpack.c.b16 %v554, %v546
          %v571 = vpack.c.b16 %v555, %v547
          %v572 = vpack.c.b16 %v556, %v548
          %v573 = vpack.c.b16 %v557, %v549
          %v574 = vpack.c.b16 %v558, %v550
          %v575 = vpack.c.b16 %v559, %v551
          %vm592 = vcmask 261120
          %v594 = vsel %vm592, %v453, 0
          %596 = vmatprep.subr.bf16.mxu0 %v561
          %597 = vmatpush1.bf16.msra.mxu0 %v560
          %598 = vmatprep.subr.bf16.mxu0 %v569
          %599 = vmatpush1.bf16.msra.mxu0 %v568
          %600 = vmatprep.subr.bf16.mxu0 0
          %601 = vmatpush1.bf16.msra.mxu0 0
          %602 = vmatprep.subr.bf16.mxu0 0
          %603 = vmatpush1.bf16.msra.mxu0 0
          %604 = vmatprep.subr.bf16.mxu0 0
          %605 = vmatpush1.bf16.msra.mxu0 0
          %606 = vmatprep.subr.bf16.mxu0 0
          %607 = vmatpush1.bf16.msra.mxu0 0
          %608 = vmatprep.subr.bf16.mxu0 0
          %609 = vmatpush1.bf16.msra.mxu0 0
          %610 = vmatprep.subr.bf16.mxu0 0
          %611 = vmatpush1.bf16.msra.mxu0 0
          %612 = vmatprep.subr.bf16.mxu0 0
          %613 = vmatpush1.bf16.msra.mxu0 0
          %614 = vmatprep.subr.bf16.mxu0 0
          %615 = vmatpush1.bf16.msra.mxu0 0
          %616 = vmatprep.subr.bf16.mxu0 0
          %617 = vmatpush1.bf16.msra.mxu0 0
          %618 = vmatprep.subr.bf16.mxu0 0
          %619 = vmatpush1.bf16.msra.mxu0 0
          %620 = vmatprep.subr.bf16.mxu0 0
          %621 = vmatpush1.bf16.msra.mxu0 0
          %622 = vmatprep.subr.bf16.mxu0 0
          %623 = vmatpush1.bf16.msra.mxu0 0
          %624 = vmatprep.subr.bf16.mxu0 0
          %625 = vmatpush1.bf16.msra.mxu0 0
          %626 = vmatprep.subr.bf16.mxu0 0
          %627 = vmatpush1.bf16.msra.mxu0 0
          %628 = vmatprep.mubr.bf16.mxu0 0
          %629 = vmatmul.mubr.bf16.gmra.mrb[0].mxu0 %v594
          %v630 = vpop.f32.mrb[0].mxu0
          %v631 = vadd.f32 %v475, %v630
          %v632 = vpop.f32.mrb[0].mxu0
          %v633 = vadd.f32 %v479, %v632
          %v634 = vpop.f32.mrb[0].mxu0
          %v635 = vpop.f32.mrb[0].mxu0
          %636 = vdwg.mxu0
          %637 = vmatprep.subr.bf16.mxu0 %v563
          %638 = vmatpush1.bf16.msra.mxu0 %v562
          %639 = vmatprep.subr.bf16.mxu0 %v571
          %640 = vmatpush1.bf16.msra.mxu0 %v570
          %641 = vmatprep.subr.bf16.mxu0 0
          %642 = vmatpush1.bf16.msra.mxu0 0
          %643 = vmatprep.subr.bf16.mxu0 0
          %644 = vmatpush1.bf16.msra.mxu0 0
          %645 = vmatprep.subr.bf16.mxu0 0
          %646 = vmatpush1.bf16.msra.mxu0 0
          %647 = vmatprep.subr.bf16.mxu0 0
          %648 = vmatpush1.bf16.msra.mxu0 0
          %649 = vmatprep.subr.bf16.mxu0 0
          %650 = vmatpush1.bf16.msra.mxu0 0
          %651 = vmatprep.subr.bf16.mxu0 0
          %652 = vmatpush1.bf16.msra.mxu0 0
          %653 = vmatprep.subr.bf16.mxu0 0
          %654 = vmatpush1.bf16.msra.mxu0 0
          %655 = vmatprep.subr.bf16.mxu0 0
          %656 = vmatpush1.bf16.msra.mxu0 0
          %657 = vmatprep.subr.bf16.mxu0 0
          %658 = vmatpush1.bf16.msra.mxu0 0
          %659 = vmatprep.subr.bf16.mxu0 0
          %660 = vmatpush1.bf16.msra.mxu0 0
          %661 = vmatprep.subr.bf16.mxu0 0
          %662 = vmatpush1.bf16.msra.mxu0 0
          %663 = vmatprep.subr.bf16.mxu0 0
          %664 = vmatpush1.bf16.msra.mxu0 0
          %665 = vmatprep.subr.bf16.mxu0 0
          %666 = vmatpush1.bf16.msra.mxu0 0
          %667 = vmatprep.subr.bf16.mxu0 0
          %668 = vmatpush1.bf16.msra.mxu0 0
          %669 = vmatprep.mubr.bf16.mxu0 0
          %670 = vmatmul.mubr.bf16.gmra.mrb[0].mxu0 %v594
          %v671 = vpop.f32.mrb[0].mxu0
          %v672 = vadd.f32 %v483, %v671
          %v673 = vpop.f32.mrb[0].mxu0
          %v674 = vadd.f32 %v487, %v673
          %v675 = vpop.f32.mrb[0].mxu0
          %v676 = vpop.f32.mrb[0].mxu0
          %677 = vdwg.mxu0
          %678 = vmatprep.subr.bf16.mxu0 %v565
          %679 = vmatpush1.bf16.msra.mxu0 %v564
          %680 = vmatprep.subr.bf16.mxu0 %v573
          %681 = vmatpush1.bf16.msra.mxu0 %v572
          %682 = vmatprep.subr.bf16.mxu0 0
          %683 = vmatpush1.bf16.msra.mxu0 0
          %684 = vmatprep.subr.bf16.mxu0 0
          %685 = vmatpush1.bf16.msra.mxu0 0
          %686 = vmatprep.subr.bf16.mxu0 0
          %687 = vmatpush1.bf16.msra.mxu0 0
          %688 = vmatprep.subr.bf16.mxu0 0
          %689 = vmatpush1.bf16.msra.mxu0 0
          %690 = vmatprep.subr.bf16.mxu0 0
          %691 = vmatpush1.bf16.msra.mxu0 0
          %692 = vmatprep.subr.bf16.mxu0 0
          %693 = vmatpush1.bf16.msra.mxu0 0
          %694 = vmatprep.subr.bf16.mxu0 0
          %695 = vmatpush1.bf16.msra.mxu0 0
          %696 = vmatprep.subr.bf16.mxu0 0
          %697 = vmatpush1.bf16.msra.mxu0 0
          %698 = vmatprep.subr.bf16.mxu0 0
          %699 = vmatpush1.bf16.msra.mxu0 0
          %700 = vmatprep.subr.bf16.mxu0 0
          %701 = vmatpush1.bf16.msra.mxu0 0
          %702 = vmatprep.subr.bf16.mxu0 0
          %703 = vmatpush1.bf16.msra.mxu0 0
          %704 = vmatprep.subr.bf16.mxu0 0
          %705 = vmatpush1.bf16.msra.mxu0 0
          %706 = vmatprep.subr.bf16.mxu0 0
          %707 = vmatpush1.bf16.msra.mxu0 0
          %708 = vmatprep.subr.bf16.mxu0 0
          %709 = vmatpush1.bf16.msra.mxu0 0
          %710 = vmatprep.mubr.bf16.mxu0 0
          %711 = vmatmul.mubr.bf16.gmra.mrb[0].mxu0 %v594
          %v712 = vpop.f32.mrb[0].mxu0
          %v713 = vadd.f32 %v491, %v712
          %v714 = vpop.f32.mrb[0].mxu0
          %v715 = vadd.f32 %v495, %v714
          %v716 = vpop.f32.mrb[0].mxu0
          %v717 = vpop.f32.mrb[0].mxu0
          %718 = vdwg.mxu0
          %719 = vmatprep.subr.bf16.mxu0 %v567
          %720 = vmatpush1.bf16.msra.mxu0 %v566
          %721 = vmatprep.subr.bf16.mxu0 %v575
          %722 = vmatpush1.bf16.msra.mxu0 %v574
          %723 = vmatprep.subr.bf16.mxu0 0
          %724 = vmatpush1.bf16.msra.mxu0 0
          %725 = vmatprep.subr.bf16.mxu0 0
          %726 = vmatpush1.bf16.msra.mxu0 0
          %727 = vmatprep.subr.bf16.mxu0 0
          %728 = vmatpush1.bf16.msra.mxu0 0
          %729 = vmatprep.subr.bf16.mxu0 0
          %730 = vmatpush1.bf16.msra.mxu0 0
          %731 = vmatprep.subr.bf16.mxu0 0
          %732 = vmatpush1.bf16.msra.mxu0 0
          %733 = vmatprep.subr.bf16.mxu0 0
          %734 = vmatpush1.bf16.msra.mxu0 0
          %735 = vmatprep.subr.bf16.mxu0 0
          %736 = vmatpush1.bf16.msra.mxu0 0
          %737 = vmatprep.subr.bf16.mxu0 0
          %738 = vmatpush1.bf16.msra.mxu0 0
          %739 = vmatprep.subr.bf16.mxu0 0
          %740 = vmatpush1.bf16.msra.mxu0 0
          %741 = vmatprep.subr.bf16.mxu0 0
          %742 = vmatpush1.bf16.msra.mxu0 0
          %743 = vmatprep.subr.bf16.mxu0 0
          %744 = vmatpush1.bf16.msra.mxu0 0
          %745 = vmatprep.subr.bf16.mxu0 0
          %746 = vmatpush1.bf16.msra.mxu0 0
          %747 = vmatprep.subr.bf16.mxu0 0
          %748 = vmatpush1.bf16.msra.mxu0 0
          %749 = vmatprep.subr.bf16.mxu0 0
          %750 = vmatpush1.bf16.msra.mxu0 0
          %751 = vmatprep.mubr.bf16.mxu0 0
          %752 = vmatmul.mubr.bf16.gmra.mrb[0].mxu0 %v594
          %v753 = vpop.f32.mrb[0].mxu0
          %v754 = vadd.f32 %v499, %v753
          %v755 = vpop.f32.mrb[0].mxu0
          %v756 = vadd.f32 %v503, %v755
          %v757 = vpop.f32.mrb[0].mxu0
          %v758 = vpop.f32.mrb[0].mxu0
          %759 = vdwg.mxu0
          %v760 = vmax.f32 %v631, 0.0
          %v761 = vmax.f32 %v633, 0.0
          %v762 = vmax.f32 %v672, 0.0
          %v763 = vmax.f32 %v674, 0.0
          %v764 = vmax.f32 %v713, 0.0
          %v765 = vmax.f32 %v715, 0.0
          %v766 = vmax.f32 %v754, 0.0
          %v767 = vmax.f32 %v756, 0.0
          %v768 = vpack.c.bf16 %v760, %v760
          %v769 = vpack.c.bf16 %v761, %v761
          %v770 = vpack.c.bf16 %v762, %v762
          %v771 = vpack.c.bf16 %v763, %v763
          %v772 = vpack.c.bf16 %v764, %v764
          %v773 = vpack.c.bf16 %v765, %v765
          %v774 = vpack.c.bf16 %v766, %v766
          %v775 = vpack.c.bf16 %v767, %v767
          %v784 = vunpack.c.l.b16 %v768
          %v785 = vunpack.c.l.b16 %v769
          %v786 = vunpack.c.l.b16 %v770
          %v787 = vunpack.c.l.b16 %v771
          %v788 = vunpack.c.l.b16 %v772
          %v789 = vunpack.c.l.b16 %v773
          %v790 = vunpack.c.l.b16 %v774
          %v791 = vunpack.c.l.b16 %v775
          %v792 = vpack.c.b16 %v785, %v784
          %v793 = vpack.c.b16 %v787, %v786
          %v794 = vpack.c.b16 %v789, %v788
          %v795 = vpack.c.b16 %v791, %v790
          %800 = vst [vmem:[#allocation2] sm:$0xff] %v792
          %801 = vst [vmem:[#allocation2 + $0x8] sm:$0xff] %v793
          %802 = vst [vmem:[#allocation2 + $0x10] sm:$0xff] %v794
          %803 = vst [vmem:[#allocation2 + $0x18] sm:$0xff] %v795
          %804 = vst.msk [vmem:[%s447] sm:$0xff] %vm592, 0.0
        $region72: #{labelnet_forward.1} parent=47 // pred_fallthru
          _
        %v805 = vld [vmem:[#allocation2] sm:$0xff]
        %v806 = vld [vmem:[#allocation2 + $0x8] sm:$0xff]
        %v807 = vld [vmem:[#allocation2 + $0x10] sm:$0xff]
        %v808 = vld [vmem:[#allocation2 + $0x18] sm:$0xff]
        %v809 = vld [vmem:[%s366] sm:$0xff]
        %v810 = vld [vmem:[%s366 + $0x8] sm:$0xff]
        %v811 = vld [vmem:[%s366 + $0x10] sm:$0xff]
        %v812 = vld [vmem:[%s366 + $0x18] sm:$0xff]
        %v813 = vld [vmem:[%s366 + $0x20] sm:$0xff]
        %v814 = vld [vmem:[%s366 + $0x28] sm:$0xff]
        %v815 = vld [vmem:[%s366 + $0x30] sm:$0xff]
        %v816 = vld [vmem:[%s366 + $0x38] sm:$0xff]
        %v817 = vld [vmem:[%s366 + $0x40] sm:$0xff]
        %v818 = vld [vmem:[%s366 + $0x48] sm:$0xff]
        %v819 = vld [vmem:[%s366 + $0x50] sm:$0xff]
        %v820 = vld [vmem:[%s366 + $0x58] sm:$0xff]
        %v821 = vld [vmem:[%s366 + $0x60] sm:$0xff]
        %v822 = vld [vmem:[%s366 + $0x68] sm:$0xff]
        %v823 = vld [vmem:[%s366 + $0x70] sm:$0xff]
        %v824 = vld [vmem:[%s366 + $0x78] sm:$0xff]
        %v825 = vld [vmem:[%s366 + $0x80] sm:$0xff]
        %v826 = vld [vmem:[%s366 + $0x88] sm:$0xff]
        %v827 = vld [vmem:[%s366 + $0x90] sm:$0xff]
        %v828 = vld [vmem:[%s366 + $0x98] sm:$0xff]
        %v829 = vld [vmem:[%s366 + $0xa0] sm:$0xff]
        %v830 = vld [vmem:[%s366 + $0xa8] sm:$0xff]
        %v831 = vld [vmem:[%s366 + $0xb0] sm:$0xff]
        %v832 = vld [vmem:[%s366 + $0xb8] sm:$0xff]
        %v833 = vld [vmem:[%s366 + $0xc0] sm:$0xff]
        %v834 = vld [vmem:[%s366 + $0xc8] sm:$0xff]
        %v835 = vld [vmem:[%s366 + $0xd0] sm:$0xff]
        %v836 = vld [vmem:[%s366 + $0xd8] sm:$0xff]
        %v837 = vld [vmem:[%s366 + $0xe0] sm:$0xff]
        %v838 = vld [vmem:[%s366 + $0xe8] sm:$0xff]
        %v839 = vld [vmem:[%s366 + $0xf0] sm:$0xff]
        %v840 = vld [vmem:[%s366 + $0xf8] sm:$0xff]
        %v841 = vld [vmem:[%s366 + $0x100] sm:$0xff]
        %v842 = vld [vmem:[%s366 + $0x108] sm:$0xff]
        %v843 = vld [vmem:[%s366 + $0x110] sm:$0xff]
        %v844 = vld [vmem:[%s366 + $0x118] sm:$0xff]
        %v845 = vld [vmem:[%s366 + $0x120] sm:$0xff]
        %v846 = vld [vmem:[%s366 + $0x128] sm:$0xff]
        %v847 = vld [vmem:[%s366 + $0x130] sm:$0xff]
        %v848 = vld [vmem:[%s366 + $0x138] sm:$0xff]
        %v849 = vld [vmem:[%s366 + $0x140] sm:$0xff]
        %v850 = vld [vmem:[%s366 + $0x148] sm:$0xff]
        %v851 = vld [vmem:[%s366 + $0x150] sm:$0xff]
        %v852 = vld [vmem:[%s366 + $0x158] sm:$0xff]
        %v853 = vld [vmem:[%s366 + $0x160] sm:$0xff]
        %v854 = vld [vmem:[%s366 + $0x168] sm:$0xff]
        %v855 = vld [vmem:[%s366 + $0x170] sm:$0xff]
        %v856 = vld [vmem:[%s366 + $0x178] sm:$0xff]
        %v857 = vld [vmem:[%s366 + $0x180] sm:$0xff]
        %v858 = vld [vmem:[%s366 + $0x188] sm:$0xff]
        %v859 = vld [vmem:[%s366 + $0x190] sm:$0xff]
        %v860 = vld [vmem:[%s366 + $0x198] sm:$0xff]
        %v861 = vld [vmem:[%s366 + $0x1a0] sm:$0xff]
        %v862 = vld [vmem:[%s366 + $0x1a8] sm:$0xff]
        %v863 = vld [vmem:[%s366 + $0x1b0] sm:$0xff]
        %v864 = vld [vmem:[%s366 + $0x1b8] sm:$0xff]
        %v865 = vld [vmem:[%s366 + $0x1c0] sm:$0xff]
        %v866 = vld [vmem:[%s366 + $0x1c8] sm:$0xff]
        %v867 = vld [vmem:[%s366 + $0x1d0] sm:$0xff]
        %v868 = vld [vmem:[%s366 + $0x1d8] sm:$0xff]
        %v869 = vld [vmem:[%s366 + $0x1e0] sm:$0xff]
        %v870 = vld [vmem:[%s366 + $0x1e8] sm:$0xff]
        %v871 = vld [vmem:[%s366 + $0x1f0] sm:$0xff]
        %v872 = vld [vmem:[%s366 + $0x1f8] sm:$0xff]
        %v873 = vld [vmem:[%s366 + $0x200] sm:$0xff]
        %v874 = vld [vmem:[%s366 + $0x208] sm:$0xff]
        %v875 = vld [vmem:[%s366 + $0x210] sm:$0xff]
        %v876 = vld [vmem:[%s366 + $0x218] sm:$0xff]
        %v877 = vld [vmem:[%s366 + $0x220] sm:$0xff]
        %v878 = vld [vmem:[%s366 + $0x228] sm:$0xff]
        %v879 = vld [vmem:[%s366 + $0x230] sm:$0xff]
        %v880 = vld [vmem:[%s366 + $0x238] sm:$0xff]
        %v881 = vld [vmem:[%s366 + $0x240] sm:$0xff]
        %v882 = vld [vmem:[%s366 + $0x248] sm:$0xff]
        %v883 = vld [vmem:[%s366 + $0x250] sm:$0xff]
        %v884 = vld [vmem:[%s366 + $0x258] sm:$0xff]
        %v885 = vld [vmem:[%s366 + $0x260] sm:$0xff]
        %v886 = vld [vmem:[%s366 + $0x268] sm:$0xff]
        %v887 = vld [vmem:[%s366 + $0x270] sm:$0xff]
        %v888 = vld [vmem:[%s366 + $0x278] sm:$0xff]
        %v889 = vld [vmem:[%s366 + $0x280] sm:$0xff]
        %v890 = vld [vmem:[%s366 + $0x288] sm:$0xff]
        %v891 = vld [vmem:[%s366 + $0x290] sm:$0xff]
        %v892 = vld [vmem:[%s366 + $0x298] sm:$0xff]
        %v893 = vld [vmem:[%s366 + $0x2a0] sm:$0xff]
        %v894 = vld [vmem:[%s366 + $0x2a8] sm:$0xff]
        %v895 = vld [vmem:[%s366 + $0x2b0] sm:$0xff]
        %v896 = vld [vmem:[%s366 + $0x2b8] sm:$0xff]
        %v897 = vld [vmem:[%s366 + $0x2c0] sm:$0xff]
        %v898 = vld [vmem:[%s366 + $0x2c8] sm:$0xff]
        %v899 = vld [vmem:[%s366 + $0x2d0] sm:$0xff]
        %v900 = vld [vmem:[%s366 + $0x2d8] sm:$0xff]
        %v901 = vld [vmem:[%s366 + $0x2e0] sm:$0xff]
        %v902 = vld [vmem:[%s366 + $0x2e8] sm:$0xff]
        %v903 = vld [vmem:[%s366 + $0x2f0] sm:$0xff]
        %v904 = vld [vmem:[%s366 + $0x2f8] sm:$0xff]
        %v905 = vld [vmem:[%s366 + $0x300] sm:$0xff]
        %v906 = vld [vmem:[%s366 + $0x308] sm:$0xff]
        %v907 = vld [vmem:[%s366 + $0x310] sm:$0xff]
        %v908 = vld [vmem:[%s366 + $0x318] sm:$0xff]
        %v909 = vld [vmem:[%s366 + $0x320] sm:$0xff]
        %v910 = vld [vmem:[%s366 + $0x328] sm:$0xff]
        %v911 = vld [vmem:[%s366 + $0x330] sm:$0xff]
        %v912 = vld [vmem:[%s366 + $0x338] sm:$0xff]
        %v913 = vld [vmem:[%s366 + $0x340] sm:$0xff]
        %v914 = vld [vmem:[%s366 + $0x348] sm:$0xff]
        %v915 = vld [vmem:[%s366 + $0x350] sm:$0xff]
        %v916 = vld [vmem:[%s366 + $0x358] sm:$0xff]
        %v917 = vld [vmem:[%s366 + $0x360] sm:$0xff]
        %v918 = vld [vmem:[%s366 + $0x368] sm:$0xff]
        %v919 = vld [vmem:[%s366 + $0x370] sm:$0xff]
        %v920 = vld [vmem:[%s366 + $0x378] sm:$0xff]
        %v921 = vld [vmem:[%s366 + $0x380] sm:$0xff]
        %v922 = vld [vmem:[%s366 + $0x388] sm:$0xff]
        %v923 = vld [vmem:[%s366 + $0x390] sm:$0xff]
        %v924 = vld [vmem:[%s366 + $0x398] sm:$0xff]
        %v925 = vld [vmem:[%s366 + $0x3a0] sm:$0xff]
        %v926 = vld [vmem:[%s366 + $0x3a8] sm:$0xff]
        %v927 = vld [vmem:[%s366 + $0x3b0] sm:$0xff]
        %v928 = vld [vmem:[%s366 + $0x3b8] sm:$0xff]
        %v929 = vld [vmem:[%s366 + $0x3c0] sm:$0xff]
        %v930 = vld [vmem:[%s366 + $0x3c8] sm:$0xff]
        %v931 = vld [vmem:[%s366 + $0x3d0] sm:$0xff]
        %v932 = vld [vmem:[%s366 + $0x3d8] sm:$0xff]
        %v933 = vld [vmem:[%s366 + $0x3e0] sm:$0xff]
        %v934 = vld [vmem:[%s366 + $0x3e8] sm:$0xff]
        %v935 = vld [vmem:[%s366 + $0x3f0] sm:$0xff]
        %v936 = vld [vmem:[%s366 + $0x3f8] sm:$0xff]
        %v937 = vld [vmem:[%s366 + $0x400] sm:$0xff]
        %v938 = vld [vmem:[%s366 + $0x408] sm:$0xff]
        %v939 = vld [vmem:[%s366 + $0x410] sm:$0xff]
        %v940 = vld [vmem:[%s366 + $0x418] sm:$0xff]
        %v941 = vld [vmem:[%s366 + $0x420] sm:$0xff]
        %v942 = vld [vmem:[%s366 + $0x428] sm:$0xff]
        %v943 = vld [vmem:[%s366 + $0x430] sm:$0xff]
        %v944 = vld [vmem:[%s366 + $0x438] sm:$0xff]
        %v945 = vld [vmem:[%s366 + $0x440] sm:$0xff]
        %v946 = vld [vmem:[%s366 + $0x448] sm:$0xff]
        %v947 = vld [vmem:[%s366 + $0x450] sm:$0xff]
        %v948 = vld [vmem:[%s366 + $0x458] sm:$0xff]
        %v949 = vld [vmem:[%s366 + $0x460] sm:$0xff]
        %v950 = vld [vmem:[%s366 + $0x468] sm:$0xff]
        %v951 = vld [vmem:[%s366 + $0x470] sm:$0xff]
        %v952 = vld [vmem:[%s366 + $0x478] sm:$0xff]
        %v953 = vld [vmem:[%s366 + $0x480] sm:$0xff]
        %v954 = vld [vmem:[%s366 + $0x488] sm:$0xff]
        %v955 = vld [vmem:[%s366 + $0x490] sm:$0xff]
        %v956 = vld [vmem:[%s366 + $0x498] sm:$0xff]
        %v957 = vld [vmem:[%s366 + $0x4a0] sm:$0xff]
        %v958 = vld [vmem:[%s366 + $0x4a8] sm:$0xff]
        %v959 = vld [vmem:[%s366 + $0x4b0] sm:$0xff]
        %v960 = vld [vmem:[%s366 + $0x4b8] sm:$0xff]
        %v961 = vld [vmem:[%s366 + $0x4c0] sm:$0xff]
        %v962 = vld [vmem:[%s366 + $0x4c8] sm:$0xff]
        %v963 = vld [vmem:[%s366 + $0x4d0] sm:$0xff]
        %v964 = vld [vmem:[%s366 + $0x4d8] sm:$0xff]
        %v965 = vld [vmem:[%s366 + $0x4e0] sm:$0xff]
        %v966 = vld [vmem:[%s366 + $0x4e8] sm:$0xff]
        %v967 = vld [vmem:[%s366 + $0x4f0] sm:$0xff]
        %v968 = vld [vmem:[%s366 + $0x4f8] sm:$0xff]
        %v969 = vld [vmem:[%s366 + $0x500] sm:$0xff]
        %v970 = vld [vmem:[%s366 + $0x508] sm:$0xff]
        %v971 = vld [vmem:[%s366 + $0x510] sm:$0xff]
        %v972 = vld [vmem:[%s366 + $0x518] sm:$0xff]
        %v973 = vld [vmem:[%s366 + $0x520] sm:$0xff]
        %v974 = vld [vmem:[%s366 + $0x528] sm:$0xff]
        %v975 = vld [vmem:[%s366 + $0x530] sm:$0xff]
        %v976 = vld [vmem:[%s366 + $0x538] sm:$0xff]
        %v977 = vld [vmem:[%s366 + $0x540] sm:$0xff]
        %v978 = vld [vmem:[%s366 + $0x548] sm:$0xff]
        %v979 = vld [vmem:[%s366 + $0x550] sm:$0xff]
        %v980 = vld [vmem:[%s366 + $0x558] sm:$0xff]
        %v981 = vld [vmem:[%s366 + $0x560] sm:$0xff]
        %v982 = vld [vmem:[%s366 + $0x568] sm:$0xff]
        %v983 = vld [vmem:[%s366 + $0x570] sm:$0xff]
        %v984 = vld [vmem:[%s366 + $0x578] sm:$0xff]
        %v985 = vld [vmem:[%s366 + $0x580] sm:$0xff]
        %v986 = vld [vmem:[%s366 + $0x588] sm:$0xff]
        %v987 = vld [vmem:[%s366 + $0x590] sm:$0xff]
        %v988 = vld [vmem:[%s366 + $0x598] sm:$0xff]
        %v989 = vld [vmem:[%s366 + $0x5a0] sm:$0xff]
        %v990 = vld [vmem:[%s366 + $0x5a8] sm:$0xff]
        %v991 = vld [vmem:[%s366 + $0x5b0] sm:$0xff]
        %v992 = vld [vmem:[%s366 + $0x5b8] sm:$0xff]
        %v993 = vld [vmem:[%s366 + $0x5c0] sm:$0xff]
        %v994 = vld [vmem:[%s366 + $0x5c8] sm:$0xff]
        %v995 = vld [vmem:[%s366 + $0x5d0] sm:$0xff]
        %v996 = vld [vmem:[%s366 + $0x5d8] sm:$0xff]
        %v997 = vld [vmem:[%s366 + $0x5e0] sm:$0xff]
        %v998 = vld [vmem:[%s366 + $0x5e8] sm:$0xff]
        %v999 = vld [vmem:[%s366 + $0x5f0] sm:$0xff]
        %v1000 = vld [vmem:[%s366 + $0x5f8] sm:$0xff]
        %v1001 = vld [vmem:[%s366 + $0x600] sm:$0xff]
        %v1002 = vld [vmem:[%s366 + $0x608] sm:$0xff]
        %v1003 = vld [vmem:[%s366 + $0x610] sm:$0xff]
        %v1004 = vld [vmem:[%s366 + $0x618] sm:$0xff]
        %v1005 = vld [vmem:[%s366 + $0x620] sm:$0xff]
        %v1006 = vld [vmem:[%s366 + $0x628] sm:$0xff]
        %v1007 = vld [vmem:[%s366 + $0x630] sm:$0xff]
        %v1008 = vld [vmem:[%s366 + $0x638] sm:$0xff]
        %v1009 = vld [vmem:[%s366 + $0x640] sm:$0xff]
        %v1010 = vld [vmem:[%s366 + $0x648] sm:$0xff]
        %v1011 = vld [vmem:[%s366 + $0x650] sm:$0xff]
        %v1012 = vld [vmem:[%s366 + $0x658] sm:$0xff]
        %v1013 = vld [vmem:[%s366 + $0x660] sm:$0xff]
        %v1014 = vld [vmem:[%s366 + $0x668] sm:$0xff]
        %v1015 = vld [vmem:[%s366 + $0x670] sm:$0xff]
        %v1016 = vld [vmem:[%s366 + $0x678] sm:$0xff]
        %v1017 = vld [vmem:[%s366 + $0x680] sm:$0xff]
        %v1018 = vld [vmem:[%s366 + $0x688] sm:$0xff]
        %v1019 = vld [vmem:[%s366 + $0x690] sm:$0xff]
        %v1020 = vld [vmem:[%s366 + $0x698] sm:$0xff]
        %v1021 = vld [vmem:[%s366 + $0x6a0] sm:$0xff]
        %v1022 = vld [vmem:[%s366 + $0x6a8] sm:$0xff]
        %v1023 = vld [vmem:[%s366 + $0x6b0] sm:$0xff]
        %v1024 = vld [vmem:[%s366 + $0x6b8] sm:$0xff]
        %v1025 = vld [vmem:[%s366 + $0x6c0] sm:$0xff]
        %v1026 = vld [vmem:[%s366 + $0x6c8] sm:$0xff]
        %v1027 = vld [vmem:[%s366 + $0x6d0] sm:$0xff]
        %v1028 = vld [vmem:[%s366 + $0x6d8] sm:$0xff]
        %v1029 = vld [vmem:[%s366 + $0x6e0] sm:$0xff]
        %v1030 = vld [vmem:[%s366 + $0x6e8] sm:$0xff]
        %v1031 = vld [vmem:[%s366 + $0x6f0] sm:$0xff]
        %v1032 = vld [vmem:[%s366 + $0x6f8] sm:$0xff]
        %v1033 = vld [vmem:[%s366 + $0x700] sm:$0xff]
        %v1034 = vld [vmem:[%s366 + $0x708] sm:$0xff]
        %v1035 = vld [vmem:[%s366 + $0x710] sm:$0xff]
        %v1036 = vld [vmem:[%s366 + $0x718] sm:$0xff]
        %v1037 = vld [vmem:[%s366 + $0x720] sm:$0xff]
        %v1038 = vld [vmem:[%s366 + $0x728] sm:$0xff]
        %v1039 = vld [vmem:[%s366 + $0x730] sm:$0xff]
        %v1040 = vld [vmem:[%s366 + $0x738] sm:$0xff]
        %v1041 = vld [vmem:[%s366 + $0x740] sm:$0xff]
        %v1042 = vld [vmem:[%s366 + $0x748] sm:$0xff]
        %v1043 = vld [vmem:[%s366 + $0x750] sm:$0xff]
        %v1044 = vld [vmem:[%s366 + $0x758] sm:$0xff]
        %v1045 = vld [vmem:[%s366 + $0x760] sm:$0xff]
        %v1046 = vld [vmem:[%s366 + $0x768] sm:$0xff]
        %v1047 = vld [vmem:[%s366 + $0x770] sm:$0xff]
        %v1048 = vld [vmem:[%s366 + $0x778] sm:$0xff]
        %v1049 = vld [vmem:[%s366 + $0x780] sm:$0xff]
        %v1050 = vld [vmem:[%s366 + $0x788] sm:$0xff]
        %v1051 = vld [vmem:[%s366 + $0x790] sm:$0xff]
        %v1052 = vld [vmem:[%s366 + $0x798] sm:$0xff]
        %v1053 = vld [vmem:[%s366 + $0x7a0] sm:$0xff]
        %v1054 = vld [vmem:[%s366 + $0x7a8] sm:$0xff]
        %v1055 = vld [vmem:[%s366 + $0x7b0] sm:$0xff]
        %v1056 = vld [vmem:[%s366 + $0x7b8] sm:$0xff]
        %v1057 = vld [vmem:[%s366 + $0x7c0] sm:$0xff]
        %v1058 = vld [vmem:[%s366 + $0x7c8] sm:$0xff]
        %v1059 = vld [vmem:[%s366 + $0x7d0] sm:$0xff]
        %v1060 = vld [vmem:[%s366 + $0x7d8] sm:$0xff]
        %v1061 = vld [vmem:[%s366 + $0x7e0] sm:$0xff]
        %v1062 = vld [vmem:[%s366 + $0x7e8] sm:$0xff]
        %v1063 = vld [vmem:[%s366 + $0x7f0] sm:$0xff]
        %v1064 = vld [vmem:[%s366 + $0x7f8] sm:$0xff]
        %v1065 = vld [vmem:[%s366 + $0x800] sm:$0xff]
        %v1066 = vld [vmem:[%s366 + $0x808] sm:$0xff]
        %v1067 = vld [vmem:[%s366 + $0x810] sm:$0xff]
        %v1068 = vld [vmem:[%s366 + $0x818] sm:$0xff]
        %v1069 = vld [vmem:[%s366 + $0x820] sm:$0xff]
        %v1070 = vld [vmem:[%s366 + $0x828] sm:$0xff]
        %v1071 = vld [vmem:[%s366 + $0x830] sm:$0xff]
        %v1072 = vld [vmem:[%s366 + $0x838] sm:$0xff]
        %v1073 = vld [vmem:[%s366 + $0x840] sm:$0xff]
        %v1074 = vld [vmem:[%s366 + $0x848] sm:$0xff]
        %v1075 = vld [vmem:[%s366 + $0x850] sm:$0xff]
        %v1076 = vld [vmem:[%s366 + $0x858] sm:$0xff]
        %v1077 = vld [vmem:[%s366 + $0x860] sm:$0xff]
        %v1078 = vld [vmem:[%s366 + $0x868] sm:$0xff]
        %v1079 = vld [vmem:[%s366 + $0x870] sm:$0xff]
        %v1080 = vld [vmem:[%s366 + $0x878] sm:$0xff]
        %v1081 = vld [vmem:[%s366 + $0x880] sm:$0xff]
        %v1082 = vld [vmem:[%s366 + $0x888] sm:$0xff]
        %v1083 = vld [vmem:[%s366 + $0x890] sm:$0xff]
        %v1084 = vld [vmem:[%s366 + $0x898] sm:$0xff]
        %v1085 = vld [vmem:[%s366 + $0x8a0] sm:$0xff]
        %v1086 = vld [vmem:[%s366 + $0x8a8] sm:$0xff]
        %v1087 = vld [vmem:[%s366 + $0x8b0] sm:$0xff]
        %v1088 = vld [vmem:[%s366 + $0x8b8] sm:$0xff]
        %v1089 = vld [vmem:[%s366 + $0x8c0] sm:$0xff]
        %v1090 = vld [vmem:[%s366 + $0x8c8] sm:$0xff]
        %v1091 = vld [vmem:[%s366 + $0x8d0] sm:$0xff]
        %v1092 = vld [vmem:[%s366 + $0x8d8] sm:$0xff]
        %v1093 = vld [vmem:[%s366 + $0x8e0] sm:$0xff]
        %v1094 = vld [vmem:[%s366 + $0x8e8] sm:$0xff]
        %v1095 = vld [vmem:[%s366 + $0x8f0] sm:$0xff]
        %v1096 = vld [vmem:[%s366 + $0x8f8] sm:$0xff]
        %v1097 = vld [vmem:[%s366 + $0x900] sm:$0xff]
        %v1098 = vld [vmem:[%s366 + $0x908] sm:$0xff]
        %v1099 = vld [vmem:[%s366 + $0x910] sm:$0xff]
        %v1100 = vld [vmem:[%s366 + $0x918] sm:$0xff]
        %v1101 = vld [vmem:[%s366 + $0x920] sm:$0xff]
        %v1102 = vld [vmem:[%s366 + $0x928] sm:$0xff]
        %v1103 = vld [vmem:[%s366 + $0x930] sm:$0xff]
        %v1104 = vld [vmem:[%s366 + $0x938] sm:$0xff]
        %v1105 = vld [vmem:[%s366 + $0x940] sm:$0xff]
        %v1106 = vld [vmem:[%s366 + $0x948] sm:$0xff]
        %v1107 = vld [vmem:[%s366 + $0x950] sm:$0xff]
        %v1108 = vld [vmem:[%s366 + $0x958] sm:$0xff]
        %v1109 = vld [vmem:[%s366 + $0x960] sm:$0xff]
        %v1110 = vld [vmem:[%s366 + $0x968] sm:$0xff]
        %v1111 = vld [vmem:[%s366 + $0x970] sm:$0xff]
        %v1112 = vld [vmem:[%s366 + $0x978] sm:$0xff]
        %v1113 = vld [vmem:[%s366 + $0x980] sm:$0xff]
        %v1114 = vld [vmem:[%s366 + $0x988] sm:$0xff]
        %v1115 = vld [vmem:[%s366 + $0x990] sm:$0xff]
        %v1116 = vld [vmem:[%s366 + $0x998] sm:$0xff]
        %v1117 = vld [vmem:[%s366 + $0x9a0] sm:$0xff]
        %v1118 = vld [vmem:[%s366 + $0x9a8] sm:$0xff]
        %v1119 = vld [vmem:[%s366 + $0x9b0] sm:$0xff]
        %v1120 = vld [vmem:[%s366 + $0x9b8] sm:$0xff]
        %v1121 = vld [vmem:[%s366 + $0x9c0] sm:$0xff]
        %v1122 = vld [vmem:[%s366 + $0x9c8] sm:$0xff]
        %v1123 = vld [vmem:[%s366 + $0x9d0] sm:$0xff]
        %v1124 = vld [vmem:[%s366 + $0x9d8] sm:$0xff]
        %v1125 = vld [vmem:[%s366 + $0x9e0] sm:$0xff]
        %v1126 = vld [vmem:[%s366 + $0x9e8] sm:$0xff]
        %v1127 = vld [vmem:[%s366 + $0x9f0] sm:$0xff]
        %v1128 = vld [vmem:[%s366 + $0x9f8] sm:$0xff]
        %v1129 = vld [vmem:[%s366 + $0xa00] sm:$0xff]
        %v1130 = vld [vmem:[%s366 + $0xa08] sm:$0xff]
        %v1131 = vld [vmem:[%s366 + $0xa10] sm:$0xff]
        %v1132 = vld [vmem:[%s366 + $0xa18] sm:$0xff]
        %v1133 = vld [vmem:[%s366 + $0xa20] sm:$0xff]
        %v1134 = vld [vmem:[%s366 + $0xa28] sm:$0xff]
        %v1135 = vld [vmem:[%s366 + $0xa30] sm:$0xff]
        %v1136 = vld [vmem:[%s366 + $0xa38] sm:$0xff]
        %v1137 = vld [vmem:[%s366 + $0xa40] sm:$0xff]
        %v1138 = vld [vmem:[%s366 + $0xa48] sm:$0xff]
        %v1139 = vld [vmem:[%s366 + $0xa50] sm:$0xff]
        %v1140 = vld [vmem:[%s366 + $0xa58] sm:$0xff]
        %v1141 = vld [vmem:[%s366 + $0xa60] sm:$0xff]
        %v1142 = vld [vmem:[%s366 + $0xa68] sm:$0xff]
        %v1143 = vld [vmem:[%s366 + $0xa70] sm:$0xff]
        %v1144 = vld [vmem:[%s366 + $0xa78] sm:$0xff]
        %v1145 = vld [vmem:[%s366 + $0xa80] sm:$0xff]
        %v1146 = vld [vmem:[%s366 + $0xa88] sm:$0xff]
        %v1147 = vld [vmem:[%s366 + $0xa90] sm:$0xff]
        %v1148 = vld [vmem:[%s366 + $0xa98] sm:$0xff]
        %v1149 = vld [vmem:[%s366 + $0xaa0] sm:$0xff]
        %v1150 = vld [vmem:[%s366 + $0xaa8] sm:$0xff]
        %v1151 = vld [vmem:[%s366 + $0xab0] sm:$0xff]
        %v1152 = vld [vmem:[%s366 + $0xab8] sm:$0xff]
        %v1153 = vld [vmem:[%s366 + $0xac0] sm:$0xff]
        %v1154 = vld [vmem:[%s366 + $0xac8] sm:$0xff]
        %v1155 = vld [vmem:[%s366 + $0xad0] sm:$0xff]
        %v1156 = vld [vmem:[%s366 + $0xad8] sm:$0xff]
        %v1157 = vld [vmem:[%s366 + $0xae0] sm:$0xff]
        %v1158 = vld [vmem:[%s366 + $0xae8] sm:$0xff]
        %v1159 = vld [vmem:[%s366 + $0xaf0] sm:$0xff]
        %v1160 = vld [vmem:[%s366 + $0xaf8] sm:$0xff]
        %v1161 = vld [vmem:[%s366 + $0xb00] sm:$0xff]
        %v1162 = vld [vmem:[%s366 + $0xb08] sm:$0xff]
        %v1163 = vld [vmem:[%s366 + $0xb10] sm:$0xff]
        %v1164 = vld [vmem:[%s366 + $0xb18] sm:$0xff]
        %v1165 = vld [vmem:[%s366 + $0xb20] sm:$0xff]
        %v1166 = vld [vmem:[%s366 + $0xb28] sm:$0xff]
        %v1167 = vld [vmem:[%s366 + $0xb30] sm:$0xff]
        %v1168 = vld [vmem:[%s366 + $0xb38] sm:$0xff]
        %v1169 = vld [vmem:[%s366 + $0xb40] sm:$0xff]
        %v1170 = vld [vmem:[%s366 + $0xb48] sm:$0xff]
        %v1171 = vld [vmem:[%s366 + $0xb50] sm:$0xff]
        %v1172 = vld [vmem:[%s366 + $0xb58] sm:$0xff]
        %v1173 = vld [vmem:[%s366 + $0xb60] sm:$0xff]
        %v1174 = vld [vmem:[%s366 + $0xb68] sm:$0xff]
        %v1175 = vld [vmem:[%s366 + $0xb70] sm:$0xff]
        %v1176 = vld [vmem:[%s366 + $0xb78] sm:$0xff]
        %v1177 = vld [vmem:[%s366 + $0xb80] sm:$0xff]
        %v1178 = vld [vmem:[%s366 + $0xb88] sm:$0xff]
        %v1179 = vld [vmem:[%s366 + $0xb90] sm:$0xff]
        %v1180 = vld [vmem:[%s366 + $0xb98] sm:$0xff]
        %v1181 = vld [vmem:[%s366 + $0xba0] sm:$0xff]
        %v1182 = vld [vmem:[%s366 + $0xba8] sm:$0xff]
        %v1183 = vld [vmem:[%s366 + $0xbb0] sm:$0xff]
        %v1184 = vld [vmem:[%s366 + $0xbb8] sm:$0xff]
        %v1185 = vld [vmem:[%s366 + $0xbc0] sm:$0xff]
        %v1186 = vld [vmem:[%s366 + $0xbc8] sm:$0xff]
        %v1187 = vld [vmem:[%s366 + $0xbd0] sm:$0xff]
        %v1188 = vld [vmem:[%s366 + $0xbd8] sm:$0xff]
        %v1189 = vld [vmem:[%s366 + $0xbe0] sm:$0xff]
        %v1190 = vld [vmem:[%s366 + $0xbe8] sm:$0xff]
        %v1191 = vld [vmem:[%s366 + $0xbf0] sm:$0xff]
        %v1192 = vld [vmem:[%s366 + $0xbf8] sm:$0xff]
        %v1193 = vld [vmem:[%s366 + $0xc00] sm:$0xff]
        %v1194 = vld [vmem:[%s366 + $0xc08] sm:$0xff]
        %v1195 = vld [vmem:[%s366 + $0xc10] sm:$0xff]
        %v1196 = vld [vmem:[%s366 + $0xc18] sm:$0xff]
        %v1197 = vld [vmem:[%s366 + $0xc20] sm:$0xff]
        %v1198 = vld [vmem:[%s366 + $0xc28] sm:$0xff]
        %v1199 = vld [vmem:[%s366 + $0xc30] sm:$0xff]
        %v1200 = vld [vmem:[%s366 + $0xc38] sm:$0xff]
        %v1201 = vld [vmem:[%s366 + $0xc40] sm:$0xff]
        %v1202 = vld [vmem:[%s366 + $0xc48] sm:$0xff]
        %v1203 = vld [vmem:[%s366 + $0xc50] sm:$0xff]
        %v1204 = vld [vmem:[%s366 + $0xc58] sm:$0xff]
        %v1205 = vld [vmem:[%s366 + $0xc60] sm:$0xff]
        %v1206 = vld [vmem:[%s366 + $0xc68] sm:$0xff]
        %v1207 = vld [vmem:[%s366 + $0xc70] sm:$0xff]
        %v1208 = vld [vmem:[%s366 + $0xc78] sm:$0xff]
        %v1209 = vld [vmem:[%s366 + $0xc80] sm:$0xff]
        %v1210 = vld [vmem:[%s366 + $0xc88] sm:$0xff]
        %v1211 = vld [vmem:[%s366 + $0xc90] sm:$0xff]
        %v1212 = vld [vmem:[%s366 + $0xc98] sm:$0xff]
        %v1213 = vld [vmem:[%s366 + $0xca0] sm:$0xff]
        %v1214 = vld [vmem:[%s366 + $0xca8] sm:$0xff]
        %v1215 = vld [vmem:[%s366 + $0xcb0] sm:$0xff]
        %v1216 = vld [vmem:[%s366 + $0xcb8] sm:$0xff]
        %v1217 = vld [vmem:[%s366 + $0xcc0] sm:$0xff]
        %v1218 = vld [vmem:[%s366 + $0xcc8] sm:$0xff]
        %v1219 = vld [vmem:[%s366 + $0xcd0] sm:$0xff]
        %v1220 = vld [vmem:[%s366 + $0xcd8] sm:$0xff]
        %v1221 = vld [vmem:[%s366 + $0xce0] sm:$0xff]
        %v1222 = vld [vmem:[%s366 + $0xce8] sm:$0xff]
        %v1223 = vld [vmem:[%s366 + $0xcf0] sm:$0xff]
        %v1224 = vld [vmem:[%s366 + $0xcf8] sm:$0xff]
        %v1225 = vld [vmem:[%s366 + $0xd00] sm:$0xff]
        %v1226 = vld [vmem:[%s366 + $0xd08] sm:$0xff]
        %v1227 = vld [vmem:[%s366 + $0xd10] sm:$0xff]
        %v1228 = vld [vmem:[%s366 + $0xd18] sm:$0xff]
        %v1229 = vld [vmem:[%s366 + $0xd20] sm:$0xff]
        %v1230 = vld [vmem:[%s366 + $0xd28] sm:$0xff]
        %v1231 = vld [vmem:[%s366 + $0xd30] sm:$0xff]
        %v1232 = vld [vmem:[%s366 + $0xd38] sm:$0xff]
        %v1233 = vld [vmem:[%s366 + $0xd40] sm:$0xff]
        %v1234 = vld [vmem:[%s366 + $0xd48] sm:$0xff]
        %v1235 = vld [vmem:[%s366 + $0xd50] sm:$0xff]
        %v1236 = vld [vmem:[%s366 + $0xd58] sm:$0xff]
        %v1237 = vld [vmem:[%s366 + $0xd60] sm:$0xff]
        %v1238 = vld [vmem:[%s366 + $0xd68] sm:$0xff]
        %v1239 = vld [vmem:[%s366 + $0xd70] sm:$0xff]
        %v1240 = vld [vmem:[%s366 + $0xd78] sm:$0xff]
        %v1241 = vld [vmem:[%s366 + $0xd80] sm:$0xff]
        %v1242 = vld [vmem:[%s366 + $0xd88] sm:$0xff]
        %v1243 = vld [vmem:[%s366 + $0xd90] sm:$0xff]
        %v1244 = vld [vmem:[%s366 + $0xd98] sm:$0xff]
        %v1245 = vld [vmem:[%s366 + $0xda0] sm:$0xff]
        %v1246 = vld [vmem:[%s366 + $0xda8] sm:$0xff]
        %v1247 = vld [vmem:[%s366 + $0xdb0] sm:$0xff]
        %v1248 = vld [vmem:[%s366 + $0xdb8] sm:$0xff]
        %v1249 = vld [vmem:[%s366 + $0xdc0] sm:$0xff]
        %v1250 = vld [vmem:[%s366 + $0xdc8] sm:$0xff]
        %v1251 = vld [vmem:[%s366 + $0xdd0] sm:$0xff]
        %v1252 = vld [vmem:[%s366 + $0xdd8] sm:$0xff]
        %v1253 = vld [vmem:[%s366 + $0xde0] sm:$0xff]
        %v1254 = vld [vmem:[%s366 + $0xde8] sm:$0xff]
        %v1255 = vld [vmem:[%s366 + $0xdf0] sm:$0xff]
        %v1256 = vld [vmem:[%s366 + $0xdf8] sm:$0xff]
        %v1257 = vld [vmem:[%s366 + $0xe00] sm:$0xff]
        %v1258 = vld [vmem:[%s366 + $0xe08] sm:$0xff]
        %v1259 = vld [vmem:[%s366 + $0xe10] sm:$0xff]
        %v1260 = vld [vmem:[%s366 + $0xe18] sm:$0xff]
        %v1261 = vld [vmem:[%s366 + $0xe20] sm:$0xff]
        %v1262 = vld [vmem:[%s366 + $0xe28] sm:$0xff]
        %v1263 = vld [vmem:[%s366 + $0xe30] sm:$0xff]
        %v1264 = vld [vmem:[%s366 + $0xe38] sm:$0xff]
        %v1265 = vld [vmem:[%s366 + $0xe40] sm:$0xff]
        %v1266 = vld [vmem:[%s366 + $0xe48] sm:$0xff]
        %v1267 = vld [vmem:[%s366 + $0xe50] sm:$0xff]
        %v1268 = vld [vmem:[%s366 + $0xe58] sm:$0xff]
        %v1269 = vld [vmem:[%s366 + $0xe60] sm:$0xff]
        %v1270 = vld [vmem:[%s366 + $0xe68] sm:$0xff]
        %v1271 = vld [vmem:[%s366 + $0xe70] sm:$0xff]
        %v1272 = vld [vmem:[%s366 + $0xe78] sm:$0xff]
        %v1273 = vld [vmem:[%s366 + $0xe80] sm:$0xff]
        %v1274 = vld [vmem:[%s366 + $0xe88] sm:$0xff]
        %v1275 = vld [vmem:[%s366 + $0xe90] sm:$0xff]
        %v1276 = vld [vmem:[%s366 + $0xe98] sm:$0xff]
        %v1277 = vld [vmem:[%s366 + $0xea0] sm:$0xff]
        %v1278 = vld [vmem:[%s366 + $0xea8] sm:$0xff]
        %v1279 = vld [vmem:[%s366 + $0xeb0] sm:$0xff]
        %v1280 = vld [vmem:[%s366 + $0xeb8] sm:$0xff]
        %v1281 = vld [vmem:[%s366 + $0xec0] sm:$0xff]
        %v1282 = vld [vmem:[%s366 + $0xec8] sm:$0xff]
        %v1283 = vld [vmem:[%s366 + $0xed0] sm:$0xff]
        %v1284 = vld [vmem:[%s366 + $0xed8] sm:$0xff]
        %v1285 = vld [vmem:[%s366 + $0xee0] sm:$0xff]
        %v1286 = vld [vmem:[%s366 + $0xee8] sm:$0xff]
        %v1287 = vld [vmem:[%s366 + $0xef0] sm:$0xff]
        %v1288 = vld [vmem:[%s366 + $0xef8] sm:$0xff]
        %v1289 = vld [vmem:[%s366 + $0xf00] sm:$0xff]
        %v1290 = vld [vmem:[%s366 + $0xf08] sm:$0xff]
        %v1291 = vld [vmem:[%s366 + $0xf10] sm:$0xff]
        %v1292 = vld [vmem:[%s366 + $0xf18] sm:$0xff]
        %v1293 = vld [vmem:[%s366 + $0xf20] sm:$0xff]
        %v1294 = vld [vmem:[%s366 + $0xf28] sm:$0xff]
        %v1295 = vld [vmem:[%s366 + $0xf30] sm:$0xff]
        %v1296 = vld [vmem:[%s366 + $0xf38] sm:$0xff]
        %v1297 = vld [vmem:[%s366 + $0xf40] sm:$0xff]
        %v1298 = vld [vmem:[%s366 + $0xf48] sm:$0xff]
        %v1299 = vld [vmem:[%s366 + $0xf50] sm:$0xff]
        %v1300 = vld [vmem:[%s366 + $0xf58] sm:$0xff]
        %v1301 = vld [vmem:[%s366 + $0xf60] sm:$0xff]
        %v1302 = vld [vmem:[%s366 + $0xf68] sm:$0xff]
        %v1303 = vld [vmem:[%s366 + $0xf70] sm:$0xff]
        %v1304 = vld [vmem:[%s366 + $0xf78] sm:$0xff]
        %v1305 = vld [vmem:[%s366 + $0xf80] sm:$0xff]
        %v1306 = vld [vmem:[%s366 + $0xf88] sm:$0xff]
        %v1307 = vld [vmem:[%s366 + $0xf90] sm:$0xff]
        %v1308 = vld [vmem:[%s366 + $0xf98] sm:$0xff]
        %v1309 = vld [vmem:[%s366 + $0xfa0] sm:$0xff]
        %v1310 = vld [vmem:[%s366 + $0xfa8] sm:$0xff]
        %v1311 = vld [vmem:[%s366 + $0xfb0] sm:$0xff]
        %v1312 = vld [vmem:[%s366 + $0xfb8] sm:$0xff]
        %v1313 = vld [vmem:[%s366 + $0xfc0] sm:$0xff]
        %v1314 = vld [vmem:[%s366 + $0xfc8] sm:$0xff]
        %v1315 = vld [vmem:[%s366 + $0xfd0] sm:$0xff]
        %v1316 = vld [vmem:[%s366 + $0xfd8] sm:$0xff]
        %v1317 = vld [vmem:[%s366 + $0xfe0] sm:$0xff]
        %v1318 = vld [vmem:[%s366 + $0xfe8] sm:$0xff]
        %v1319 = vld [vmem:[%s366 + $0xff0] sm:$0xff]
        %v1320 = vld [vmem:[%s366 + $0xff8] sm:$0xff]
        %v1321 = vunpack.c.l.s8.bf16 %v809
        %v1322 = vunpack.c.l.s8.bf16 %v810
        %v1323 = vunpack.c.l.s8.bf16 %v811
        %v1324 = vunpack.c.l.s8.bf16 %v812
        %v1325 = vunpack.c.l.s8.bf16 %v813
        %v1326 = vunpack.c.l.s8.bf16 %v814
        %v1327 = vunpack.c.l.s8.bf16 %v815
        %v1328 = vunpack.c.l.s8.bf16 %v816
        %v1329 = vunpack.c.l.s8.bf16 %v817
        %v1330 = vunpack.c.l.s8.bf16 %v818
        %v1331 = vunpack.c.l.s8.bf16 %v819
        %v1332 = vunpack.c.l.s8.bf16 %v820
        %v1333 = vunpack.c.l.s8.bf16 %v821
        %v1334 = vunpack.c.l.s8.bf16 %v822
        %v1335 = vunpack.c.l.s8.bf16 %v823
        %v1336 = vunpack.c.l.s8.bf16 %v824
        %v1337 = vunpack.c.h.s8.bf16 %v809
        %v1338 = vunpack.c.h.s8.bf16 %v810
        %v1339 = vunpack.c.h.s8.bf16 %v811
        %v1340 = vunpack.c.h.s8.bf16 %v812
        %v1341 = vunpack.c.h.s8.bf16 %v813
        %v1342 = vunpack.c.h.s8.bf16 %v814
        %v1343 = vunpack.c.h.s8.bf16 %v815
        %v1344 = vunpack.c.h.s8.bf16 %v816
        %v1345 = vunpack.c.h.s8.bf16 %v817
        %v1346 = vunpack.c.h.s8.bf16 %v818
        %v1347 = vunpack.c.h.s8.bf16 %v819
        %v1348 = vunpack.c.h.s8.bf16 %v820
        %v1349 = vunpack.c.h.s8.bf16 %v821
        %v1350 = vunpack.c.h.s8.bf16 %v822
        %v1351 = vunpack.c.h.s8.bf16 %v823
        %v1352 = vunpack.c.h.s8.bf16 %v824
        %v1353 = vunpack.c.l.s8.bf16 %v825
        %v1354 = vunpack.c.l.s8.bf16 %v826
        %v1355 = vunpack.c.l.s8.bf16 %v827
        %v1356 = vunpack.c.l.s8.bf16 %v828
        %v1357 = vunpack.c.l.s8.bf16 %v829
        %v1358 = vunpack.c.l.s8.bf16 %v830
        %v1359 = vunpack.c.l.s8.bf16 %v831
        %v1360 = vunpack.c.l.s8.bf16 %v832
        %v1361 = vunpack.c.l.s8.bf16 %v833
        %v1362 = vunpack.c.l.s8.bf16 %v834
        %v1363 = vunpack.c.l.s8.bf16 %v835
        %v1364 = vunpack.c.l.s8.bf16 %v836
        %v1365 = vunpack.c.l.s8.bf16 %v837
        %v1366 = vunpack.c.l.s8.bf16 %v838
        %v1367 = vunpack.c.l.s8.bf16 %v839
        %v1368 = vunpack.c.l.s8.bf16 %v840
        %v1369 = vunpack.c.h.s8.bf16 %v825
        %v1370 = vunpack.c.h.s8.bf16 %v826
        %v1371 = vunpack.c.h.s8.bf16 %v827
        %v1372 = vunpack.c.h.s8.bf16 %v828
        %v1373 = vunpack.c.h.s8.bf16 %v829
        %v1374 = vunpack.c.h.s8.bf16 %v830
        %v1375 = vunpack.c.h.s8.bf16 %v831
        %v1376 = vunpack.c.h.s8.bf16 %v832
        %v1377 = vunpack.c.h.s8.bf16 %v833
        %v1378 = vunpack.c.h.s8.bf16 %v834
        %v1379 = vunpack.c.h.s8.bf16 %v835
        %v1380 = vunpack.c.h.s8.bf16 %v836
        %v1381 = vunpack.c.h.s8.bf16 %v837
        %v1382 = vunpack.c.h.s8.bf16 %v838
        %v1383 = vunpack.c.h.s8.bf16 %v839
        %v1384 = vunpack.c.h.s8.bf16 %v840
        %v1385 = vunpack.c.l.s8.bf16 %v841
        %v1386 = vunpack.c.l.s8.bf16 %v842
        %v1387 = vunpack.c.l.s8.bf16 %v843
        %v1388 = vunpack.c.l.s8.bf16 %v844
        %v1389 = vunpack.c.l.s8.bf16 %v845
        %v1390 = vunpack.c.l.s8.bf16 %v846
        %v1391 = vunpack.c.l.s8.bf16 %v847
        %v1392 = vunpack.c.l.s8.bf16 %v848
        %v1393 = vunpack.c.l.s8.bf16 %v849
        %v1394 = vunpack.c.l.s8.bf16 %v850
        %v1395 = vunpack.c.l.s8.bf16 %v851
        %v1396 = vunpack.c.l.s8.bf16 %v852
        %v1397 = vunpack.c.l.s8.bf16 %v853
        %v1398 = vunpack.c.l.s8.bf16 %v854
        %v1399 = vunpack.c.l.s8.bf16 %v855
        %v1400 = vunpack.c.l.s8.bf16 %v856
        %v1401 = vunpack.c.h.s8.bf16 %v841
        %v1402 = vunpack.c.h.s8.bf16 %v842
        %v1403 = vunpack.c.h.s8.bf16 %v843
        %v1404 = vunpack.c.h.s8.bf16 %v844
        %v1405 = vunpack.c.h.s8.bf16 %v845
        %v1406 = vunpack.c.h.s8.bf16 %v846
        %v1407 = vunpack.c.h.s8.bf16 %v847
        %v1408 = vunpack.c.h.s8.bf16 %v848
        %v1409 = vunpack.c.h.s8.bf16 %v849
        %v1410 = vunpack.c.h.s8.bf16 %v850
        %v1411 = vunpack.c.h.s8.bf16 %v851
        %v1412 = vunpack.c.h.s8.bf16 %v852
        %v1413 = vunpack.c.h.s8.bf16 %v853
        %v1414 = vunpack.c.h.s8.bf16 %v854
        %v1415 = vunpack.c.h.s8.bf16 %v855
        %v1416 = vunpack.c.h.s8.bf16 %v856
        %v1417 = vunpack.c.l.s8.bf16 %v857
        %v1418 = vunpack.c.l.s8.bf16 %v858
        %v1419 = vunpack.c.l.s8.bf16 %v859
        %v1420 = vunpack.c.l.s8.bf16 %v860
        %v1421 = vunpack.c.l.s8.bf16 %v861
        %v1422 = vunpack.c.l.s8.bf16 %v862
        %v1423 = vunpack.c.l.s8.bf16 %v863
        %v1424 = vunpack.c.l.s8.bf16 %v864
        %v1425 = vunpack.c.l.s8.bf16 %v865
        %v1426 = vunpack.c.l.s8.bf16 %v866
        %v1427 = vunpack.c.l.s8.bf16 %v867
        %v1428 = vunpack.c.l.s8.bf16 %v868
        %v1429 = vunpack.c.l.s8.bf16 %v869
        %v1430 = vunpack.c.l.s8.bf16 %v870
        %v1431 = vunpack.c.l.s8.bf16 %v871
        %v1432 = vunpack.c.l.s8.bf16 %v872
        %v1433 = vunpack.c.h.s8.bf16 %v857
        %v1434 = vunpack.c.h.s8.bf16 %v858
        %v1435 = vunpack.c.h.s8.bf16 %v859
        %v1436 = vunpack.c.h.s8.bf16 %v860
        %v1437 = vunpack.c.h.s8.bf16 %v861
        %v1438 = vunpack.c.h.s8.bf16 %v862
        %v1439 = vunpack.c.h.s8.bf16 %v863
        %v1440 = vunpack.c.h.s8.bf16 %v864
        %v1441 = vunpack.c.h.s8.bf16 %v865
        %v1442 = vunpack.c.h.s8.bf16 %v866
        %v1443 = vunpack.c.h.s8.bf16 %v867
        %v1444 = vunpack.c.h.s8.bf16 %v868
        %v1445 = vunpack.c.h.s8.bf16 %v869
        %v1446 = vunpack.c.h.s8.bf16 %v870
        %v1447 = vunpack.c.h.s8.bf16 %v871
        %v1448 = vunpack.c.h.s8.bf16 %v872
        %v1449 = vunpack.c.l.s8.bf16 %v873
        %v1450 = vunpack.c.l.s8.bf16 %v874
        %v1451 = vunpack.c.l.s8.bf16 %v875
        %v1452 = vunpack.c.l.s8.bf16 %v876
        %v1453 = vunpack.c.l.s8.bf16 %v877
        %v1454 = vunpack.c.l.s8.bf16 %v878
        %v1455 = vunpack.c.l.s8.bf16 %v879
        %v1456 = vunpack.c.l.s8.bf16 %v880
        %v1457 = vunpack.c.l.s8.bf16 %v881
        %v1458 = vunpack.c.l.s8.bf16 %v882
        %v1459 = vunpack.c.l.s8.bf16 %v883
        %v1460 = vunpack.c.l.s8.bf16 %v884
        %v1461 = vunpack.c.l.s8.bf16 %v885
        %v1462 = vunpack.c.l.s8.bf16 %v886
        %v1463 = vunpack.c.l.s8.bf16 %v887
        %v1464 = vunpack.c.l.s8.bf16 %v888
        %v1465 = vunpack.c.h.s8.bf16 %v873
        %v1466 = vunpack.c.h.s8.bf16 %v874
        %v1467 = vunpack.c.h.s8.bf16 %v875
        %v1468 = vunpack.c.h.s8.bf16 %v876
        %v1469 = vunpack.c.h.s8.bf16 %v877
        %v1470 = vunpack.c.h.s8.bf16 %v878
        %v1471 = vunpack.c.h.s8.bf16 %v879
        %v1472 = vunpack.c.h.s8.bf16 %v880
        %v1473 = vunpack.c.h.s8.bf16 %v881
        %v1474 = vunpack.c.h.s8.bf16 %v882
        %v1475 = vunpack.c.h.s8.bf16 %v883
        %v1476 = vunpack.c.h.s8.bf16 %v884
        %v1477 = vunpack.c.h.s8.bf16 %v885
        %v1478 = vunpack.c.h.s8.bf16 %v886
        %v1479 = vunpack.c.h.s8.bf16 %v887
        %v1480 = vunpack.c.h.s8.bf16 %v888
        %v1481 = vunpack.c.l.s8.bf16 %v889
        %v1482 = vunpack.c.l.s8.bf16 %v890
        %v1483 = vunpack.c.l.s8.bf16 %v891
        %v1484 = vunpack.c.l.s8.bf16 %v892
        %v1485 = vunpack.c.l.s8.bf16 %v893
        %v1486 = vunpack.c.l.s8.bf16 %v894
        %v1487 = vunpack.c.l.s8.bf16 %v895
        %v1488 = vunpack.c.l.s8.bf16 %v896
        %v1489 = vunpack.c.l.s8.bf16 %v897
        %v1490 = vunpack.c.l.s8.bf16 %v898
        %v1491 = vunpack.c.l.s8.bf16 %v899
        %v1492 = vunpack.c.l.s8.bf16 %v900
        %v1493 = vunpack.c.l.s8.bf16 %v901
        %v1494 = vunpack.c.l.s8.bf16 %v902
        %v1495 = vunpack.c.l.s8.bf16 %v903
        %v1496 = vunpack.c.l.s8.bf16 %v904
        %v1497 = vunpack.c.h.s8.bf16 %v889
        %v1498 = vunpack.c.h.s8.bf16 %v890
        %v1499 = vunpack.c.h.s8.bf16 %v891
        %v1500 = vunpack.c.h.s8.bf16 %v892
        %v1501 = vunpack.c.h.s8.bf16 %v893
        %v1502 = vunpack.c.h.s8.bf16 %v894
        %v1503 = vunpack.c.h.s8.bf16 %v895
        %v1504 = vunpack.c.h.s8.bf16 %v896
        %v1505 = vunpack.c.h.s8.bf16 %v897
        %v1506 = vunpack.c.h.s8.bf16 %v898
        %v1507 = vunpack.c.h.s8.bf16 %v899
        %v1508 = vunpack.c.h.s8.bf16 %v900
        %v1509 = vunpack.c.h.s8.bf16 %v901
        %v1510 = vunpack.c.h.s8.bf16 %v902
        %v1511 = vunpack.c.h.s8.bf16 %v903
        %v1512 = vunpack.c.h.s8.bf16 %v904
        %v1513 = vunpack.c.l.s8.bf16 %v905
        %v1514 = vunpack.c.l.s8.bf16 %v906
        %v1515 = vunpack.c.l.s8.bf16 %v907
        %v1516 = vunpack.c.l.s8.bf16 %v908
        %v1517 = vunpack.c.l.s8.bf16 %v909
        %v1518 = vunpack.c.l.s8.bf16 %v910
        %v1519 = vunpack.c.l.s8.bf16 %v911
        %v1520 = vunpack.c.l.s8.bf16 %v912
        %v1521 = vunpack.c.l.s8.bf16 %v913
        %v1522 = vunpack.c.l.s8.bf16 %v914
        %v1523 = vunpack.c.l.s8.bf16 %v915
        %v1524 = vunpack.c.l.s8.bf16 %v916
        %v1525 = vunpack.c.l.s8.bf16 %v917
        %v1526 = vunpack.c.l.s8.bf16 %v918
        %v1527 = vunpack.c.l.s8.bf16 %v919
        %v1528 = vunpack.c.l.s8.bf16 %v920
        %v1529 = vunpack.c.h.s8.bf16 %v905
        %v1530 = vunpack.c.h.s8.bf16 %v906
        %v1531 = vunpack.c.h.s8.bf16 %v907
        %v1532 = vunpack.c.h.s8.bf16 %v908
        %v1533 = vunpack.c.h.s8.bf16 %v909
        %v1534 = vunpack.c.h.s8.bf16 %v910
        %v1535 = vunpack.c.h.s8.bf16 %v911
        %v1536 = vunpack.c.h.s8.bf16 %v912
        %v1537 = vunpack.c.h.s8.bf16 %v913
        %v1538 = vunpack.c.h.s8.bf16 %v914
        %v1539 = vunpack.c.h.s8.bf16 %v915
        %v1540 = vunpack.c.h.s8.bf16 %v916
        %v1541 = vunpack.c.h.s8.bf16 %v917
        %v1542 = vunpack.c.h.s8.bf16 %v918
        %v1543 = vunpack.c.h.s8.bf16 %v919
        %v1544 = vunpack.c.h.s8.bf16 %v920
        %v1545 = vunpack.c.l.s8.bf16 %v921
        %v1546 = vunpack.c.l.s8.bf16 %v922
        %v1547 = vunpack.c.l.s8.bf16 %v923
        %v1548 = vunpack.c.l.s8.bf16 %v924
        %v1549 = vunpack.c.l.s8.bf16 %v925
        %v1550 = vunpack.c.l.s8.bf16 %v926
        %v1551 = vunpack.c.l.s8.bf16 %v927
        %v1552 = vunpack.c.l.s8.bf16 %v928
        %v1553 = vunpack.c.l.s8.bf16 %v929
        %v1554 = vunpack.c.l.s8.bf16 %v930
        %v1555 = vunpack.c.l.s8.bf16 %v931
        %v1556 = vunpack.c.l.s8.bf16 %v932
        %v1557 = vunpack.c.l.s8.bf16 %v933
        %v1558 = vunpack.c.l.s8.bf16 %v934
        %v1559 = vunpack.c.l.s8.bf16 %v935
        %v1560 = vunpack.c.l.s8.bf16 %v936
        %v1561 = vunpack.c.h.s8.bf16 %v921
        %v1562 = vunpack.c.h.s8.bf16 %v922
        %v1563 = vunpack.c.h.s8.bf16 %v923
        %v1564 = vunpack.c.h.s8.bf16 %v924
        %v1565 = vunpack.c.h.s8.bf16 %v925
        %v1566 = vunpack.c.h.s8.bf16 %v926
        %v1567 = vunpack.c.h.s8.bf16 %v927
        %v1568 = vunpack.c.h.s8.bf16 %v928
        %v1569 = vunpack.c.h.s8.bf16 %v929
        %v1570 = vunpack.c.h.s8.bf16 %v930
        %v1571 = vunpack.c.h.s8.bf16 %v931
        %v1572 = vunpack.c.h.s8.bf16 %v932
        %v1573 = vunpack.c.h.s8.bf16 %v933
        %v1574 = vunpack.c.h.s8.bf16 %v934
        %v1575 = vunpack.c.h.s8.bf16 %v935
        %v1576 = vunpack.c.h.s8.bf16 %v936
        %v1577 = vunpack.c.l.s8.bf16 %v937
        %v1578 = vunpack.c.l.s8.bf16 %v938
        %v1579 = vunpack.c.l.s8.bf16 %v939
        %v1580 = vunpack.c.l.s8.bf16 %v940
        %v1581 = vunpack.c.l.s8.bf16 %v941
        %v1582 = vunpack.c.l.s8.bf16 %v942
        %v1583 = vunpack.c.l.s8.bf16 %v943
        %v1584 = vunpack.c.l.s8.bf16 %v944
        %v1585 = vunpack.c.l.s8.bf16 %v945
        %v1586 = vunpack.c.l.s8.bf16 %v946
        %v1587 = vunpack.c.l.s8.bf16 %v947
        %v1588 = vunpack.c.l.s8.bf16 %v948
        %v1589 = vunpack.c.l.s8.bf16 %v949
        %v1590 = vunpack.c.l.s8.bf16 %v950
        %v1591 = vunpack.c.l.s8.bf16 %v951
        %v1592 = vunpack.c.l.s8.bf16 %v952
        %v1593 = vunpack.c.h.s8.bf16 %v937
        %v1594 = vunpack.c.h.s8.bf16 %v938
        %v1595 = vunpack.c.h.s8.bf16 %v939
        %v1596 = vunpack.c.h.s8.bf16 %v940
        %v1597 = vunpack.c.h.s8.bf16 %v941
        %v1598 = vunpack.c.h.s8.bf16 %v942
        %v1599 = vunpack.c.h.s8.bf16 %v943
        %v1600 = vunpack.c.h.s8.bf16 %v944
        %v1601 = vunpack.c.h.s8.bf16 %v945
        %v1602 = vunpack.c.h.s8.bf16 %v946
        %v1603 = vunpack.c.h.s8.bf16 %v947
        %v1604 = vunpack.c.h.s8.bf16 %v948
        %v1605 = vunpack.c.h.s8.bf16 %v949
        %v1606 = vunpack.c.h.s8.bf16 %v950
        %v1607 = vunpack.c.h.s8.bf16 %v951
        %v1608 = vunpack.c.h.s8.bf16 %v952
        %v1609 = vunpack.c.l.s8.bf16 %v953
        %v1610 = vunpack.c.l.s8.bf16 %v954
        %v1611 = vunpack.c.l.s8.bf16 %v955
        %v1612 = vunpack.c.l.s8.bf16 %v956
        %v1613 = vunpack.c.l.s8.bf16 %v957
        %v1614 = vunpack.c.l.s8.bf16 %v958
        %v1615 = vunpack.c.l.s8.bf16 %v959
        %v1616 = vunpack.c.l.s8.bf16 %v960
        %v1617 = vunpack.c.l.s8.bf16 %v961
        %v1618 = vunpack.c.l.s8.bf16 %v962
        %v1619 = vunpack.c.l.s8.bf16 %v963
        %v1620 = vunpack.c.l.s8.bf16 %v964
        %v1621 = vunpack.c.l.s8.bf16 %v965
        %v1622 = vunpack.c.l.s8.bf16 %v966
        %v1623 = vunpack.c.l.s8.bf16 %v967
        %v1624 = vunpack.c.l.s8.bf16 %v968
        %v1625 = vunpack.c.h.s8.bf16 %v953
        %v1626 = vunpack.c.h.s8.bf16 %v954
        %v1627 = vunpack.c.h.s8.bf16 %v955
        %v1628 = vunpack.c.h.s8.bf16 %v956
        %v1629 = vunpack.c.h.s8.bf16 %v957
        %v1630 = vunpack.c.h.s8.bf16 %v958
        %v1631 = vunpack.c.h.s8.bf16 %v959
        %v1632 = vunpack.c.h.s8.bf16 %v960
        %v1633 = vunpack.c.h.s8.bf16 %v961
        %v1634 = vunpack.c.h.s8.bf16 %v962
        %v1635 = vunpack.c.h.s8.bf16 %v963
        %v1636 = vunpack.c.h.s8.bf16 %v964
        %v1637 = vunpack.c.h.s8.bf16 %v965
        %v1638 = vunpack.c.h.s8.bf16 %v966
        %v1639 = vunpack.c.h.s8.bf16 %v967
        %v1640 = vunpack.c.h.s8.bf16 %v968
        %v1641 = vunpack.c.l.s8.bf16 %v969
        %v1642 = vunpack.c.l.s8.bf16 %v970
        %v1643 = vunpack.c.l.s8.bf16 %v971
        %v1644 = vunpack.c.l.s8.bf16 %v972
        %v1645 = vunpack.c.l.s8.bf16 %v973
        %v1646 = vunpack.c.l.s8.bf16 %v974
        %v1647 = vunpack.c.l.s8.bf16 %v975
        %v1648 = vunpack.c.l.s8.bf16 %v976
        %v1649 = vunpack.c.l.s8.bf16 %v977
        %v1650 = vunpack.c.l.s8.bf16 %v978
        %v1651 = vunpack.c.l.s8.bf16 %v979
        %v1652 = vunpack.c.l.s8.bf16 %v980
        %v1653 = vunpack.c.l.s8.bf16 %v981
        %v1654 = vunpack.c.l.s8.bf16 %v982
        %v1655 = vunpack.c.l.s8.bf16 %v983
        %v1656 = vunpack.c.l.s8.bf16 %v984
        %v1657 = vunpack.c.h.s8.bf16 %v969
        %v1658 = vunpack.c.h.s8.bf16 %v970
        %v1659 = vunpack.c.h.s8.bf16 %v971
        %v1660 = vunpack.c.h.s8.bf16 %v972
        %v1661 = vunpack.c.h.s8.bf16 %v973
        %v1662 = vunpack.c.h.s8.bf16 %v974
        %v1663 = vunpack.c.h.s8.bf16 %v975
        %v1664 = vunpack.c.h.s8.bf16 %v976
        %v1665 = vunpack.c.h.s8.bf16 %v977
        %v1666 = vunpack.c.h.s8.bf16 %v978
        %v1667 = vunpack.c.h.s8.bf16 %v979
        %v1668 = vunpack.c.h.s8.bf16 %v980
        %v1669 = vunpack.c.h.s8.bf16 %v981
        %v1670 = vunpack.c.h.s8.bf16 %v982
        %v1671 = vunpack.c.h.s8.bf16 %v983
        %v1672 = vunpack.c.h.s8.bf16 %v984
        %v1673 = vunpack.c.l.s8.bf16 %v985
        %v1674 = vunpack.c.l.s8.bf16 %v986
        %v1675 = vunpack.c.l.s8.bf16 %v987
        %v1676 = vunpack.c.l.s8.bf16 %v988
        %v1677 = vunpack.c.l.s8.bf16 %v989
        %v1678 = vunpack.c.l.s8.bf16 %v990
        %v1679 = vunpack.c.l.s8.bf16 %v991
        %v1680 = vunpack.c.l.s8.bf16 %v992
        %v1681 = vunpack.c.l.s8.bf16 %v993
        %v1682 = vunpack.c.l.s8.bf16 %v994
        %v1683 = vunpack.c.l.s8.bf16 %v995
        %v1684 = vunpack.c.l.s8.bf16 %v996
        %v1685 = vunpack.c.l.s8.bf16 %v997
        %v1686 = vunpack.c.l.s8.bf16 %v998
        %v1687 = vunpack.c.l.s8.bf16 %v999
        %v1688 = vunpack.c.l.s8.bf16 %v1000
        %v1689 = vunpack.c.h.s8.bf16 %v985
        %v1690 = vunpack.c.h.s8.bf16 %v986
        %v1691 = vunpack.c.h.s8.bf16 %v987
        %v1692 = vunpack.c.h.s8.bf16 %v988
        %v1693 = vunpack.c.h.s8.bf16 %v989
        %v1694 = vunpack.c.h.s8.bf16 %v990
        %v1695 = vunpack.c.h.s8.bf16 %v991
        %v1696 = vunpack.c.h.s8.bf16 %v992
        %v1697 = vunpack.c.h.s8.bf16 %v993
        %v1698 = vunpack.c.h.s8.bf16 %v994
        %v1699 = vunpack.c.h.s8.bf16 %v995
        %v1700 = vunpack.c.h.s8.bf16 %v996
        %v1701 = vunpack.c.h.s8.bf16 %v997
        %v1702 = vunpack.c.h.s8.bf16 %v998
        %v1703 = vunpack.c.h.s8.bf16 %v999
        %v1704 = vunpack.c.h.s8.bf16 %v1000
        %v1705 = vunpack.c.l.s8.bf16 %v1001
        %v1706 = vunpack.c.l.s8.bf16 %v1002
        %v1707 = vunpack.c.l.s8.bf16 %v1003
        %v1708 = vunpack.c.l.s8.bf16 %v1004
        %v1709 = vunpack.c.l.s8.bf16 %v1005
        %v1710 = vunpack.c.l.s8.bf16 %v1006
        %v1711 = vunpack.c.l.s8.bf16 %v1007
        %v1712 = vunpack.c.l.s8.bf16 %v1008
        %v1713 = vunpack.c.l.s8.bf16 %v1009
        %v1714 = vunpack.c.l.s8.bf16 %v1010
        %v1715 = vunpack.c.l.s8.bf16 %v1011
        %v1716 = vunpack.c.l.s8.bf16 %v1012
        %v1717 = vunpack.c.l.s8.bf16 %v1013
        %v1718 = vunpack.c.l.s8.bf16 %v1014
        %v1719 = vunpack.c.l.s8.bf16 %v1015
        %v1720 = vunpack.c.l.s8.bf16 %v1016
        %v1721 = vunpack.c.h.s8.bf16 %v1001
        %v1722 = vunpack.c.h.s8.bf16 %v1002
        %v1723 = vunpack.c.h.s8.bf16 %v1003
        %v1724 = vunpack.c.h.s8.bf16 %v1004
        %v1725 = vunpack.c.h.s8.bf16 %v1005
        %v1726 = vunpack.c.h.s8.bf16 %v1006
        %v1727 = vunpack.c.h.s8.bf16 %v1007
        %v1728 = vunpack.c.h.s8.bf16 %v1008
        %v1729 = vunpack.c.h.s8.bf16 %v1009
        %v1730 = vunpack.c.h.s8.bf16 %v1010
        %v1731 = vunpack.c.h.s8.bf16 %v1011
        %v1732 = vunpack.c.h.s8.bf16 %v1012
        %v1733 = vunpack.c.h.s8.bf16 %v1013
        %v1734 = vunpack.c.h.s8.bf16 %v1014
        %v1735 = vunpack.c.h.s8.bf16 %v1015
        %v1736 = vunpack.c.h.s8.bf16 %v1016
        %v1737 = vunpack.c.l.s8.bf16 %v1017
        %v1738 = vunpack.c.l.s8.bf16 %v1018
        %v1739 = vunpack.c.l.s8.bf16 %v1019
        %v1740 = vunpack.c.l.s8.bf16 %v1020
        %v1741 = vunpack.c.l.s8.bf16 %v1021
        %v1742 = vunpack.c.l.s8.bf16 %v1022
        %v1743 = vunpack.c.l.s8.bf16 %v1023
        %v1744 = vunpack.c.l.s8.bf16 %v1024
        %v1745 = vunpack.c.l.s8.bf16 %v1025
        %v1746 = vunpack.c.l.s8.bf16 %v1026
        %v1747 = vunpack.c.l.s8.bf16 %v1027
        %v1748 = vunpack.c.l.s8.bf16 %v1028
        %v1749 = vunpack.c.l.s8.bf16 %v1029
        %v1750 = vunpack.c.l.s8.bf16 %v1030
        %v1751 = vunpack.c.l.s8.bf16 %v1031
        %v1752 = vunpack.c.l.s8.bf16 %v1032
        %v1753 = vunpack.c.h.s8.bf16 %v1017
        %v1754 = vunpack.c.h.s8.bf16 %v1018
        %v1755 = vunpack.c.h.s8.bf16 %v1019
        %v1756 = vunpack.c.h.s8.bf16 %v1020
        %v1757 = vunpack.c.h.s8.bf16 %v1021
        %v1758 = vunpack.c.h.s8.bf16 %v1022
        %v1759 = vunpack.c.h.s8.bf16 %v1023
        %v1760 = vunpack.c.h.s8.bf16 %v1024
        %v1761 = vunpack.c.h.s8.bf16 %v1025
        %v1762 = vunpack.c.h.s8.bf16 %v1026
        %v1763 = vunpack.c.h.s8.bf16 %v1027
        %v1764 = vunpack.c.h.s8.bf16 %v1028
        %v1765 = vunpack.c.h.s8.bf16 %v1029
        %v1766 = vunpack.c.h.s8.bf16 %v1030
        %v1767 = vunpack.c.h.s8.bf16 %v1031
        %v1768 = vunpack.c.h.s8.bf16 %v1032
        %v1769 = vunpack.c.l.s8.bf16 %v1033
        %v1770 = vunpack.c.l.s8.bf16 %v1034
        %v1771 = vunpack.c.l.s8.bf16 %v1035
        %v1772 = vunpack.c.l.s8.bf16 %v1036
        %v1773 = vunpack.c.l.s8.bf16 %v1037
        %v1774 = vunpack.c.l.s8.bf16 %v1038
        %v1775 = vunpack.c.l.s8.bf16 %v1039
        %v1776 = vunpack.c.l.s8.bf16 %v1040
        %v1777 = vunpack.c.l.s8.bf16 %v1041
        %v1778 = vunpack.c.l.s8.bf16 %v1042
        %v1779 = vunpack.c.l.s8.bf16 %v1043
        %v1780 = vunpack.c.l.s8.bf16 %v1044
        %v1781 = vunpack.c.l.s8.bf16 %v1045
        %v1782 = vunpack.c.l.s8.bf16 %v1046
        %v1783 = vunpack.c.l.s8.bf16 %v1047
        %v1784 = vunpack.c.l.s8.bf16 %v1048
        %v1785 = vunpack.c.h.s8.bf16 %v1033
        %v1786 = vunpack.c.h.s8.bf16 %v1034
        %v1787 = vunpack.c.h.s8.bf16 %v1035
        %v1788 = vunpack.c.h.s8.bf16 %v1036
        %v1789 = vunpack.c.h.s8.bf16 %v1037
        %v1790 = vunpack.c.h.s8.bf16 %v1038
        %v1791 = vunpack.c.h.s8.bf16 %v1039
        %v1792 = vunpack.c.h.s8.bf16 %v1040
        %v1793 = vunpack.c.h.s8.bf16 %v1041
        %v1794 = vunpack.c.h.s8.bf16 %v1042
        %v1795 = vunpack.c.h.s8.bf16 %v1043
        %v1796 = vunpack.c.h.s8.bf16 %v1044
        %v1797 = vunpack.c.h.s8.bf16 %v1045
        %v1798 = vunpack.c.h.s8.bf16 %v1046
        %v1799 = vunpack.c.h.s8.bf16 %v1047
        %v1800 = vunpack.c.h.s8.bf16 %v1048
        %v1801 = vunpack.c.l.s8.bf16 %v1049
        %v1802 = vunpack.c.l.s8.bf16 %v1050
        %v1803 = vunpack.c.l.s8.bf16 %v1051
        %v1804 = vunpack.c.l.s8.bf16 %v1052
        %v1805 = vunpack.c.l.s8.bf16 %v1053
        %v1806 = vunpack.c.l.s8.bf16 %v1054
        %v1807 = vunpack.c.l.s8.bf16 %v1055
        %v1808 = vunpack.c.l.s8.bf16 %v1056
        %v1809 = vunpack.c.l.s8.bf16 %v1057
        %v1810 = vunpack.c.l.s8.bf16 %v1058
        %v1811 = vunpack.c.l.s8.bf16 %v1059
        %v1812 = vunpack.c.l.s8.bf16 %v1060
        %v1813 = vunpack.c.l.s8.bf16 %v1061
        %v1814 = vunpack.c.l.s8.bf16 %v1062
        %v1815 = vunpack.c.l.s8.bf16 %v1063
        %v1816 = vunpack.c.l.s8.bf16 %v1064
        %v1817 = vunpack.c.h.s8.bf16 %v1049
        %v1818 = vunpack.c.h.s8.bf16 %v1050
        %v1819 = vunpack.c.h.s8.bf16 %v1051
        %v1820 = vunpack.c.h.s8.bf16 %v1052
        %v1821 = vunpack.c.h.s8.bf16 %v1053
        %v1822 = vunpack.c.h.s8.bf16 %v1054
        %v1823 = vunpack.c.h.s8.bf16 %v1055
        %v1824 = vunpack.c.h.s8.bf16 %v1056
        %v1825 = vunpack.c.h.s8.bf16 %v1057
        %v1826 = vunpack.c.h.s8.bf16 %v1058
        %v1827 = vunpack.c.h.s8.bf16 %v1059
        %v1828 = vunpack.c.h.s8.bf16 %v1060
        %v1829 = vunpack.c.h.s8.bf16 %v1061
        %v1830 = vunpack.c.h.s8.bf16 %v1062
        %v1831 = vunpack.c.h.s8.bf16 %v1063
        %v1832 = vunpack.c.h.s8.bf16 %v1064
        %v1833 = vunpack.c.l.s8.bf16 %v1065
        %v1834 = vunpack.c.l.s8.bf16 %v1066
        %v1835 = vunpack.c.l.s8.bf16 %v1067
        %v1836 = vunpack.c.l.s8.bf16 %v1068
        %v1837 = vunpack.c.l.s8.bf16 %v1069
        %v1838 = vunpack.c.l.s8.bf16 %v1070
        %v1839 = vunpack.c.l.s8.bf16 %v1071
        %v1840 = vunpack.c.l.s8.bf16 %v1072
        %v1841 = vunpack.c.l.s8.bf16 %v1073
        %v1842 = vunpack.c.l.s8.bf16 %v1074
        %v1843 = vunpack.c.l.s8.bf16 %v1075
        %v1844 = vunpack.c.l.s8.bf16 %v1076
        %v1845 = vunpack.c.l.s8.bf16 %v1077
        %v1846 = vunpack.c.l.s8.bf16 %v1078
        %v1847 = vunpack.c.l.s8.bf16 %v1079
        %v1848 = vunpack.c.l.s8.bf16 %v1080
        %v1849 = vunpack.c.h.s8.bf16 %v1065
        %v1850 = vunpack.c.h.s8.bf16 %v1066
        %v1851 = vunpack.c.h.s8.bf16 %v1067
        %v1852 = vunpack.c.h.s8.bf16 %v1068
        %v1853 = vunpack.c.h.s8.bf16 %v1069
        %v1854 = vunpack.c.h.s8.bf16 %v1070
        %v1855 = vunpack.c.h.s8.bf16 %v1071
        %v1856 = vunpack.c.h.s8.bf16 %v1072
        %v1857 = vunpack.c.h.s8.bf16 %v1073
        %v1858 = vunpack.c.h.s8.bf16 %v1074
        %v1859 = vunpack.c.h.s8.bf16 %v1075
        %v1860 = vunpack.c.h.s8.bf16 %v1076
        %v1861 = vunpack.c.h.s8.bf16 %v1077
        %v1862 = vunpack.c.h.s8.bf16 %v1078
        %v1863 = vunpack.c.h.s8.bf16 %v1079
        %v1864 = vunpack.c.h.s8.bf16 %v1080
        %v1865 = vunpack.c.l.s8.bf16 %v1081
        %v1866 = vunpack.c.l.s8.bf16 %v1082
        %v1867 = vunpack.c.l.s8.bf16 %v1083
        %v1868 = vunpack.c.l.s8.bf16 %v1084
        %v1869 = vunpack.c.l.s8.bf16 %v1085
        %v1870 = vunpack.c.l.s8.bf16 %v1086
        %v1871 = vunpack.c.l.s8.bf16 %v1087
        %v1872 = vunpack.c.l.s8.bf16 %v1088
        %v1873 = vunpack.c.l.s8.bf16 %v1089
        %v1874 = vunpack.c.l.s8.bf16 %v1090
        %v1875 = vunpack.c.l.s8.bf16 %v1091
        %v1876 = vunpack.c.l.s8.bf16 %v1092
        %v1877 = vunpack.c.l.s8.bf16 %v1093
        %v1878 = vunpack.c.l.s8.bf16 %v1094
        %v1879 = vunpack.c.l.s8.bf16 %v1095
        %v1880 = vunpack.c.l.s8.bf16 %v1096
        %v1881 = vunpack.c.h.s8.bf16 %v1081
        %v1882 = vunpack.c.h.s8.bf16 %v1082
        %v1883 = vunpack.c.h.s8.bf16 %v1083
        %v1884 = vunpack.c.h.s8.bf16 %v1084
        %v1885 = vunpack.c.h.s8.bf16 %v1085
        %v1886 = vunpack.c.h.s8.bf16 %v1086
        %v1887 = vunpack.c.h.s8.bf16 %v1087
        %v1888 = vunpack.c.h.s8.bf16 %v1088
        %v1889 = vunpack.c.h.s8.bf16 %v1089
        %v1890 = vunpack.c.h.s8.bf16 %v1090
        %v1891 = vunpack.c.h.s8.bf16 %v1091
        %v1892 = vunpack.c.h.s8.bf16 %v1092
        %v1893 = vunpack.c.h.s8.bf16 %v1093
        %v1894 = vunpack.c.h.s8.bf16 %v1094
        %v1895 = vunpack.c.h.s8.bf16 %v1095
        %v1896 = vunpack.c.h.s8.bf16 %v1096
        %v1897 = vunpack.c.l.s8.bf16 %v1097
        %v1898 = vunpack.c.l.s8.bf16 %v1098
        %v1899 = vunpack.c.l.s8.bf16 %v1099
        %v1900 = vunpack.c.l.s8.bf16 %v1100
        %v1901 = vunpack.c.l.s8.bf16 %v1101
        %v1902 = vunpack.c.l.s8.bf16 %v1102
        %v1903 = vunpack.c.l.s8.bf16 %v1103
        %v1904 = vunpack.c.l.s8.bf16 %v1104
        %v1905 = vunpack.c.l.s8.bf16 %v1105
        %v1906 = vunpack.c.l.s8.bf16 %v1106
        %v1907 = vunpack.c.l.s8.bf16 %v1107
        %v1908 = vunpack.c.l.s8.bf16 %v1108
        %v1909 = vunpack.c.l.s8.bf16 %v1109
        %v1910 = vunpack.c.l.s8.bf16 %v1110
        %v1911 = vunpack.c.l.s8.bf16 %v1111
        %v1912 = vunpack.c.l.s8.bf16 %v1112
        %v1913 = vunpack.c.h.s8.bf16 %v1097
        %v1914 = vunpack.c.h.s8.bf16 %v1098
        %v1915 = vunpack.c.h.s8.bf16 %v1099
        %v1916 = vunpack.c.h.s8.bf16 %v1100
        %v1917 = vunpack.c.h.s8.bf16 %v1101
        %v1918 = vunpack.c.h.s8.bf16 %v1102
        %v1919 = vunpack.c.h.s8.bf16 %v1103
        %v1920 = vunpack.c.h.s8.bf16 %v1104
        %v1921 = vunpack.c.h.s8.bf16 %v1105
        %v1922 = vunpack.c.h.s8.bf16 %v1106
        %v1923 = vunpack.c.h.s8.bf16 %v1107
        %v1924 = vunpack.c.h.s8.bf16 %v1108
        %v1925 = vunpack.c.h.s8.bf16 %v1109
        %v1926 = vunpack.c.h.s8.bf16 %v1110
        %v1927 = vunpack.c.h.s8.bf16 %v1111
        %v1928 = vunpack.c.h.s8.bf16 %v1112
        %v1929 = vunpack.c.l.s8.bf16 %v1113
        %v1930 = vunpack.c.l.s8.bf16 %v1114
        %v1931 = vunpack.c.l.s8.bf16 %v1115
        %v1932 = vunpack.c.l.s8.bf16 %v1116
        %v1933 = vunpack.c.l.s8.bf16 %v1117
        %v1934 = vunpack.c.l.s8.bf16 %v1118
        %v1935 = vunpack.c.l.s8.bf16 %v1119
        %v1936 = vunpack.c.l.s8.bf16 %v1120
        %v1937 = vunpack.c.l.s8.bf16 %v1121
        %v1938 = vunpack.c.l.s8.bf16 %v1122
        %v1939 = vunpack.c.l.s8.bf16 %v1123
        %v1940 = vunpack.c.l.s8.bf16 %v1124
        %v1941 = vunpack.c.l.s8.bf16 %v1125
        %v1942 = vunpack.c.l.s8.bf16 %v1126
        %v1943 = vunpack.c.l.s8.bf16 %v1127
        %v1944 = vunpack.c.l.s8.bf16 %v1128
        %v1945 = vunpack.c.h.s8.bf16 %v1113
        %v1946 = vunpack.c.h.s8.bf16 %v1114
        %v1947 = vunpack.c.h.s8.bf16 %v1115
        %v1948 = vunpack.c.h.s8.bf16 %v1116
        %v1949 = vunpack.c.h.s8.bf16 %v1117
        %v1950 = vunpack.c.h.s8.bf16 %v1118
        %v1951 = vunpack.c.h.s8.bf16 %v1119
        %v1952 = vunpack.c.h.s8.bf16 %v1120
        %v1953 = vunpack.c.h.s8.bf16 %v1121
        %v1954 = vunpack.c.h.s8.bf16 %v1122
        %v1955 = vunpack.c.h.s8.bf16 %v1123
        %v1956 = vunpack.c.h.s8.bf16 %v1124
        %v1957 = vunpack.c.h.s8.bf16 %v1125
        %v1958 = vunpack.c.h.s8.bf16 %v1126
        %v1959 = vunpack.c.h.s8.bf16 %v1127
        %v1960 = vunpack.c.h.s8.bf16 %v1128
        %v1961 = vunpack.c.l.s8.bf16 %v1129
        %v1962 = vunpack.c.l.s8.bf16 %v1130
        %v1963 = vunpack.c.l.s8.bf16 %v1131
        %v1964 = vunpack.c.l.s8.bf16 %v1132
        %v1965 = vunpack.c.l.s8.bf16 %v1133
        %v1966 = vunpack.c.l.s8.bf16 %v1134
        %v1967 = vunpack.c.l.s8.bf16 %v1135
        %v1968 = vunpack.c.l.s8.bf16 %v1136
        %v1969 = vunpack.c.l.s8.bf16 %v1137
        %v1970 = vunpack.c.l.s8.bf16 %v1138
        %v1971 = vunpack.c.l.s8.bf16 %v1139
        %v1972 = vunpack.c.l.s8.bf16 %v1140
        %v1973 = vunpack.c.l.s8.bf16 %v1141
        %v1974 = vunpack.c.l.s8.bf16 %v1142
        %v1975 = vunpack.c.l.s8.bf16 %v1143
        %v1976 = vunpack.c.l.s8.bf16 %v1144
        %v1977 = vunpack.c.h.s8.bf16 %v1129
        %v1978 = vunpack.c.h.s8.bf16 %v1130
        %v1979 = vunpack.c.h.s8.bf16 %v1131
        %v1980 = vunpack.c.h.s8.bf16 %v1132
        %v1981 = vunpack.c.h.s8.bf16 %v1133
        %v1982 = vunpack.c.h.s8.bf16 %v1134
        %v1983 = vunpack.c.h.s8.bf16 %v1135
        %v1984 = vunpack.c.h.s8.bf16 %v1136
        %v1985 = vunpack.c.h.s8.bf16 %v1137
        %v1986 = vunpack.c.h.s8.bf16 %v1138
        %v1987 = vunpack.c.h.s8.bf16 %v1139
        %v1988 = vunpack.c.h.s8.bf16 %v1140
        %v1989 = vunpack.c.h.s8.bf16 %v1141
        %v1990 = vunpack.c.h.s8.bf16 %v1142
        %v1991 = vunpack.c.h.s8.bf16 %v1143
        %v1992 = vunpack.c.h.s8.bf16 %v1144
        %v1993 = vunpack.c.l.s8.bf16 %v1145
        %v1994 = vunpack.c.l.s8.bf16 %v1146
        %v1995 = vunpack.c.l.s8.bf16 %v1147
        %v1996 = vunpack.c.l.s8.bf16 %v1148
        %v1997 = vunpack.c.l.s8.bf16 %v1149
        %v1998 = vunpack.c.l.s8.bf16 %v1150
        %v1999 = vunpack.c.l.s8.bf16 %v1151
        %v2000 = vunpack.c.l.s8.bf16 %v1152
        %v2001 = vunpack.c.l.s8.bf16 %v1153
        %v2002 = vunpack.c.l.s8.bf16 %v1154
        %v2003 = vunpack.c.l.s8.bf16 %v1155
        %v2004 = vunpack.c.l.s8.bf16 %v1156
        %v2005 = vunpack.c.l.s8.bf16 %v1157
        %v2006 = vunpack.c.l.s8.bf16 %v1158
        %v2007 = vunpack.c.l.s8.bf16 %v1159
        %v2008 = vunpack.c.l.s8.bf16 %v1160
        %v2009 = vunpack.c.h.s8.bf16 %v1145
        %v2010 = vunpack.c.h.s8.bf16 %v1146
        %v2011 = vunpack.c.h.s8.bf16 %v1147
        %v2012 = vunpack.c.h.s8.bf16 %v1148
        %v2013 = vunpack.c.h.s8.bf16 %v1149
        %v2014 = vunpack.c.h.s8.bf16 %v1150
        %v2015 = vunpack.c.h.s8.bf16 %v1151
        %v2016 = vunpack.c.h.s8.bf16 %v1152
        %v2017 = vunpack.c.h.s8.bf16 %v1153
        %v2018 = vunpack.c.h.s8.bf16 %v1154
        %v2019 = vunpack.c.h.s8.bf16 %v1155
        %v2020 = vunpack.c.h.s8.bf16 %v1156
        %v2021 = vunpack.c.h.s8.bf16 %v1157
        %v2022 = vunpack.c.h.s8.bf16 %v1158
        %v2023 = vunpack.c.h.s8.bf16 %v1159
        %v2024 = vunpack.c.h.s8.bf16 %v1160
        %v2025 = vunpack.c.l.s8.bf16 %v1161
        %v2026 = vunpack.c.l.s8.bf16 %v1162
        %v2027 = vunpack.c.l.s8.bf16 %v1163
        %v2028 = vunpack.c.l.s8.bf16 %v1164
        %v2029 = vunpack.c.l.s8.bf16 %v1165
        %v2030 = vunpack.c.l.s8.bf16 %v1166
        %v2031 = vunpack.c.l.s8.bf16 %v1167
        %v2032 = vunpack.c.l.s8.bf16 %v1168
        %v2033 = vunpack.c.l.s8.bf16 %v1169
        %v2034 = vunpack.c.l.s8.bf16 %v1170
        %v2035 = vunpack.c.l.s8.bf16 %v1171
        %v2036 = vunpack.c.l.s8.bf16 %v1172
        %v2037 = vunpack.c.l.s8.bf16 %v1173
        %v2038 = vunpack.c.l.s8.bf16 %v1174
        %v2039 = vunpack.c.l.s8.bf16 %v1175
        %v2040 = vunpack.c.l.s8.bf16 %v1176
        %v2041 = vunpack.c.h.s8.bf16 %v1161
        %v2042 = vunpack.c.h.s8.bf16 %v1162
        %v2043 = vunpack.c.h.s8.bf16 %v1163
        %v2044 = vunpack.c.h.s8.bf16 %v1164
        %v2045 = vunpack.c.h.s8.bf16 %v1165
        %v2046 = vunpack.c.h.s8.bf16 %v1166
        %v2047 = vunpack.c.h.s8.bf16 %v1167
        %v2048 = vunpack.c.h.s8.bf16 %v1168
        %v2049 = vunpack.c.h.s8.bf16 %v1169
        %v2050 = vunpack.c.h.s8.bf16 %v1170
        %v2051 = vunpack.c.h.s8.bf16 %v1171
        %v2052 = vunpack.c.h.s8.bf16 %v1172
        %v2053 = vunpack.c.h.s8.bf16 %v1173
        %v2054 = vunpack.c.h.s8.bf16 %v1174
        %v2055 = vunpack.c.h.s8.bf16 %v1175
        %v2056 = vunpack.c.h.s8.bf16 %v1176
        %v2057 = vunpack.c.l.s8.bf16 %v1177
        %v2058 = vunpack.c.l.s8.bf16 %v1178
        %v2059 = vunpack.c.l.s8.bf16 %v1179
        %v2060 = vunpack.c.l.s8.bf16 %v1180
        %v2061 = vunpack.c.l.s8.bf16 %v1181
        %v2062 = vunpack.c.l.s8.bf16 %v1182
        %v2063 = vunpack.c.l.s8.bf16 %v1183
        %v2064 = vunpack.c.l.s8.bf16 %v1184
        %v2065 = vunpack.c.l.s8.bf16 %v1185
        %v2066 = vunpack.c.l.s8.bf16 %v1186
        %v2067 = vunpack.c.l.s8.bf16 %v1187
        %v2068 = vunpack.c.l.s8.bf16 %v1188
        %v2069 = vunpack.c.l.s8.bf16 %v1189
        %v2070 = vunpack.c.l.s8.bf16 %v1190
        %v2071 = vunpack.c.l.s8.bf16 %v1191
        %v2072 = vunpack.c.l.s8.bf16 %v1192
        %v2073 = vunpack.c.h.s8.bf16 %v1177
        %v2074 = vunpack.c.h.s8.bf16 %v1178
        %v2075 = vunpack.c.h.s8.bf16 %v1179
        %v2076 = vunpack.c.h.s8.bf16 %v1180
        %v2077 = vunpack.c.h.s8.bf16 %v1181
        %v2078 = vunpack.c.h.s8.bf16 %v1182
        %v2079 = vunpack.c.h.s8.bf16 %v1183
        %v2080 = vunpack.c.h.s8.bf16 %v1184
        %v2081 = vunpack.c.h.s8.bf16 %v1185
        %v2082 = vunpack.c.h.s8.bf16 %v1186
        %v2083 = vunpack.c.h.s8.bf16 %v1187
        %v2084 = vunpack.c.h.s8.bf16 %v1188
        %v2085 = vunpack.c.h.s8.bf16 %v1189
        %v2086 = vunpack.c.h.s8.bf16 %v1190
        %v2087 = vunpack.c.h.s8.bf16 %v1191
        %v2088 = vunpack.c.h.s8.bf16 %v1192
        %v2089 = vunpack.c.l.s8.bf16 %v1193
        %v2090 = vunpack.c.l.s8.bf16 %v1194
        %v2091 = vunpack.c.l.s8.bf16 %v1195
        %v2092 = vunpack.c.l.s8.bf16 %v1196
        %v2093 = vunpack.c.l.s8.bf16 %v1197
        %v2094 = vunpack.c.l.s8.bf16 %v1198
        %v2095 = vunpack.c.l.s8.bf16 %v1199
        %v2096 = vunpack.c.l.s8.bf16 %v1200
        %v2097 = vunpack.c.l.s8.bf16 %v1201
        %v2098 = vunpack.c.l.s8.bf16 %v1202
        %v2099 = vunpack.c.l.s8.bf16 %v1203
        %v2100 = vunpack.c.l.s8.bf16 %v1204
        %v2101 = vunpack.c.l.s8.bf16 %v1205
        %v2102 = vunpack.c.l.s8.bf16 %v1206
        %v2103 = vunpack.c.l.s8.bf16 %v1207
        %v2104 = vunpack.c.l.s8.bf16 %v1208
        %v2105 = vunpack.c.h.s8.bf16 %v1193
        %v2106 = vunpack.c.h.s8.bf16 %v1194
        %v2107 = vunpack.c.h.s8.bf16 %v1195
        %v2108 = vunpack.c.h.s8.bf16 %v1196
        %v2109 = vunpack.c.h.s8.bf16 %v1197
        %v2110 = vunpack.c.h.s8.bf16 %v1198
        %v2111 = vunpack.c.h.s8.bf16 %v1199
        %v2112 = vunpack.c.h.s8.bf16 %v1200
        %v2113 = vunpack.c.h.s8.bf16 %v1201
        %v2114 = vunpack.c.h.s8.bf16 %v1202
        %v2115 = vunpack.c.h.s8.bf16 %v1203
        %v2116 = vunpack.c.h.s8.bf16 %v1204
        %v2117 = vunpack.c.h.s8.bf16 %v1205
        %v2118 = vunpack.c.h.s8.bf16 %v1206
        %v2119 = vunpack.c.h.s8.bf16 %v1207
        %v2120 = vunpack.c.h.s8.bf16 %v1208
        %v2121 = vunpack.c.l.s8.bf16 %v1209
        %v2122 = vunpack.c.l.s8.bf16 %v1210
        %v2123 = vunpack.c.l.s8.bf16 %v1211
        %v2124 = vunpack.c.l.s8.bf16 %v1212
        %v2125 = vunpack.c.l.s8.bf16 %v1213
        %v2126 = vunpack.c.l.s8.bf16 %v1214
        %v2127 = vunpack.c.l.s8.bf16 %v1215
        %v2128 = vunpack.c.l.s8.bf16 %v1216
        %v2129 = vunpack.c.l.s8.bf16 %v1217
        %v2130 = vunpack.c.l.s8.bf16 %v1218
        %v2131 = vunpack.c.l.s8.bf16 %v1219
        %v2132 = vunpack.c.l.s8.bf16 %v1220
        %v2133 = vunpack.c.l.s8.bf16 %v1221
        %v2134 = vunpack.c.l.s8.bf16 %v1222
        %v2135 = vunpack.c.l.s8.bf16 %v1223
        %v2136 = vunpack.c.l.s8.bf16 %v1224
        %v2137 = vunpack.c.h.s8.bf16 %v1209
        %v2138 = vunpack.c.h.s8.bf16 %v1210
        %v2139 = vunpack.c.h.s8.bf16 %v1211
        %v2140 = vunpack.c.h.s8.bf16 %v1212
        %v2141 = vunpack.c.h.s8.bf16 %v1213
        %v2142 = vunpack.c.h.s8.bf16 %v1214
        %v2143 = vunpack.c.h.s8.bf16 %v1215
        %v2144 = vunpack.c.h.s8.bf16 %v1216
        %v2145 = vunpack.c.h.s8.bf16 %v1217
        %v2146 = vunpack.c.h.s8.bf16 %v1218
        %v2147 = vunpack.c.h.s8.bf16 %v1219
        %v2148 = vunpack.c.h.s8.bf16 %v1220
        %v2149 = vunpack.c.h.s8.bf16 %v1221
        %v2150 = vunpack.c.h.s8.bf16 %v1222
        %v2151 = vunpack.c.h.s8.bf16 %v1223
        %v2152 = vunpack.c.h.s8.bf16 %v1224
        %v2153 = vunpack.c.l.s8.bf16 %v1225
        %v2154 = vunpack.c.l.s8.bf16 %v1226
        %v2155 = vunpack.c.l.s8.bf16 %v1227
        %v2156 = vunpack.c.l.s8.bf16 %v1228
        %v2157 = vunpack.c.l.s8.bf16 %v1229
        %v2158 = vunpack.c.l.s8.bf16 %v1230
        %v2159 = vunpack.c.l.s8.bf16 %v1231
        %v2160 = vunpack.c.l.s8.bf16 %v1232
        %v2161 = vunpack.c.l.s8.bf16 %v1233
        %v2162 = vunpack.c.l.s8.bf16 %v1234
        %v2163 = vunpack.c.l.s8.bf16 %v1235
        %v2164 = vunpack.c.l.s8.bf16 %v1236
        %v2165 = vunpack.c.l.s8.bf16 %v1237
        %v2166 = vunpack.c.l.s8.bf16 %v1238
        %v2167 = vunpack.c.l.s8.bf16 %v1239
        %v2168 = vunpack.c.l.s8.bf16 %v1240
        %v2169 = vunpack.c.h.s8.bf16 %v1225
        %v2170 = vunpack.c.h.s8.bf16 %v1226
        %v2171 = vunpack.c.h.s8.bf16 %v1227
        %v2172 = vunpack.c.h.s8.bf16 %v1228
        %v2173 = vunpack.c.h.s8.bf16 %v1229
        %v2174 = vunpack.c.h.s8.bf16 %v1230
        %v2175 = vunpack.c.h.s8.bf16 %v1231
        %v2176 = vunpack.c.h.s8.bf16 %v1232
        %v2177 = vunpack.c.h.s8.bf16 %v1233
        %v2178 = vunpack.c.h.s8.bf16 %v1234
        %v2179 = vunpack.c.h.s8.bf16 %v1235
        %v2180 = vunpack.c.h.s8.bf16 %v1236
        %v2181 = vunpack.c.h.s8.bf16 %v1237
        %v2182 = vunpack.c.h.s8.bf16 %v1238
        %v2183 = vunpack.c.h.s8.bf16 %v1239
        %v2184 = vunpack.c.h.s8.bf16 %v1240
        %v2185 = vunpack.c.l.s8.bf16 %v1241
        %v2186 = vunpack.c.l.s8.bf16 %v1242
        %v2187 = vunpack.c.l.s8.bf16 %v1243
        %v2188 = vunpack.c.l.s8.bf16 %v1244
        %v2189 = vunpack.c.l.s8.bf16 %v1245
        %v2190 = vunpack.c.l.s8.bf16 %v1246
        %v2191 = vunpack.c.l.s8.bf16 %v1247
        %v2192 = vunpack.c.l.s8.bf16 %v1248
        %v2193 = vunpack.c.l.s8.bf16 %v1249
        %v2194 = vunpack.c.l.s8.bf16 %v1250
        %v2195 = vunpack.c.l.s8.bf16 %v1251
        %v2196 = vunpack.c.l.s8.bf16 %v1252
        %v2197 = vunpack.c.l.s8.bf16 %v1253
        %v2198 = vunpack.c.l.s8.bf16 %v1254
        %v2199 = vunpack.c.l.s8.bf16 %v1255
        %v2200 = vunpack.c.l.s8.bf16 %v1256
        %v2201 = vunpack.c.h.s8.bf16 %v1241
        %v2202 = vunpack.c.h.s8.bf16 %v1242
        %v2203 = vunpack.c.h.s8.bf16 %v1243
        %v2204 = vunpack.c.h.s8.bf16 %v1244
        %v2205 = vunpack.c.h.s8.bf16 %v1245
        %v2206 = vunpack.c.h.s8.bf16 %v1246
        %v2207 = vunpack.c.h.s8.bf16 %v1247
        %v2208 = vunpack.c.h.s8.bf16 %v1248
        %v2209 = vunpack.c.h.s8.bf16 %v1249
        %v2210 = vunpack.c.h.s8.bf16 %v1250
        %v2211 = vunpack.c.h.s8.bf16 %v1251
        %v2212 = vunpack.c.h.s8.bf16 %v1252
        %v2213 = vunpack.c.h.s8.bf16 %v1253
        %v2214 = vunpack.c.h.s8.bf16 %v1254
        %v2215 = vunpack.c.h.s8.bf16 %v1255
        %v2216 = vunpack.c.h.s8.bf16 %v1256
        %v2217 = vunpack.c.l.s8.bf16 %v1257
        %v2218 = vunpack.c.l.s8.bf16 %v1258
        %v2219 = vunpack.c.l.s8.bf16 %v1259
        %v2220 = vunpack.c.l.s8.bf16 %v1260
        %v2221 = vunpack.c.l.s8.bf16 %v1261
        %v2222 = vunpack.c.l.s8.bf16 %v1262
        %v2223 = vunpack.c.l.s8.bf16 %v1263
        %v2224 = vunpack.c.l.s8.bf16 %v1264
        %v2225 = vunpack.c.l.s8.bf16 %v1265
        %v2226 = vunpack.c.l.s8.bf16 %v1266
        %v2227 = vunpack.c.l.s8.bf16 %v1267
        %v2228 = vunpack.c.l.s8.bf16 %v1268
        %v2229 = vunpack.c.l.s8.bf16 %v1269
        %v2230 = vunpack.c.l.s8.bf16 %v1270
        %v2231 = vunpack.c.l.s8.bf16 %v1271
        %v2232 = vunpack.c.l.s8.bf16 %v1272
        %v2233 = vunpack.c.h.s8.bf16 %v1257
        %v2234 = vunpack.c.h.s8.bf16 %v1258
        %v2235 = vunpack.c.h.s8.bf16 %v1259
        %v2236 = vunpack.c.h.s8.bf16 %v1260
        %v2237 = vunpack.c.h.s8.bf16 %v1261
        %v2238 = vunpack.c.h.s8.bf16 %v1262
        %v2239 = vunpack.c.h.s8.bf16 %v1263
        %v2240 = vunpack.c.h.s8.bf16 %v1264
        %v2241 = vunpack.c.h.s8.bf16 %v1265
        %v2242 = vunpack.c.h.s8.bf16 %v1266
        %v2243 = vunpack.c.h.s8.bf16 %v1267
        %v2244 = vunpack.c.h.s8.bf16 %v1268
        %v2245 = vunpack.c.h.s8.bf16 %v1269
        %v2246 = vunpack.c.h.s8.bf16 %v1270
        %v2247 = vunpack.c.h.s8.bf16 %v1271
        %v2248 = vunpack.c.h.s8.bf16 %v1272
        %v2249 = vunpack.c.l.s8.bf16 %v1273
        %v2250 = vunpack.c.l.s8.bf16 %v1274
        %v2251 = vunpack.c.l.s8.bf16 %v1275
        %v2252 = vunpack.c.l.s8.bf16 %v1276
        %v2253 = vunpack.c.l.s8.bf16 %v1277
        %v2254 = vunpack.c.l.s8.bf16 %v1278
        %v2255 = vunpack.c.l.s8.bf16 %v1279
        %v2256 = vunpack.c.l.s8.bf16 %v1280
        %v2257 = vunpack.c.l.s8.bf16 %v1281
        %v2258 = vunpack.c.l.s8.bf16 %v1282
        %v2259 = vunpack.c.l.s8.bf16 %v1283
        %v2260 = vunpack.c.l.s8.bf16 %v1284
        %v2261 = vunpack.c.l.s8.bf16 %v1285
        %v2262 = vunpack.c.l.s8.bf16 %v1286
        %v2263 = vunpack.c.l.s8.bf16 %v1287
        %v2264 = vunpack.c.l.s8.bf16 %v1288
        %v2265 = vunpack.c.h.s8.bf16 %v1273
        %v2266 = vunpack.c.h.s8.bf16 %v1274
        %v2267 = vunpack.c.h.s8.bf16 %v1275
        %v2268 = vunpack.c.h.s8.bf16 %v1276
        %v2269 = vunpack.c.h.s8.bf16 %v1277
        %v2270 = vunpack.c.h.s8.bf16 %v1278
        %v2271 = vunpack.c.h.s8.bf16 %v1279
        %v2272 = vunpack.c.h.s8.bf16 %v1280
        %v2273 = vunpack.c.h.s8.bf16 %v1281
        %v2274 = vunpack.c.h.s8.bf16 %v1282
        %v2275 = vunpack.c.h.s8.bf16 %v1283
        %v2276 = vunpack.c.h.s8.bf16 %v1284
        %v2277 = vunpack.c.h.s8.bf16 %v1285
        %v2278 = vunpack.c.h.s8.bf16 %v1286
        %v2279 = vunpack.c.h.s8.bf16 %v1287
        %v2280 = vunpack.c.h.s8.bf16 %v1288
        %v2281 = vunpack.c.l.s8.bf16 %v1289
        %v2282 = vunpack.c.l.s8.bf16 %v1290
        %v2283 = vunpack.c.l.s8.bf16 %v1291
        %v2284 = vunpack.c.l.s8.bf16 %v1292
        %v2285 = vunpack.c.l.s8.bf16 %v1293
        %v2286 = vunpack.c.l.s8.bf16 %v1294
        %v2287 = vunpack.c.l.s8.bf16 %v1295
        %v2288 = vunpack.c.l.s8.bf16 %v1296
        %v2289 = vunpack.c.l.s8.bf16 %v1297
        %v2290 = vunpack.c.l.s8.bf16 %v1298
        %v2291 = vunpack.c.l.s8.bf16 %v1299
        %v2292 = vunpack.c.l.s8.bf16 %v1300
        %v2293 = vunpack.c.l.s8.bf16 %v1301
        %v2294 = vunpack.c.l.s8.bf16 %v1302
        %v2295 = vunpack.c.l.s8.bf16 %v1303
        %v2296 = vunpack.c.l.s8.bf16 %v1304
        %v2297 = vunpack.c.h.s8.bf16 %v1289
        %v2298 = vunpack.c.h.s8.bf16 %v1290
        %v2299 = vunpack.c.h.s8.bf16 %v1291
        %v2300 = vunpack.c.h.s8.bf16 %v1292
        %v2301 = vunpack.c.h.s8.bf16 %v1293
        %v2302 = vunpack.c.h.s8.bf16 %v1294
        %v2303 = vunpack.c.h.s8.bf16 %v1295
        %v2304 = vunpack.c.h.s8.bf16 %v1296
        %v2305 = vunpack.c.h.s8.bf16 %v1297
        %v2306 = vunpack.c.h.s8.bf16 %v1298
        %v2307 = vunpack.c.h.s8.bf16 %v1299
        %v2308 = vunpack.c.h.s8.bf16 %v1300
        %v2309 = vunpack.c.h.s8.bf16 %v1301
        %v2310 = vunpack.c.h.s8.bf16 %v1302
        %v2311 = vunpack.c.h.s8.bf16 %v1303
        %v2312 = vunpack.c.h.s8.bf16 %v1304
        %v2313 = vunpack.c.l.s8.bf16 %v1305
        %v2314 = vunpack.c.l.s8.bf16 %v1306
        %v2315 = vunpack.c.l.s8.bf16 %v1307
        %v2316 = vunpack.c.l.s8.bf16 %v1308
        %v2317 = vunpack.c.l.s8.bf16 %v1309
        %v2318 = vunpack.c.l.s8.bf16 %v1310
        %v2319 = vunpack.c.l.s8.bf16 %v1311
        %v2320 = vunpack.c.l.s8.bf16 %v1312
        %v2321 = vunpack.c.l.s8.bf16 %v1313
        %v2322 = vunpack.c.l.s8.bf16 %v1314
        %v2323 = vunpack.c.l.s8.bf16 %v1315
        %v2324 = vunpack.c.l.s8.bf16 %v1316
        %v2325 = vunpack.c.l.s8.bf16 %v1317
        %v2326 = vunpack.c.l.s8.bf16 %v1318
        %v2327 = vunpack.c.l.s8.bf16 %v1319
        %v2328 = vunpack.c.l.s8.bf16 %v1320
        %v2329 = vunpack.c.h.s8.bf16 %v1305
        %v2330 = vunpack.c.h.s8.bf16 %v1306
        %v2331 = vunpack.c.h.s8.bf16 %v1307
        %v2332 = vunpack.c.h.s8.bf16 %v1308
        %v2333 = vunpack.c.h.s8.bf16 %v1309
        %v2334 = vunpack.c.h.s8.bf16 %v1310
        %v2335 = vunpack.c.h.s8.bf16 %v1311
        %v2336 = vunpack.c.h.s8.bf16 %v1312
        %v2337 = vunpack.c.h.s8.bf16 %v1313
        %v2338 = vunpack.c.h.s8.bf16 %v1314
        %v2339 = vunpack.c.h.s8.bf16 %v1315
        %v2340 = vunpack.c.h.s8.bf16 %v1316
        %v2341 = vunpack.c.h.s8.bf16 %v1317
        %v2342 = vunpack.c.h.s8.bf16 %v1318
        %v2343 = vunpack.c.h.s8.bf16 %v1319
        %v2344 = vunpack.c.h.s8.bf16 %v1320
        %v2349 = vunpack.c.l.b16 %v805
        %v2350 = vunpack.c.h.b16 %v805
        %v2351 = vunpack.c.l.b16 %v806
        %v2352 = vunpack.c.h.b16 %v806
        %v2353 = vunpack.c.l.b16 %v807
        %v2354 = vunpack.c.h.b16 %v807
        %v2355 = vunpack.c.l.b16 %v808
        %v2356 = vunpack.c.h.b16 %v808
        %v2357 = vpack.c.b16 %v2349, %v2349
        %v2358 = vpack.c.b16 %v2350, %v2350
        %v2359 = vpack.c.b16 %v2351, %v2351
        %v2360 = vpack.c.b16 %v2352, %v2352
        %v2361 = vpack.c.b16 %v2353, %v2353
        %v2362 = vpack.c.b16 %v2354, %v2354
        %v2363 = vpack.c.b16 %v2355, %v2355
        %v2364 = vpack.c.b16 %v2356, %v2356
        %2373 = vmatprep.subr.bf16.mxu0 %v1322
        %2374 = vmatpush1.bf16.msra.mxu0 %v1321
        %2375 = vmatprep.subr.bf16.mxu0 %v1338
        %2376 = vmatpush1.bf16.msra.mxu0 %v1337
        %2377 = vmatprep.subr.bf16.mxu0 %v1354
        %2378 = vmatpush1.bf16.msra.mxu0 %v1353
        %2379 = vmatprep.subr.bf16.mxu0 %v1370
        %2380 = vmatpush1.bf16.msra.mxu0 %v1369
        %2381 = vmatprep.subr.bf16.mxu0 %v1386
        %2382 = vmatpush1.bf16.msra.mxu0 %v1385
        %2383 = vmatprep.subr.bf16.mxu0 %v1402
        %2384 = vmatpush1.bf16.msra.mxu0 %v1401
        %2385 = vmatprep.subr.bf16.mxu0 %v1418
        %2386 = vmatpush1.bf16.msra.mxu0 %v1417
        %2387 = vmatprep.subr.bf16.mxu0 %v1434
        %2388 = vmatpush1.bf16.msra.mxu0 %v1433
        %2389 = vmatprep.subr.bf16.mxu0 %v1450
        %2390 = vmatpush1.bf16.msra.mxu0 %v1449
        %2391 = vmatprep.subr.bf16.mxu0 %v1466
        %2392 = vmatpush1.bf16.msra.mxu0 %v1465
        %2393 = vmatprep.subr.bf16.mxu0 %v1482
        %2394 = vmatpush1.bf16.msra.mxu0 %v1481
        %2395 = vmatprep.subr.bf16.mxu0 %v1498
        %2396 = vmatpush1.bf16.msra.mxu0 %v1497
        %2397 = vmatprep.subr.bf16.mxu0 %v1514
        %2398 = vmatpush1.bf16.msra.mxu0 %v1513
        %2399 = vmatprep.subr.bf16.mxu0 %v1530
        %2400 = vmatpush1.bf16.msra.mxu0 %v1529
        %2401 = vmatprep.subr.bf16.mxu0 %v1546
        %2402 = vmatpush1.bf16.msra.mxu0 %v1545
        %2403 = vmatprep.subr.bf16.mxu0 %v1562
        %2404 = vmatpush1.bf16.msra.mxu0 %v1561
        %2405 = vmatprep.mubr.bf16.mxu0 %v2358
        %2406 = vmatmul.mubr.bf16.gmra.mrb[0].mxu0 %v2357
        %v2407 = vpop.f32.mrb[0].mxu0
        %v2408 = vadd.f32 0.0, %v2407
        %v2409 = vpop.f32.mrb[0].mxu0
        %v2410 = vadd.f32 0.0, %v2409
        %v2411 = vpop.f32.mrb[0].mxu0
        %v2412 = vpop.f32.mrb[0].mxu0
        %2413 = vdwg.mxu0
        %2414 = vmatprep.subr.bf16.mxu0 %v1578
        %2415 = vmatpush1.bf16.msra.mxu0 %v1577
        %2416 = vmatprep.subr.bf16.mxu0 %v1594
        %2417 = vmatpush1.bf16.msra.mxu0 %v1593
        %2418 = vmatprep.subr.bf16.mxu0 %v1610
        %2419 = vmatpush1.bf16.msra.mxu0 %v1609
        %2420 = vmatprep.subr.bf16.mxu0 %v1626
        %2421 = vmatpush1.bf16.msra.mxu0 %v1625
        %2422 = vmatprep.subr.bf16.mxu0 %v1642
        %2423 = vmatpush1.bf16.msra.mxu0 %v1641
        %2424 = vmatprep.subr.bf16.mxu0 %v1658
        %2425 = vmatpush1.bf16.msra.mxu0 %v1657
        %2426 = vmatprep.subr.bf16.mxu0 %v1674
        %2427 = vmatpush1.bf16.msra.mxu0 %v1673
        %2428 = vmatprep.subr.bf16.mxu0 %v1690
        %2429 = vmatpush1.bf16.msra.mxu0 %v1689
        %2430 = vmatprep.subr.bf16.mxu0 %v1706
        %2431 = vmatpush1.bf16.msra.mxu0 %v1705
        %2432 = vmatprep.subr.bf16.mxu0 %v1722
        %2433 = vmatpush1.bf16.msra.mxu0 %v1721
        %2434 = vmatprep.subr.bf16.mxu0 %v1738
        %2435 = vmatpush1.bf16.msra.mxu0 %v1737
        %2436 = vmatprep.subr.bf16.mxu0 %v1754
        %2437 = vmatpush1.bf16.msra.mxu0 %v1753
        %2438 = vmatprep.subr.bf16.mxu0 %v1770
        %2439 = vmatpush1.bf16.msra.mxu0 %v1769
        %2440 = vmatprep.subr.bf16.mxu0 %v1786
        %2441 = vmatpush1.bf16.msra.mxu0 %v1785
        %2442 = vmatprep.subr.bf16.mxu0 %v1802
        %2443 = vmatpush1.bf16.msra.mxu0 %v1801
        %2444 = vmatprep.subr.bf16.mxu0 %v1818
        %2445 = vmatpush1.bf16.msra.mxu0 %v1817
        %2446 = vmatprep.mubr.bf16.mxu0 %v2360
        %2447 = vmatmul.mubr.bf16.gmra.mrb[0].mxu0 %v2359
        %v2448 = vpop.f32.mrb[0].mxu0
        %v2449 = vadd.f32 %v2408, %v2448
        %v2450 = vpop.f32.mrb[0].mxu0
        %v2451 = vadd.f32 %v2410, %v2450
        %v2452 = vpop.f32.mrb[0].mxu0
        %v2453 = vpop.f32.mrb[0].mxu0
        %2454 = vdwg.mxu0
        %2455 = vmatprep.subr.bf16.mxu0 %v1834
        %2456 = vmatpush1.bf16.msra.mxu0 %v1833
        %2457 = vmatprep.subr.bf16.mxu0 %v1850
        %2458 = vmatpush1.bf16.msra.mxu0 %v1849
        %2459 = vmatprep.subr.bf16.mxu0 %v1866
        %2460 = vmatpush1.bf16.msra.mxu0 %v1865
        %2461 = vmatprep.subr.bf16.mxu0 %v1882
        %2462 = vmatpush1.bf16.msra.mxu0 %v1881
        %2463 = vmatprep.subr.bf16.mxu0 %v1898
        %2464 = vmatpush1.bf16.msra.mxu0 %v1897
        %2465 = vmatprep.subr.bf16.mxu0 %v1914
        %2466 = vmatpush1.bf16.msra.mxu0 %v1913
        %2467 = vmatprep.subr.bf16.mxu0 %v1930
        %2468 = vmatpush1.bf16.msra.mxu0 %v1929
        %2469 = vmatprep.subr.bf16.mxu0 %v1946
        %2470 = vmatpush1.bf16.msra.mxu0 %v1945
        %2471 = vmatprep.subr.bf16.mxu0 %v1962
        %2472 = vmatpush1.bf16.msra.mxu0 %v1961
        %2473 = vmatprep.subr.bf16.mxu0 %v1978
        %2474 = vmatpush1.bf16.msra.mxu0 %v1977
        %2475 = vmatprep.subr.bf16.mxu0 %v1994
        %2476 = vmatpush1.bf16.msra.mxu0 %v1993
        %2477 = vmatprep.subr.bf16.mxu0 %v2010
        %2478 = vmatpush1.bf16.msra.mxu0 %v2009
        %2479 = vmatprep.subr.bf16.mxu0 %v2026
        %2480 = vmatpush1.bf16.msra.mxu0 %v2025
        %2481 = vmatprep.subr.bf16.mxu0 %v2042
        %2482 = vmatpush1.bf16.msra.mxu0 %v2041
        %2483 = vmatprep.subr.bf16.mxu0 %v2058
        %2484 = vmatpush1.bf16.msra.mxu0 %v2057
        %2485 = vmatprep.subr.bf16.mxu0 %v2074
        %2486 = vmatpush1.bf16.msra.mxu0 %v2073
        %2487 = vmatprep.mubr.bf16.mxu0 %v2362
        %2488 = vmatmul.mubr.bf16.gmra.mrb[0].mxu0 %v2361
        %v2489 = vpop.f32.mrb[0].mxu0
        %v2490 = vadd.f32 %v2449, %v2489
        %v2491 = vpop.f32.mrb[0].mxu0
        %v2492 = vadd.f32 %v2451, %v2491
        %v2493 = vpop.f32.mrb[0].mxu0
        %v2494 = vpop.f32.mrb[0].mxu0
        %2495 = vdwg.mxu0
        %2496 = vmatprep.subr.bf16.mxu0 %v2090
        %2497 = vmatpush1.bf16.msra.mxu0 %v2089
        %2498 = vmatprep.subr.bf16.mxu0 %v2106
        %2499 = vmatpush1.bf16.msra.mxu0 %v2105
        %2500 = vmatprep.subr.bf16.mxu0 %v2122
        %2501 = vmatpush1.bf16.msra.mxu0 %v2121
        %2502 = vmatprep.subr.bf16.mxu0 %v2138
        %2503 = vmatpush1.bf16.msra.mxu0 %v2137
        %2504 = vmatprep.subr.bf16.mxu0 %v2154
        %2505 = vmatpush1.bf16.msra.mxu0 %v2153
        %2506 = vmatprep.subr.bf16.mxu0 %v2170
        %2507 = vmatpush1.bf16.msra.mxu0 %v2169
        %2508 = vmatprep.subr.bf16.mxu0 %v2186
        %2509 = vmatpush1.bf16.msra.mxu0 %v2185
        %2510 = vmatprep.subr.bf16.mxu0 %v2202
        %2511 = vmatpush1.bf16.msra.mxu0 %v2201
        %2512 = vmatprep.subr.bf16.mxu0 %v2218
        %2513 = vmatpush1.bf16.msra.mxu0 %v2217
        %2514 = vmatprep.subr.bf16.mxu0 %v2234
        %2515 = vmatpush1.bf16.msra.mxu0 %v2233
        %2516 = vmatprep.subr.bf16.mxu0 %v2250
        %2517 = vmatpush1.bf16.msra.mxu0 %v2249
        %2518 = vmatprep.subr.bf16.mxu0 %v2266
        %2519 = vmatpush1.bf16.msra.mxu0 %v2265
        %2520 = vmatprep.subr.bf16.mxu0 %v2282
        %2521 = vmatpush1.bf16.msra.mxu0 %v2281
        %2522 = vmatprep.subr.bf16.mxu0 %v2298
        %2523 = vmatpush1.bf16.msra.mxu0 %v2297
        %2524 = vmatprep.subr.bf16.mxu0 %v2314
        %2525 = vmatpush1.bf16.msra.mxu0 %v2313
        %2526 = vmatprep.subr.bf16.mxu0 %v2330
        %2527 = vmatpush1.bf16.msra.mxu0 %v2329
        %2528 = vmatprep.mubr.bf16.mxu0 %v2364
        %2529 = vmatmul.mubr.bf16.gmra.mrb[0].mxu0 %v2363
        %v2530 = vpop.f32.mrb[0].mxu0
        %v2531 = vadd.f32 %v2490, %v2530
        %v2532 = vpop.f32.mrb[0].mxu0
        %v2533 = vadd.f32 %v2492, %v2532
        %v2534 = vpop.f32.mrb[0].mxu0
        %v2535 = vpop.f32.mrb[0].mxu0
        %2536 = vdwg.mxu0
        %2537 = vmatprep.subr.bf16.mxu0 %v1324
        %2538 = vmatpush1.bf16.msra.mxu0 %v1323
        %2539 = vmatprep.subr.bf16.mxu0 %v1340
        %2540 = vmatpush1.bf16.msra.mxu0 %v1339
        %2541 = vmatprep.subr.bf16.mxu0 %v1356
        %2542 = vmatpush1.bf16.msra.mxu0 %v1355
        %2543 = vmatprep.subr.bf16.mxu0 %v1372
        %2544 = vmatpush1.bf16.msra.mxu0 %v1371
        %2545 = vmatprep.subr.bf16.mxu0 %v1388
        %2546 = vmatpush1.bf16.msra.mxu0 %v1387
        %2547 = vmatprep.subr.bf16.mxu0 %v1404
        %2548 = vmatpush1.bf16.msra.mxu0 %v1403
        %2549 = vmatprep.subr.bf16.mxu0 %v1420
        %2550 = vmatpush1.bf16.msra.mxu0 %v1419
        %2551 = vmatprep.subr.bf16.mxu0 %v1436
        %2552 = vmatpush1.bf16.msra.mxu0 %v1435
        %2553 = vmatprep.subr.bf16.mxu0 %v1452
        %2554 = vmatpush1.bf16.msra.mxu0 %v1451
        %2555 = vmatprep.subr.bf16.mxu0 %v1468
        %2556 = vmatpush1.bf16.msra.mxu0 %v1467
        %2557 = vmatprep.subr.bf16.mxu0 %v1484
        %2558 = vmatpush1.bf16.msra.mxu0 %v1483
        %2559 = vmatprep.subr.bf16.mxu0 %v1500
        %2560 = vmatpush1.bf16.msra.mxu0 %v1499
        %2561 = vmatprep.subr.bf16.mxu0 %v1516
        %2562 = vmatpush1.bf16.msra.mxu0 %v1515
        %2563 = vmatprep.subr.bf16.mxu0 %v1532
        %2564 = vmatpush1.bf16.msra.mxu0 %v1531
        %2565 = vmatprep.subr.bf16.mxu0 %v1548
        %2566 = vmatpush1.bf16.msra.mxu0 %v1547
        %2567 = vmatprep.subr.bf16.mxu0 %v1564
        %2568 = vmatpush1.bf16.msra.mxu0 %v1563
        %2569 = vmatprep.mubr.bf16.mxu0 %v2358
        %2570 = vmatmul.mubr.bf16.gmra.mrb[0].mxu0 %v2357
        %v2571 = vpop.f32.mrb[0].mxu0
        %v2572 = vadd.f32 0.0, %v2571
        %v2573 = vpop.f32.mrb[0].mxu0
        %v2574 = vadd.f32 0.0, %v2573
        %v2575 = vpop.f32.mrb[0].mxu0
        %v2576 = vpop.f32.mrb[0].mxu0
        %2577 = vdwg.mxu0
        %2578 = vmatprep.subr.bf16.mxu0 %v1580
        %2579 = vmatpush1.bf16.msra.mxu0 %v1579
        %2580 = vmatprep.subr.bf16.mxu0 %v1596
        %2581 = vmatpush1.bf16.msra.mxu0 %v1595
        %2582 = vmatprep.subr.bf16.mxu0 %v1612
        %2583 = vmatpush1.bf16.msra.mxu0 %v1611
        %2584 = vmatprep.subr.bf16.mxu0 %v1628
        %2585 = vmatpush1.bf16.msra.mxu0 %v1627
        %2586 = vmatprep.subr.bf16.mxu0 %v1644
        %2587 = vmatpush1.bf16.msra.mxu0 %v1643
        %2588 = vmatprep.subr.bf16.mxu0 %v1660
        %2589 = vmatpush1.bf16.msra.mxu0 %v1659
        %2590 = vmatprep.subr.bf16.mxu0 %v1676
        %2591 = vmatpush1.bf16.msra.mxu0 %v1675
        %2592 = vmatprep.subr.bf16.mxu0 %v1692
        %2593 = vmatpush1.bf16.msra.mxu0 %v1691
        %2594 = vmatprep.subr.bf16.mxu0 %v1708
        %2595 = vmatpush1.bf16.msra.mxu0 %v1707
        %2596 = vmatprep.subr.bf16.mxu0 %v1724
        %2597 = vmatpush1.bf16.msra.mxu0 %v1723
        %2598 = vmatprep.subr.bf16.mxu0 %v1740
        %2599 = vmatpush1.bf16.msra.mxu0 %v1739
        %2600 = vmatprep.subr.bf16.mxu0 %v1756
        %2601 = vmatpush1.bf16.msra.mxu0 %v1755
        %2602 = vmatprep.subr.bf16.mxu0 %v1772
        %2603 = vmatpush1.bf16.msra.mxu0 %v1771
        %2604 = vmatprep.subr.bf16.mxu0 %v1788
        %2605 = vmatpush1.bf16.msra.mxu0 %v1787
        %2606 = vmatprep.subr.bf16.mxu0 %v1804
        %2607 = vmatpush1.bf16.msra.mxu0 %v1803
        %2608 = vmatprep.subr.bf16.mxu0 %v1820
        %2609 = vmatpush1.bf16.msra.mxu0 %v1819
        %2610 = vmatprep.mubr.bf16.mxu0 %v2360
        %2611 = vmatmul.mubr.bf16.gmra.mrb[0].mxu0 %v2359
        %v2612 = vpop.f32.mrb[0].mxu0
        %v2613 = vadd.f32 %v2572, %v2612
        %v2614 = vpop.f32.mrb[0].mxu0
        %v2615 = vadd.f32 %v2574, %v2614
        %v2616 = vpop.f32.mrb[0].mxu0
        %v2617 = vpop.f32.mrb[0].mxu0
        %2618 = vdwg.mxu0
        %2619 = vmatprep.subr.bf16.mxu0 %v1836
        %2620 = vmatpush1.bf16.msra.mxu0 %v1835
        %2621 = vmatprep.subr.bf16.mxu0 %v1852
        %2622 = vmatpush1.bf16.msra.mxu0 %v1851
        %2623 = vmatprep.subr.bf16.mxu0 %v1868
        %2624 = vmatpush1.bf16.msra.mxu0 %v1867
        %2625 = vmatprep.subr.bf16.mxu0 %v1884
        %2626 = vmatpush1.bf16.msra.mxu0 %v1883
        %2627 = vmatprep.subr.bf16.mxu0 %v1900
        %2628 = vmatpush1.bf16.msra.mxu0 %v1899
        %2629 = vmatprep.subr.bf16.mxu0 %v1916
        %2630 = vmatpush1.bf16.msra.mxu0 %v1915
        %2631 = vmatprep.subr.bf16.mxu0 %v1932
        %2632 = vmatpush1.bf16.msra.mxu0 %v1931
        %2633 = vmatprep.subr.bf16.mxu0 %v1948
        %2634 = vmatpush1.bf16.msra.mxu0 %v1947
        %2635 = vmatprep.subr.bf16.mxu0 %v1964
        %2636 = vmatpush1.bf16.msra.mxu0 %v1963
        %2637 = vmatprep.subr.bf16.mxu0 %v1980
        %2638 = vmatpush1.bf16.msra.mxu0 %v1979
        %2639 = vmatprep.subr.bf16.mxu0 %v1996
        %2640 = vmatpush1.bf16.msra.mxu0 %v1995
        %2641 = vmatprep.subr.bf16.mxu0 %v2012
        %2642 = vmatpush1.bf16.msra.mxu0 %v2011
        %2643 = vmatprep.subr.bf16.mxu0 %v2028
        %2644 = vmatpush1.bf16.msra.mxu0 %v2027
        %2645 = vmatprep.subr.bf16.mxu0 %v2044
        %2646 = vmatpush1.bf16.msra.mxu0 %v2043
        %2647 = vmatprep.subr.bf16.mxu0 %v2060
        %2648 = vmatpush1.bf16.msra.mxu0 %v2059
        %2649 = vmatprep.subr.bf16.mxu0 %v2076
        %2650 = vmatpush1.bf16.msra.mxu0 %v2075
        %2651 = vmatprep.mubr.bf16.mxu0 %v2362
        %2652 = vmatmul.mubr.bf16.gmra.mrb[0].mxu0 %v2361
        %v2653 = vpop.f32.mrb[0].mxu0
        %v2654 = vadd.f32 %v2613, %v2653
        %v2655 = vpop.f32.mrb[0].mxu0
        %v2656 = vadd.f32 %v2615, %v2655
        %v2657 = vpop.f32.mrb[0].mxu0
        %v2658 = vpop.f32.mrb[0].mxu0
        %2659 = vdwg.mxu0
        %2660 = vmatprep.subr.bf16.mxu0 %v2092
        %2661 = vmatpush1.bf16.msra.mxu0 %v2091
        %2662 = vmatprep.subr.bf16.mxu0 %v2108
        %2663 = vmatpush1.bf16.msra.mxu0 %v2107
        %2664 = vmatprep.subr.bf16.mxu0 %v2124
        %2665 = vmatpush1.bf16.msra.mxu0 %v2123
        %2666 = vmatprep.subr.bf16.mxu0 %v2140
        %2667 = vmatpush1.bf16.msra.mxu0 %v2139
        %2668 = vmatprep.subr.bf16.mxu0 %v2156
        %2669 = vmatpush1.bf16.msra.mxu0 %v2155
        %2670 = vmatprep.subr.bf16.mxu0 %v2172
        %2671 = vmatpush1.bf16.msra.mxu0 %v2171
        %2672 = vmatprep.subr.bf16.mxu0 %v2188
        %2673 = vmatpush1.bf16.msra.mxu0 %v2187
        %2674 = vmatprep.subr.bf16.mxu0 %v2204
        %2675 = vmatpush1.bf16.msra.mxu0 %v2203
        %2676 = vmatprep.subr.bf16.mxu0 %v2220
        %2677 = vmatpush1.bf16.msra.mxu0 %v2219
        %2678 = vmatprep.subr.bf16.mxu0 %v2236
        %2679 = vmatpush1.bf16.msra.mxu0 %v2235
        %2680 = vmatprep.subr.bf16.mxu0 %v2252
        %2681 = vmatpush1.bf16.msra.mxu0 %v2251
        %2682 = vmatprep.subr.bf16.mxu0 %v2268
        %2683 = vmatpush1.bf16.msra.mxu0 %v2267
        %2684 = vmatprep.subr.bf16.mxu0 %v2284
        %2685 = vmatpush1.bf16.msra.mxu0 %v2283
        %2686 = vmatprep.subr.bf16.mxu0 %v2300
        %2687 = vmatpush1.bf16.msra.mxu0 %v2299
        %2688 = vmatprep.subr.bf16.mxu0 %v2316
        %2689 = vmatpush1.bf16.msra.mxu0 %v2315
        %2690 = vmatprep.subr.bf16.mxu0 %v2332
        %2691 = vmatpush1.bf16.msra.mxu0 %v2331
        %2692 = vmatprep.mubr.bf16.mxu0 %v2364
        %2693 = vmatmul.mubr.bf16.gmra.mrb[0].mxu0 %v2363
        %v2694 = vpop.f32.mrb[0].mxu0
        %v2695 = vadd.f32 %v2654, %v2694
        %v2696 = vpop.f32.mrb[0].mxu0
        %v2697 = vadd.f32 %v2656, %v2696
        %v2698 = vpop.f32.mrb[0].mxu0
        %v2699 = vpop.f32.mrb[0].mxu0
        %2700 = vdwg.mxu0
        %2701 = vmatprep.subr.bf16.mxu0 %v1326
        %2702 = vmatpush1.bf16.msra.mxu0 %v1325
        %2703 = vmatprep.subr.bf16.mxu0 %v1342
        %2704 = vmatpush1.bf16.msra.mxu0 %v1341
        %2705 = vmatprep.subr.bf16.mxu0 %v1358
        %2706 = vmatpush1.bf16.msra.mxu0 %v1357
        %2707 = vmatprep.subr.bf16.mxu0 %v1374
        %2708 = vmatpush1.bf16.msra.mxu0 %v1373
        %2709 = vmatprep.subr.bf16.mxu0 %v1390
        %2710 = vmatpush1.bf16.msra.mxu0 %v1389
        %2711 = vmatprep.subr.bf16.mxu0 %v1406
        %2712 = vmatpush1.bf16.msra.mxu0 %v1405
        %2713 = vmatprep.subr.bf16.mxu0 %v1422
        %2714 = vmatpush1.bf16.msra.mxu0 %v1421
        %2715 = vmatprep.subr.bf16.mxu0 %v1438
        %2716 = vmatpush1.bf16.msra.mxu0 %v1437
        %2717 = vmatprep.subr.bf16.mxu0 %v1454
        %2718 = vmatpush1.bf16.msra.mxu0 %v1453
        %2719 = vmatprep.subr.bf16.mxu0 %v1470
        %2720 = vmatpush1.bf16.msra.mxu0 %v1469
        %2721 = vmatprep.subr.bf16.mxu0 %v1486
        %2722 = vmatpush1.bf16.msra.mxu0 %v1485
        %2723 = vmatprep.subr.bf16.mxu0 %v1502
        %2724 = vmatpush1.bf16.msra.mxu0 %v1501
        %2725 = vmatprep.subr.bf16.mxu0 %v1518
        %2726 = vmatpush1.bf16.msra.mxu0 %v1517
        %2727 = vmatprep.subr.bf16.mxu0 %v1534
        %2728 = vmatpush1.bf16.msra.mxu0 %v1533
        %2729 = vmatprep.subr.bf16.mxu0 %v1550
        %2730 = vmatpush1.bf16.msra.mxu0 %v1549
        %2731 = vmatprep.subr.bf16.mxu0 %v1566
        %2732 = vmatpush1.bf16.msra.mxu0 %v1565
        %2733 = vmatprep.mubr.bf16.mxu0 %v2358
        %2734 = vmatmul.mubr.bf16.gmra.mrb[0].mxu0 %v2357
        %v2735 = vpop.f32.mrb[0].mxu0
        %v2736 = vadd.f32 0.0, %v2735
        %v2737 = vpop.f32.mrb[0].mxu0
        %v2738 = vadd.f32 0.0, %v2737
        %v2739 = vpop.f32.mrb[0].mxu0
        %v2740 = vpop.f32.mrb[0].mxu0
        %2741 = vdwg.mxu0
        %2742 = vmatprep.subr.bf16.mxu0 %v1582
        %2743 = vmatpush1.bf16.msra.mxu0 %v1581
        %2744 = vmatprep.subr.bf16.mxu0 %v1598
        %2745 = vmatpush1.bf16.msra.mxu0 %v1597
        %2746 = vmatprep.subr.bf16.mxu0 %v1614
        %2747 = vmatpush1.bf16.msra.mxu0 %v1613
        %2748 = vmatprep.subr.bf16.mxu0 %v1630
        %2749 = vmatpush1.bf16.msra.mxu0 %v1629
        %2750 = vmatprep.subr.bf16.mxu0 %v1646
        %2751 = vmatpush1.bf16.msra.mxu0 %v1645
        %2752 = vmatprep.subr.bf16.mxu0 %v1662
        %2753 = vmatpush1.bf16.msra.mxu0 %v1661
        %2754 = vmatprep.subr.bf16.mxu0 %v1678
        %2755 = vmatpush1.bf16.msra.mxu0 %v1677
        %2756 = vmatprep.subr.bf16.mxu0 %v1694
        %2757 = vmatpush1.bf16.msra.mxu0 %v1693
        %2758 = vmatprep.subr.bf16.mxu0 %v1710
        %2759 = vmatpush1.bf16.msra.mxu0 %v1709
        %2760 = vmatprep.subr.bf16.mxu0 %v1726
        %2761 = vmatpush1.bf16.msra.mxu0 %v1725
        %2762 = vmatprep.subr.bf16.mxu0 %v1742
        %2763 = vmatpush1.bf16.msra.mxu0 %v1741
        %2764 = vmatprep.subr.bf16.mxu0 %v1758
        %2765 = vmatpush1.bf16.msra.mxu0 %v1757
        %2766 = vmatprep.subr.bf16.mxu0 %v1774
        %2767 = vmatpush1.bf16.msra.mxu0 %v1773
        %2768 = vmatprep.subr.bf16.mxu0 %v1790
        %2769 = vmatpush1.bf16.msra.mxu0 %v1789
        %2770 = vmatprep.subr.bf16.mxu0 %v1806
        %2771 = vmatpush1.bf16.msra.mxu0 %v1805
        %2772 = vmatprep.subr.bf16.mxu0 %v1822
        %2773 = vmatpush1.bf16.msra.mxu0 %v1821
        %2774 = vmatprep.mubr.bf16.mxu0 %v2360
        %2775 = vmatmul.mubr.bf16.gmra.mrb[0].mxu0 %v2359
        %v2776 = vpop.f32.mrb[0].mxu0
        %v2777 = vadd.f32 %v2736, %v2776
        %v2778 = vpop.f32.mrb[0].mxu0
        %v2779 = vadd.f32 %v2738, %v2778
        %v2780 = vpop.f32.mrb[0].mxu0
        %v2781 = vpop.f32.mrb[0].mxu0
        %2782 = vdwg.mxu0
        %2783 = vmatprep.subr.bf16.mxu0 %v1838
        %2784 = vmatpush1.bf16.msra.mxu0 %v1837
        %2785 = vmatprep.subr.bf16.mxu0 %v1854
        %2786 = vmatpush1.bf16.msra.mxu0 %v1853
        %2787 = vmatprep.subr.bf16.mxu0 %v1870
        %2788 = vmatpush1.bf16.msra.mxu0 %v1869
        %2789 = vmatprep.subr.bf16.mxu0 %v1886
        %2790 = vmatpush1.bf16.msra.mxu0 %v1885
        %2791 = vmatprep.subr.bf16.mxu0 %v1902
        %2792 = vmatpush1.bf16.msra.mxu0 %v1901
        %2793 = vmatprep.subr.bf16.mxu0 %v1918
        %2794 = vmatpush1.bf16.msra.mxu0 %v1917
        %2795 = vmatprep.subr.bf16.mxu0 %v1934
        %2796 = vmatpush1.bf16.msra.mxu0 %v1933
        %2797 = vmatprep.subr.bf16.mxu0 %v1950
        %2798 = vmatpush1.bf16.msra.mxu0 %v1949
        %2799 = vmatprep.subr.bf16.mxu0 %v1966
        %2800 = vmatpush1.bf16.msra.mxu0 %v1965
        %2801 = vmatprep.subr.bf16.mxu0 %v1982
        %2802 = vmatpush1.bf16.msra.mxu0 %v1981
        %2803 = vmatprep.subr.bf16.mxu0 %v1998
        %2804 = vmatpush1.bf16.msra.mxu0 %v1997
        %2805 = vmatprep.subr.bf16.mxu0 %v2014
        %2806 = vmatpush1.bf16.msra.mxu0 %v2013
        %2807 = vmatprep.subr.bf16.mxu0 %v2030
        %2808 = vmatpush1.bf16.msra.mxu0 %v2029
        %2809 = vmatprep.subr.bf16.mxu0 %v2046
        %2810 = vmatpush1.bf16.msra.mxu0 %v2045
        %2811 = vmatprep.subr.bf16.mxu0 %v2062
        %2812 = vmatpush1.bf16.msra.mxu0 %v2061
        %2813 = vmatprep.subr.bf16.mxu0 %v2078
        %2814 = vmatpush1.bf16.msra.mxu0 %v2077
        %2815 = vmatprep.mubr.bf16.mxu0 %v2362
        %2816 = vmatmul.mubr.bf16.gmra.mrb[0].mxu0 %v2361
        %v2817 = vpop.f32.mrb[0].mxu0
        %v2818 = vadd.f32 %v2777, %v2817
        %v2819 = vpop.f32.mrb[0].mxu0
        %v2820 = vadd.f32 %v2779, %v2819
        %v2821 = vpop.f32.mrb[0].mxu0
        %v2822 = vpop.f32.mrb[0].mxu0
        %2823 = vdwg.mxu0
        %2824 = vmatprep.subr.bf16.mxu0 %v2094
        %2825 = vmatpush1.bf16.msra.mxu0 %v2093
        %2826 = vmatprep.subr.bf16.mxu0 %v2110
        %2827 = vmatpush1.bf16.msra.mxu0 %v2109
        %2828 = vmatprep.subr.bf16.mxu0 %v2126
        %2829 = vmatpush1.bf16.msra.mxu0 %v2125
        %2830 = vmatprep.subr.bf16.mxu0 %v2142
        %2831 = vmatpush1.bf16.msra.mxu0 %v2141
        %2832 = vmatprep.subr.bf16.mxu0 %v2158
        %2833 = vmatpush1.bf16.msra.mxu0 %v2157
        %2834 = vmatprep.subr.bf16.mxu0 %v2174
        %2835 = vmatpush1.bf16.msra.mxu0 %v2173
        %2836 = vmatprep.subr.bf16.mxu0 %v2190
        %2837 = vmatpush1.bf16.msra.mxu0 %v2189
        %2838 = vmatprep.subr.bf16.mxu0 %v2206
        %2839 = vmatpush1.bf16.msra.mxu0 %v2205
        %2840 = vmatprep.subr.bf16.mxu0 %v2222
        %2841 = vmatpush1.bf16.msra.mxu0 %v2221
        %2842 = vmatprep.subr.bf16.mxu0 %v2238
        %2843 = vmatpush1.bf16.msra.mxu0 %v2237
        %2844 = vmatprep.subr.bf16.mxu0 %v2254
        %2845 = vmatpush1.bf16.msra.mxu0 %v2253
        %2846 = vmatprep.subr.bf16.mxu0 %v2270
        %2847 = vmatpush1.bf16.msra.mxu0 %v2269
        %2848 = vmatprep.subr.bf16.mxu0 %v2286
        %2849 = vmatpush1.bf16.msra.mxu0 %v2285
        %2850 = vmatprep.subr.bf16.mxu0 %v2302
        %2851 = vmatpush1.bf16.msra.mxu0 %v2301
        %2852 = vmatprep.subr.bf16.mxu0 %v2318
        %2853 = vmatpush1.bf16.msra.mxu0 %v2317
        %2854 = vmatprep.subr.bf16.mxu0 %v2334
        %2855 = vmatpush1.bf16.msra.mxu0 %v2333
        %2856 = vmatprep.mubr.bf16.mxu0 %v2364
        %2857 = vmatmul.mubr.bf16.gmra.mrb[0].mxu0 %v2363
        %v2858 = vpop.f32.mrb[0].mxu0
        %v2859 = vadd.f32 %v2818, %v2858
        %v2860 = vpop.f32.mrb[0].mxu0
        %v2861 = vadd.f32 %v2820, %v2860
        %v2862 = vpop.f32.mrb[0].mxu0
        %v2863 = vpop.f32.mrb[0].mxu0
        %2864 = vdwg.mxu0
        %2865 = vmatprep.subr.bf16.mxu0 %v1328
        %2866 = vmatpush1.bf16.msra.mxu0 %v1327
        %2867 = vmatprep.subr.bf16.mxu0 %v1344
        %2868 = vmatpush1.bf16.msra.mxu0 %v1343
        %2869 = vmatprep.subr.bf16.mxu0 %v1360
        %2870 = vmatpush1.bf16.msra.mxu0 %v1359
        %2871 = vmatprep.subr.bf16.mxu0 %v1376
        %2872 = vmatpush1.bf16.msra.mxu0 %v1375
        %2873 = vmatprep.subr.bf16.mxu0 %v1392
        %2874 = vmatpush1.bf16.msra.mxu0 %v1391
        %2875 = vmatprep.subr.bf16.mxu0 %v1408
        %2876 = vmatpush1.bf16.msra.mxu0 %v1407
        %2877 = vmatprep.subr.bf16.mxu0 %v1424
        %2878 = vmatpush1.bf16.msra.mxu0 %v1423
        %2879 = vmatprep.subr.bf16.mxu0 %v1440
        %2880 = vmatpush1.bf16.msra.mxu0 %v1439
        %2881 = vmatprep.subr.bf16.mxu0 %v1456
        %2882 = vmatpush1.bf16.msra.mxu0 %v1455
        %2883 = vmatprep.subr.bf16.mxu0 %v1472
        %2884 = vmatpush1.bf16.msra.mxu0 %v1471
        %2885 = vmatprep.subr.bf16.mxu0 %v1488
        %2886 = vmatpush1.bf16.msra.mxu0 %v1487
        %2887 = vmatprep.subr.bf16.mxu0 %v1504
        %2888 = vmatpush1.bf16.msra.mxu0 %v1503
        %2889 = vmatprep.subr.bf16.mxu0 %v1520
        %2890 = vmatpush1.bf16.msra.mxu0 %v1519
        %2891 = vmatprep.subr.bf16.mxu0 %v1536
        %2892 = vmatpush1.bf16.msra.mxu0 %v1535
        %2893 = vmatprep.subr.bf16.mxu0 %v1552
        %2894 = vmatpush1.bf16.msra.mxu0 %v1551
        %2895 = vmatprep.subr.bf16.mxu0 %v1568
        %2896 = vmatpush1.bf16.msra.mxu0 %v1567
        %2897 = vmatprep.mubr.bf16.mxu0 %v2358
        %2898 = vmatmul.mubr.bf16.gmra.mrb[0].mxu0 %v2357
        %v2899 = vpop.f32.mrb[0].mxu0
        %v2900 = vadd.f32 0.0, %v2899
        %v2901 = vpop.f32.mrb[0].mxu0
        %v2902 = vadd.f32 0.0, %v2901
        %v2903 = vpop.f32.mrb[0].mxu0
        %v2904 = vpop.f32.mrb[0].mxu0
        %2905 = vdwg.mxu0
        %2906 = vmatprep.subr.bf16.mxu0 %v1584
        %2907 = vmatpush1.bf16.msra.mxu0 %v1583
        %2908 = vmatprep.subr.bf16.mxu0 %v1600
        %2909 = vmatpush1.bf16.msra.mxu0 %v1599
        %2910 = vmatprep.subr.bf16.mxu0 %v1616
        %2911 = vmatpush1.bf16.msra.mxu0 %v1615
        %2912 = vmatprep.subr.bf16.mxu0 %v1632
        %2913 = vmatpush1.bf16.msra.mxu0 %v1631
        %2914 = vmatprep.subr.bf16.mxu0 %v1648
        %2915 = vmatpush1.bf16.msra.mxu0 %v1647
        %2916 = vmatprep.subr.bf16.mxu0 %v1664
        %2917 = vmatpush1.bf16.msra.mxu0 %v1663
        %2918 = vmatprep.subr.bf16.mxu0 %v1680
        %2919 = vmatpush1.bf16.msra.mxu0 %v1679
        %2920 = vmatprep.subr.bf16.mxu0 %v1696
        %2921 = vmatpush1.bf16.msra.mxu0 %v1695
        %2922 = vmatprep.subr.bf16.mxu0 %v1712
        %2923 = vmatpush1.bf16.msra.mxu0 %v1711
        %2924 = vmatprep.subr.bf16.mxu0 %v1728
        %2925 = vmatpush1.bf16.msra.mxu0 %v1727
        %2926 = vmatprep.subr.bf16.mxu0 %v1744
        %2927 = vmatpush1.bf16.msra.mxu0 %v1743
        %2928 = vmatprep.subr.bf16.mxu0 %v1760
        %2929 = vmatpush1.bf16.msra.mxu0 %v1759
        %2930 = vmatprep.subr.bf16.mxu0 %v1776
        %2931 = vmatpush1.bf16.msra.mxu0 %v1775
        %2932 = vmatprep.subr.bf16.mxu0 %v1792
        %2933 = vmatpush1.bf16.msra.mxu0 %v1791
        %2934 = vmatprep.subr.bf16.mxu0 %v1808
        %2935 = vmatpush1.bf16.msra.mxu0 %v1807
        %2936 = vmatprep.subr.bf16.mxu0 %v1824
        %2937 = vmatpush1.bf16.msra.mxu0 %v1823
        %2938 = vmatprep.mubr.bf16.mxu0 %v2360
        %2939 = vmatmul.mubr.bf16.gmra.mrb[0].mxu0 %v2359
        %v2940 = vpop.f32.mrb[0].mxu0
        %v2941 = vadd.f32 %v2900, %v2940
        %v2942 = vpop.f32.mrb[0].mxu0
        %v2943 = vadd.f32 %v2902, %v2942
        %v2944 = vpop.f32.mrb[0].mxu0
        %v2945 = vpop.f32.mrb[0].mxu0
        %2946 = vdwg.mxu0
        %2947 = vmatprep.subr.bf16.mxu0 %v1840
        %2948 = vmatpush1.bf16.msra.mxu0 %v1839
        %2949 = vmatprep.subr.bf16.mxu0 %v1856
        %2950 = vmatpush1.bf16.msra.mxu0 %v1855
        %2951 = vmatprep.subr.bf16.mxu0 %v1872
        %2952 = vmatpush1.bf16.msra.mxu0 %v1871
        %2953 = vmatprep.subr.bf16.mxu0 %v1888
        %2954 = vmatpush1.bf16.msra.mxu0 %v1887
        %2955 = vmatprep.subr.bf16.mxu0 %v1904
        %2956 = vmatpush1.bf16.msra.mxu0 %v1903
        %2957 = vmatprep.subr.bf16.mxu0 %v1920
        %2958 = vmatpush1.bf16.msra.mxu0 %v1919
        %2959 = vmatprep.subr.bf16.mxu0 %v1936
        %2960 = vmatpush1.bf16.msra.mxu0 %v1935
        %2961 = vmatprep.subr.bf16.mxu0 %v1952
        %2962 = vmatpush1.bf16.msra.mxu0 %v1951
        %2963 = vmatprep.subr.bf16.mxu0 %v1968
        %2964 = vmatpush1.bf16.msra.mxu0 %v1967
        %2965 = vmatprep.subr.bf16.mxu0 %v1984
        %2966 = vmatpush1.bf16.msra.mxu0 %v1983
        %2967 = vmatprep.subr.bf16.mxu0 %v2000
        %2968 = vmatpush1.bf16.msra.mxu0 %v1999
        %2969 = vmatprep.subr.bf16.mxu0 %v2016
        %2970 = vmatpush1.bf16.msra.mxu0 %v2015
        %2971 = vmatprep.subr.bf16.mxu0 %v2032
        %2972 = vmatpush1.bf16.msra.mxu0 %v2031
        %2973 = vmatprep.subr.bf16.mxu0 %v2048
        %2974 = vmatpush1.bf16.msra.mxu0 %v2047
        %2975 = vmatprep.subr.bf16.mxu0 %v2064
        %2976 = vmatpush1.bf16.msra.mxu0 %v2063
        %2977 = vmatprep.subr.bf16.mxu0 %v2080
        %2978 = vmatpush1.bf16.msra.mxu0 %v2079
        %2979 = vmatprep.mubr.bf16.mxu0 %v2362
        %2980 = vmatmul.mubr.bf16.gmra.mrb[0].mxu0 %v2361
        %v2981 = vpop.f32.mrb[0].mxu0
        %v2982 = vadd.f32 %v2941, %v2981
        %v2983 = vpop.f32.mrb[0].mxu0
        %v2984 = vadd.f32 %v2943, %v2983
        %v2985 = vpop.f32.mrb[0].mxu0
        %v2986 = vpop.f32.mrb[0].mxu0
        %2987 = vdwg.mxu0
        %2988 = vmatprep.subr.bf16.mxu0 %v2096
        %2989 = vmatpush1.bf16.msra.mxu0 %v2095
        %2990 = vmatprep.subr.bf16.mxu0 %v2112
        %2991 = vmatpush1.bf16.msra.mxu0 %v2111
        %2992 = vmatprep.subr.bf16.mxu0 %v2128
        %2993 = vmatpush1.bf16.msra.mxu0 %v2127
        %2994 = vmatprep.subr.bf16.mxu0 %v2144
        %2995 = vmatpush1.bf16.msra.mxu0 %v2143
        %2996 = vmatprep.subr.bf16.mxu0 %v2160
        %2997 = vmatpush1.bf16.msra.mxu0 %v2159
        %2998 = vmatprep.subr.bf16.mxu0 %v2176
        %2999 = vmatpush1.bf16.msra.mxu0 %v2175
        %3000 = vmatprep.subr.bf16.mxu0 %v2192
        %3001 = vmatpush1.bf16.msra.mxu0 %v2191
        %3002 = vmatprep.subr.bf16.mxu0 %v2208
        %3003 = vmatpush1.bf16.msra.mxu0 %v2207
        %3004 = vmatprep.subr.bf16.mxu0 %v2224
        %3005 = vmatpush1.bf16.msra.mxu0 %v2223
        %3006 = vmatprep.subr.bf16.mxu0 %v2240
        %3007 = vmatpush1.bf16.msra.mxu0 %v2239
        %3008 = vmatprep.subr.bf16.mxu0 %v2256
        %3009 = vmatpush1.bf16.msra.mxu0 %v2255
        %3010 = vmatprep.subr.bf16.mxu0 %v2272
        %3011 = vmatpush1.bf16.msra.mxu0 %v2271
        %3012 = vmatprep.subr.bf16.mxu0 %v2288
        %3013 = vmatpush1.bf16.msra.mxu0 %v2287
        %3014 = vmatprep.subr.bf16.mxu0 %v2304
        %3015 = vmatpush1.bf16.msra.mxu0 %v2303
        %3016 = vmatprep.subr.bf16.mxu0 %v2320
        %3017 = vmatpush1.bf16.msra.mxu0 %v2319
        %3018 = vmatprep.subr.bf16.mxu0 %v2336
        %3019 = vmatpush1.bf16.msra.mxu0 %v2335
        %3020 = vmatprep.mubr.bf16.mxu0 %v2364
        %3021 = vmatmul.mubr.bf16.gmra.mrb[0].mxu0 %v2363
        %v3022 = vpop.f32.mrb[0].mxu0
        %v3023 = vadd.f32 %v2982, %v3022
        %v3024 = vpop.f32.mrb[0].mxu0
        %v3025 = vadd.f32 %v2984, %v3024
        %v3026 = vpop.f32.mrb[0].mxu0
        %v3027 = vpop.f32.mrb[0].mxu0
        %3028 = vdwg.mxu0
        %3029 = vmatprep.subr.bf16.mxu0 %v1330
        %3030 = vmatpush1.bf16.msra.mxu0 %v1329
        %3031 = vmatprep.subr.bf16.mxu0 %v1346
        %3032 = vmatpush1.bf16.msra.mxu0 %v1345
        %3033 = vmatprep.subr.bf16.mxu0 %v1362
        %3034 = vmatpush1.bf16.msra.mxu0 %v1361
        %3035 = vmatprep.subr.bf16.mxu0 %v1378
        %3036 = vmatpush1.bf16.msra.mxu0 %v1377
        %3037 = vmatprep.subr.bf16.mxu0 %v1394
        %3038 = vmatpush1.bf16.msra.mxu0 %v1393
        %3039 = vmatprep.subr.bf16.mxu0 %v1410
        %3040 = vmatpush1.bf16.msra.mxu0 %v1409
        %3041 = vmatprep.subr.bf16.mxu0 %v1426
        %3042 = vmatpush1.bf16.msra.mxu0 %v1425
        %3043 = vmatprep.subr.bf16.mxu0 %v1442
        %3044 = vmatpush1.bf16.msra.mxu0 %v1441
        %3045 = vmatprep.subr.bf16.mxu0 %v1458
        %3046 = vmatpush1.bf16.msra.mxu0 %v1457
        %3047 = vmatprep.subr.bf16.mxu0 %v1474
        %3048 = vmatpush1.bf16.msra.mxu0 %v1473
        %3049 = vmatprep.subr.bf16.mxu0 %v1490
        %3050 = vmatpush1.bf16.msra.mxu0 %v1489
        %3051 = vmatprep.subr.bf16.mxu0 %v1506
        %3052 = vmatpush1.bf16.msra.mxu0 %v1505
        %3053 = vmatprep.subr.bf16.mxu0 %v1522
        %3054 = vmatpush1.bf16.msra.mxu0 %v1521
        %3055 = vmatprep.subr.bf16.mxu0 %v1538
        %3056 = vmatpush1.bf16.msra.mxu0 %v1537
        %3057 = vmatprep.subr.bf16.mxu0 %v1554
        %3058 = vmatpush1.bf16.msra.mxu0 %v1553
        %3059 = vmatprep.subr.bf16.mxu0 %v1570
        %3060 = vmatpush1.bf16.msra.mxu0 %v1569
        %3061 = vmatprep.mubr.bf16.mxu0 %v2358
        %3062 = vmatmul.mubr.bf16.gmra.mrb[0].mxu0 %v2357
        %v3063 = vpop.f32.mrb[0].mxu0
        %v3064 = vadd.f32 0.0, %v3063
        %v3065 = vpop.f32.mrb[0].mxu0
        %v3066 = vadd.f32 0.0, %v3065
        %v3067 = vpop.f32.mrb[0].mxu0
        %v3068 = vpop.f32.mrb[0].mxu0
        %3069 = vdwg.mxu0
        %3070 = vmatprep.subr.bf16.mxu0 %v1586
        %3071 = vmatpush1.bf16.msra.mxu0 %v1585
        %3072 = vmatprep.subr.bf16.mxu0 %v1602
        %3073 = vmatpush1.bf16.msra.mxu0 %v1601
        %3074 = vmatprep.subr.bf16.mxu0 %v1618
        %3075 = vmatpush1.bf16.msra.mxu0 %v1617
        %3076 = vmatprep.subr.bf16.mxu0 %v1634
        %3077 = vmatpush1.bf16.msra.mxu0 %v1633
        %3078 = vmatprep.subr.bf16.mxu0 %v1650
        %3079 = vmatpush1.bf16.msra.mxu0 %v1649
        %3080 = vmatprep.subr.bf16.mxu0 %v1666
        %3081 = vmatpush1.bf16.msra.mxu0 %v1665
        %3082 = vmatprep.subr.bf16.mxu0 %v1682
        %3083 = vmatpush1.bf16.msra.mxu0 %v1681
        %3084 = vmatprep.subr.bf16.mxu0 %v1698
        %3085 = vmatpush1.bf16.msra.mxu0 %v1697
        %3086 = vmatprep.subr.bf16.mxu0 %v1714
        %3087 = vmatpush1.bf16.msra.mxu0 %v1713
        %3088 = vmatprep.subr.bf16.mxu0 %v1730
        %3089 = vmatpush1.bf16.msra.mxu0 %v1729
        %3090 = vmatprep.subr.bf16.mxu0 %v1746
        %3091 = vmatpush1.bf16.msra.mxu0 %v1745
        %3092 = vmatprep.subr.bf16.mxu0 %v1762
        %3093 = vmatpush1.bf16.msra.mxu0 %v1761
        %3094 = vmatprep.subr.bf16.mxu0 %v1778
        %3095 = vmatpush1.bf16.msra.mxu0 %v1777
        %3096 = vmatprep.subr.bf16.mxu0 %v1794
        %3097 = vmatpush1.bf16.msra.mxu0 %v1793
        %3098 = vmatprep.subr.bf16.mxu0 %v1810
        %3099 = vmatpush1.bf16.msra.mxu0 %v1809
        %3100 = vmatprep.subr.bf16.mxu0 %v1826
        %3101 = vmatpush1.bf16.msra.mxu0 %v1825
        %3102 = vmatprep.mubr.bf16.mxu0 %v2360
        %3103 = vmatmul.mubr.bf16.gmra.mrb[0].mxu0 %v2359
        %v3104 = vpop.f32.mrb[0].mxu0
        %v3105 = vadd.f32 %v3064, %v3104
        %v3106 = vpop.f32.mrb[0].mxu0
        %v3107 = vadd.f32 %v3066, %v3106
        %v3108 = vpop.f32.mrb[0].mxu0
        %v3109 = vpop.f32.mrb[0].mxu0
        %3110 = vdwg.mxu0
        %3111 = vmatprep.subr.bf16.mxu0 %v1842
        %3112 = vmatpush1.bf16.msra.mxu0 %v1841
        %3113 = vmatprep.subr.bf16.mxu0 %v1858
        %3114 = vmatpush1.bf16.msra.mxu0 %v1857
        %3115 = vmatprep.subr.bf16.mxu0 %v1874
        %3116 = vmatpush1.bf16.msra.mxu0 %v1873
        %3117 = vmatprep.subr.bf16.mxu0 %v1890
        %3118 = vmatpush1.bf16.msra.mxu0 %v1889
        %3119 = vmatprep.subr.bf16.mxu0 %v1906
        %3120 = vmatpush1.bf16.msra.mxu0 %v1905
        %3121 = vmatprep.subr.bf16.mxu0 %v1922
        %3122 = vmatpush1.bf16.msra.mxu0 %v1921
        %3123 = vmatprep.subr.bf16.mxu0 %v1938
        %3124 = vmatpush1.bf16.msra.mxu0 %v1937
        %3125 = vmatprep.subr.bf16.mxu0 %v1954
        %3126 = vmatpush1.bf16.msra.mxu0 %v1953
        %3127 = vmatprep.subr.bf16.mxu0 %v1970
        %3128 = vmatpush1.bf16.msra.mxu0 %v1969
        %3129 = vmatprep.subr.bf16.mxu0 %v1986
        %3130 = vmatpush1.bf16.msra.mxu0 %v1985
        %3131 = vmatprep.subr.bf16.mxu0 %v2002
        %3132 = vmatpush1.bf16.msra.mxu0 %v2001
        %3133 = vmatprep.subr.bf16.mxu0 %v2018
        %3134 = vmatpush1.bf16.msra.mxu0 %v2017
        %3135 = vmatprep.subr.bf16.mxu0 %v2034
        %3136 = vmatpush1.bf16.msra.mxu0 %v2033
        %3137 = vmatprep.subr.bf16.mxu0 %v2050
        %3138 = vmatpush1.bf16.msra.mxu0 %v2049
        %3139 = vmatprep.subr.bf16.mxu0 %v2066
        %3140 = vmatpush1.bf16.msra.mxu0 %v2065
        %3141 = vmatprep.subr.bf16.mxu0 %v2082
        %3142 = vmatpush1.bf16.msra.mxu0 %v2081
        %3143 = vmatprep.mubr.bf16.mxu0 %v2362
        %3144 = vmatmul.mubr.bf16.gmra.mrb[0].mxu0 %v2361
        %v3145 = vpop.f32.mrb[0].mxu0
        %v3146 = vadd.f32 %v3105, %v3145
        %v3147 = vpop.f32.mrb[0].mxu0
        %v3148 = vadd.f32 %v3107, %v3147
        %v3149 = vpop.f32.mrb[0].mxu0
        %v3150 = vpop.f32.mrb[0].mxu0
        %3151 = vdwg.mxu0
        %3152 = vmatprep.subr.bf16.mxu0 %v2098
        %3153 = vmatpush1.bf16.msra.mxu0 %v2097
        %3154 = vmatprep.subr.bf16.mxu0 %v2114
        %3155 = vmatpush1.bf16.msra.mxu0 %v2113
        %3156 = vmatprep.subr.bf16.mxu0 %v2130
        %3157 = vmatpush1.bf16.msra.mxu0 %v2129
        %3158 = vmatprep.subr.bf16.mxu0 %v2146
        %3159 = vmatpush1.bf16.msra.mxu0 %v2145
        %3160 = vmatprep.subr.bf16.mxu0 %v2162
        %3161 = vmatpush1.bf16.msra.mxu0 %v2161
        %3162 = vmatprep.subr.bf16.mxu0 %v2178
        %3163 = vmatpush1.bf16.msra.mxu0 %v2177
        %3164 = vmatprep.subr.bf16.mxu0 %v2194
        %3165 = vmatpush1.bf16.msra.mxu0 %v2193
        %3166 = vmatprep.subr.bf16.mxu0 %v2210
        %3167 = vmatpush1.bf16.msra.mxu0 %v2209
        %3168 = vmatprep.subr.bf16.mxu0 %v2226
        %3169 = vmatpush1.bf16.msra.mxu0 %v2225
        %3170 = vmatprep.subr.bf16.mxu0 %v2242
        %3171 = vmatpush1.bf16.msra.mxu0 %v2241
        %3172 = vmatprep.subr.bf16.mxu0 %v2258
        %3173 = vmatpush1.bf16.msra.mxu0 %v2257
        %3174 = vmatprep.subr.bf16.mxu0 %v2274
        %3175 = vmatpush1.bf16.msra.mxu0 %v2273
        %3176 = vmatprep.subr.bf16.mxu0 %v2290
        %3177 = vmatpush1.bf16.msra.mxu0 %v2289
        %3178 = vmatprep.subr.bf16.mxu0 %v2306
        %3179 = vmatpush1.bf16.msra.mxu0 %v2305
        %3180 = vmatprep.subr.bf16.mxu0 %v2322
        %3181 = vmatpush1.bf16.msra.mxu0 %v2321
        %3182 = vmatprep.subr.bf16.mxu0 %v2338
        %3183 = vmatpush1.bf16.msra.mxu0 %v2337
        %3184 = vmatprep.mubr.bf16.mxu0 %v2364
        %3185 = vmatmul.mubr.bf16.gmra.mrb[0].mxu0 %v2363
        %v3186 = vpop.f32.mrb[0].mxu0
        %v3187 = vadd.f32 %v3146, %v3186
        %v3188 = vpop.f32.mrb[0].mxu0
        %v3189 = vadd.f32 %v3148, %v3188
        %v3190 = vpop.f32.mrb[0].mxu0
        %v3191 = vpop.f32.mrb[0].mxu0
        %3192 = vdwg.mxu0
        %3193 = vmatprep.subr.bf16.mxu0 %v1332
        %3194 = vmatpush1.bf16.msra.mxu0 %v1331
        %3195 = vmatprep.subr.bf16.mxu0 %v1348
        %3196 = vmatpush1.bf16.msra.mxu0 %v1347
        %3197 = vmatprep.subr.bf16.mxu0 %v1364
        %3198 = vmatpush1.bf16.msra.mxu0 %v1363
        %3199 = vmatprep.subr.bf16.mxu0 %v1380
        %3200 = vmatpush1.bf16.msra.mxu0 %v1379
        %3201 = vmatprep.subr.bf16.mxu0 %v1396
        %3202 = vmatpush1.bf16.msra.mxu0 %v1395
        %3203 = vmatprep.subr.bf16.mxu0 %v1412
        %3204 = vmatpush1.bf16.msra.mxu0 %v1411
        %3205 = vmatprep.subr.bf16.mxu0 %v1428
        %3206 = vmatpush1.bf16.msra.mxu0 %v1427
        %3207 = vmatprep.subr.bf16.mxu0 %v1444
        %3208 = vmatpush1.bf16.msra.mxu0 %v1443
        %3209 = vmatprep.subr.bf16.mxu0 %v1460
        %3210 = vmatpush1.bf16.msra.mxu0 %v1459
        %3211 = vmatprep.subr.bf16.mxu0 %v1476
        %3212 = vmatpush1.bf16.msra.mxu0 %v1475
        %3213 = vmatprep.subr.bf16.mxu0 %v1492
        %3214 = vmatpush1.bf16.msra.mxu0 %v1491
        %3215 = vmatprep.subr.bf16.mxu0 %v1508
        %3216 = vmatpush1.bf16.msra.mxu0 %v1507
        %3217 = vmatprep.subr.bf16.mxu0 %v1524
        %3218 = vmatpush1.bf16.msra.mxu0 %v1523
        %3219 = vmatprep.subr.bf16.mxu0 %v1540
        %3220 = vmatpush1.bf16.msra.mxu0 %v1539
        %3221 = vmatprep.subr.bf16.mxu0 %v1556
        %3222 = vmatpush1.bf16.msra.mxu0 %v1555
        %3223 = vmatprep.subr.bf16.mxu0 %v1572
        %3224 = vmatpush1.bf16.msra.mxu0 %v1571
        %3225 = vmatprep.mubr.bf16.mxu0 %v2358
        %3226 = vmatmul.mubr.bf16.gmra.mrb[0].mxu0 %v2357
        %v3227 = vpop.f32.mrb[0].mxu0
        %v3228 = vadd.f32 0.0, %v3227
        %v3229 = vpop.f32.mrb[0].mxu0
        %v3230 = vadd.f32 0.0, %v3229
        %v3231 = vpop.f32.mrb[0].mxu0
        %v3232 = vpop.f32.mrb[0].mxu0
        %3233 = vdwg.mxu0
        %3234 = vmatprep.subr.bf16.mxu0 %v1588
        %3235 = vmatpush1.bf16.msra.mxu0 %v1587
        %3236 = vmatprep.subr.bf16.mxu0 %v1604
        %3237 = vmatpush1.bf16.msra.mxu0 %v1603
        %3238 = vmatprep.subr.bf16.mxu0 %v1620
        %3239 = vmatpush1.bf16.msra.mxu0 %v1619
        %3240 = vmatprep.subr.bf16.mxu0 %v1636
        %3241 = vmatpush1.bf16.msra.mxu0 %v1635
        %3242 = vmatprep.subr.bf16.mxu0 %v1652
        %3243 = vmatpush1.bf16.msra.mxu0 %v1651
        %3244 = vmatprep.subr.bf16.mxu0 %v1668
        %3245 = vmatpush1.bf16.msra.mxu0 %v1667
        %3246 = vmatprep.subr.bf16.mxu0 %v1684
        %3247 = vmatpush1.bf16.msra.mxu0 %v1683
        %3248 = vmatprep.subr.bf16.mxu0 %v1700
        %3249 = vmatpush1.bf16.msra.mxu0 %v1699
        %3250 = vmatprep.subr.bf16.mxu0 %v1716
        %3251 = vmatpush1.bf16.msra.mxu0 %v1715
        %3252 = vmatprep.subr.bf16.mxu0 %v1732
        %3253 = vmatpush1.bf16.msra.mxu0 %v1731
        %3254 = vmatprep.subr.bf16.mxu0 %v1748
        %3255 = vmatpush1.bf16.msra.mxu0 %v1747
        %3256 = vmatprep.subr.bf16.mxu0 %v1764
        %3257 = vmatpush1.bf16.msra.mxu0 %v1763
        %3258 = vmatprep.subr.bf16.mxu0 %v1780
        %3259 = vmatpush1.bf16.msra.mxu0 %v1779
        %3260 = vmatprep.subr.bf16.mxu0 %v1796
        %3261 = vmatpush1.bf16.msra.mxu0 %v1795
        %3262 = vmatprep.subr.bf16.mxu0 %v1812
        %3263 = vmatpush1.bf16.msra.mxu0 %v1811
        %3264 = vmatprep.subr.bf16.mxu0 %v1828
        %3265 = vmatpush1.bf16.msra.mxu0 %v1827
        %3266 = vmatprep.mubr.bf16.mxu0 %v2360
        %3267 = vmatmul.mubr.bf16.gmra.mrb[0].mxu0 %v2359
        %v3268 = vpop.f32.mrb[0].mxu0
        %v3269 = vadd.f32 %v3228, %v3268
        %v3270 = vpop.f32.mrb[0].mxu0
        %v3271 = vadd.f32 %v3230, %v3270
        %v3272 = vpop.f32.mrb[0].mxu0
        %v3273 = vpop.f32.mrb[0].mxu0
        %3274 = vdwg.mxu0
        %3275 = vmatprep.subr.bf16.mxu0 %v1844
        %3276 = vmatpush1.bf16.msra.mxu0 %v1843
        %3277 = vmatprep.subr.bf16.mxu0 %v1860
        %3278 = vmatpush1.bf16.msra.mxu0 %v1859
        %3279 = vmatprep.subr.bf16.mxu0 %v1876
        %3280 = vmatpush1.bf16.msra.mxu0 %v1875
        %3281 = vmatprep.subr.bf16.mxu0 %v1892
        %3282 = vmatpush1.bf16.msra.mxu0 %v1891
        %3283 = vmatprep.subr.bf16.mxu0 %v1908
        %3284 = vmatpush1.bf16.msra.mxu0 %v1907
        %3285 = vmatprep.subr.bf16.mxu0 %v1924
        %3286 = vmatpush1.bf16.msra.mxu0 %v1923
        %3287 = vmatprep.subr.bf16.mxu0 %v1940
        %3288 = vmatpush1.bf16.msra.mxu0 %v1939
        %3289 = vmatprep.subr.bf16.mxu0 %v1956
        %3290 = vmatpush1.bf16.msra.mxu0 %v1955
        %3291 = vmatprep.subr.bf16.mxu0 %v1972
        %3292 = vmatpush1.bf16.msra.mxu0 %v1971
        %3293 = vmatprep.subr.bf16.mxu0 %v1988
        %3294 = vmatpush1.bf16.msra.mxu0 %v1987
        %3295 = vmatprep.subr.bf16.mxu0 %v2004
        %3296 = vmatpush1.bf16.msra.mxu0 %v2003
        %3297 = vmatprep.subr.bf16.mxu0 %v2020
        %3298 = vmatpush1.bf16.msra.mxu0 %v2019
        %3299 = vmatprep.subr.bf16.mxu0 %v2036
        %3300 = vmatpush1.bf16.msra.mxu0 %v2035
        %3301 = vmatprep.subr.bf16.mxu0 %v2052
        %3302 = vmatpush1.bf16.msra.mxu0 %v2051
        %3303 = vmatprep.subr.bf16.mxu0 %v2068
        %3304 = vmatpush1.bf16.msra.mxu0 %v2067
        %3305 = vmatprep.subr.bf16.mxu0 %v2084
        %3306 = vmatpush1.bf16.msra.mxu0 %v2083
        %3307 = vmatprep.mubr.bf16.mxu0 %v2362
        %3308 = vmatmul.mubr.bf16.gmra.mrb[0].mxu0 %v2361
        %v3309 = vpop.f32.mrb[0].mxu0
        %v3310 = vadd.f32 %v3269, %v3309
        %v3311 = vpop.f32.mrb[0].mxu0
        %v3312 = vadd.f32 %v3271, %v3311
        %v3313 = vpop.f32.mrb[0].mxu0
        %v3314 = vpop.f32.mrb[0].mxu0
        %3315 = vdwg.mxu0
        %3316 = vmatprep.subr.bf16.mxu0 %v2100
        %3317 = vmatpush1.bf16.msra.mxu0 %v2099
        %3318 = vmatprep.subr.bf16.mxu0 %v2116
        %3319 = vmatpush1.bf16.msra.mxu0 %v2115
        %3320 = vmatprep.subr.bf16.mxu0 %v2132
        %3321 = vmatpush1.bf16.msra.mxu0 %v2131
        %3322 = vmatprep.subr.bf16.mxu0 %v2148
        %3323 = vmatpush1.bf16.msra.mxu0 %v2147
        %3324 = vmatprep.subr.bf16.mxu0 %v2164
        %3325 = vmatpush1.bf16.msra.mxu0 %v2163
        %3326 = vmatprep.subr.bf16.mxu0 %v2180
        %3327 = vmatpush1.bf16.msra.mxu0 %v2179
        %3328 = vmatprep.subr.bf16.mxu0 %v2196
        %3329 = vmatpush1.bf16.msra.mxu0 %v2195
        %3330 = vmatprep.subr.bf16.mxu0 %v2212
        %3331 = vmatpush1.bf16.msra.mxu0 %v2211
        %3332 = vmatprep.subr.bf16.mxu0 %v2228
        %3333 = vmatpush1.bf16.msra.mxu0 %v2227
        %3334 = vmatprep.subr.bf16.mxu0 %v2244
        %3335 = vmatpush1.bf16.msra.mxu0 %v2243
        %3336 = vmatprep.subr.bf16.mxu0 %v2260
        %3337 = vmatpush1.bf16.msra.mxu0 %v2259
        %3338 = vmatprep.subr.bf16.mxu0 %v2276
        %3339 = vmatpush1.bf16.msra.mxu0 %v2275
        %3340 = vmatprep.subr.bf16.mxu0 %v2292
        %3341 = vmatpush1.bf16.msra.mxu0 %v2291
        %3342 = vmatprep.subr.bf16.mxu0 %v2308
        %3343 = vmatpush1.bf16.msra.mxu0 %v2307
        %3344 = vmatprep.subr.bf16.mxu0 %v2324
        %3345 = vmatpush1.bf16.msra.mxu0 %v2323
        %3346 = vmatprep.subr.bf16.mxu0 %v2340
        %3347 = vmatpush1.bf16.msra.mxu0 %v2339
        %3348 = vmatprep.mubr.bf16.mxu0 %v2364
        %3349 = vmatmul.mubr.bf16.gmra.mrb[0].mxu0 %v2363
        %v3350 = vpop.f32.mrb[0].mxu0
        %v3351 = vadd.f32 %v3310, %v3350
        %v3352 = vpop.f32.mrb[0].mxu0
        %v3353 = vadd.f32 %v3312, %v3352
        %v3354 = vpop.f32.mrb[0].mxu0
        %v3355 = vpop.f32.mrb[0].mxu0
        %3356 = vdwg.mxu0
        %3357 = vmatprep.subr.bf16.mxu0 %v1334
        %3358 = vmatpush1.bf16.msra.mxu0 %v1333
        %3359 = vmatprep.subr.bf16.mxu0 %v1350
        %3360 = vmatpush1.bf16.msra.mxu0 %v1349
        %3361 = vmatprep.subr.bf16.mxu0 %v1366
        %3362 = vmatpush1.bf16.msra.mxu0 %v1365
        %3363 = vmatprep.subr.bf16.mxu0 %v1382
        %3364 = vmatpush1.bf16.msra.mxu0 %v1381
        %3365 = vmatprep.subr.bf16.mxu0 %v1398
        %3366 = vmatpush1.bf16.msra.mxu0 %v1397
        %3367 = vmatprep.subr.bf16.mxu0 %v1414
        %3368 = vmatpush1.bf16.msra.mxu0 %v1413
        %3369 = vmatprep.subr.bf16.mxu0 %v1430
        %3370 = vmatpush1.bf16.msra.mxu0 %v1429
        %3371 = vmatprep.subr.bf16.mxu0 %v1446
        %3372 = vmatpush1.bf16.msra.mxu0 %v1445
        %3373 = vmatprep.subr.bf16.mxu0 %v1462
        %3374 = vmatpush1.bf16.msra.mxu0 %v1461
        %3375 = vmatprep.subr.bf16.mxu0 %v1478
        %3376 = vmatpush1.bf16.msra.mxu0 %v1477
        %3377 = vmatprep.subr.bf16.mxu0 %v1494
        %3378 = vmatpush1.bf16.msra.mxu0 %v1493
        %3379 = vmatprep.subr.bf16.mxu0 %v1510
        %3380 = vmatpush1.bf16.msra.mxu0 %v1509
        %3381 = vmatprep.subr.bf16.mxu0 %v1526
        %3382 = vmatpush1.bf16.msra.mxu0 %v1525
        %3383 = vmatprep.subr.bf16.mxu0 %v1542
        %3384 = vmatpush1.bf16.msra.mxu0 %v1541
        %3385 = vmatprep.subr.bf16.mxu0 %v1558
        %3386 = vmatpush1.bf16.msra.mxu0 %v1557
        %3387 = vmatprep.subr.bf16.mxu0 %v1574
        %3388 = vmatpush1.bf16.msra.mxu0 %v1573
        %3389 = vmatprep.mubr.bf16.mxu0 %v2358
        %3390 = vmatmul.mubr.bf16.gmra.mrb[0].mxu0 %v2357
        %v3391 = vpop.f32.mrb[0].mxu0
        %v3392 = vadd.f32 0.0, %v3391
        %v3393 = vpop.f32.mrb[0].mxu0
        %v3394 = vadd.f32 0.0, %v3393
        %v3395 = vpop.f32.mrb[0].mxu0
        %v3396 = vpop.f32.mrb[0].mxu0
        %3397 = vdwg.mxu0
        %3398 = vmatprep.subr.bf16.mxu0 %v1590
        %3399 = vmatpush1.bf16.msra.mxu0 %v1589
        %3400 = vmatprep.subr.bf16.mxu0 %v1606
        %3401 = vmatpush1.bf16.msra.mxu0 %v1605
        %3402 = vmatprep.subr.bf16.mxu0 %v1622
        %3403 = vmatpush1.bf16.msra.mxu0 %v1621
        %3404 = vmatprep.subr.bf16.mxu0 %v1638
        %3405 = vmatpush1.bf16.msra.mxu0 %v1637
        %3406 = vmatprep.subr.bf16.mxu0 %v1654
        %3407 = vmatpush1.bf16.msra.mxu0 %v1653
        %3408 = vmatprep.subr.bf16.mxu0 %v1670
        %3409 = vmatpush1.bf16.msra.mxu0 %v1669
        %3410 = vmatprep.subr.bf16.mxu0 %v1686
        %3411 = vmatpush1.bf16.msra.mxu0 %v1685
        %3412 = vmatprep.subr.bf16.mxu0 %v1702
        %3413 = vmatpush1.bf16.msra.mxu0 %v1701
        %3414 = vmatprep.subr.bf16.mxu0 %v1718
        %3415 = vmatpush1.bf16.msra.mxu0 %v1717
        %3416 = vmatprep.subr.bf16.mxu0 %v1734
        %3417 = vmatpush1.bf16.msra.mxu0 %v1733
        %3418 = vmatprep.subr.bf16.mxu0 %v1750
        %3419 = vmatpush1.bf16.msra.mxu0 %v1749
        %3420 = vmatprep.subr.bf16.mxu0 %v1766
        %3421 = vmatpush1.bf16.msra.mxu0 %v1765
        %3422 = vmatprep.subr.bf16.mxu0 %v1782
        %3423 = vmatpush1.bf16.msra.mxu0 %v1781
        %3424 = vmatprep.subr.bf16.mxu0 %v1798
        %3425 = vmatpush1.bf16.msra.mxu0 %v1797
        %3426 = vmatprep.subr.bf16.mxu0 %v1814
        %3427 = vmatpush1.bf16.msra.mxu0 %v1813
        %3428 = vmatprep.subr.bf16.mxu0 %v1830
        %3429 = vmatpush1.bf16.msra.mxu0 %v1829
        %3430 = vmatprep.mubr.bf16.mxu0 %v2360
        %3431 = vmatmul.mubr.bf16.gmra.mrb[0].mxu0 %v2359
        %v3432 = vpop.f32.mrb[0].mxu0
        %v3433 = vadd.f32 %v3392, %v3432
        %v3434 = vpop.f32.mrb[0].mxu0
        %v3435 = vadd.f32 %v3394, %v3434
        %v3436 = vpop.f32.mrb[0].mxu0
        %v3437 = vpop.f32.mrb[0].mxu0
        %3438 = vdwg.mxu0
        %3439 = vmatprep.subr.bf16.mxu0 %v1846
        %3440 = vmatpush1.bf16.msra.mxu0 %v1845
        %3441 = vmatprep.subr.bf16.mxu0 %v1862
        %3442 = vmatpush1.bf16.msra.mxu0 %v1861
        %3443 = vmatprep.subr.bf16.mxu0 %v1878
        %3444 = vmatpush1.bf16.msra.mxu0 %v1877
        %3445 = vmatprep.subr.bf16.mxu0 %v1894
        %3446 = vmatpush1.bf16.msra.mxu0 %v1893
        %3447 = vmatprep.subr.bf16.mxu0 %v1910
        %3448 = vmatpush1.bf16.msra.mxu0 %v1909
        %3449 = vmatprep.subr.bf16.mxu0 %v1926
        %3450 = vmatpush1.bf16.msra.mxu0 %v1925
        %3451 = vmatprep.subr.bf16.mxu0 %v1942
        %3452 = vmatpush1.bf16.msra.mxu0 %v1941
        %3453 = vmatprep.subr.bf16.mxu0 %v1958
        %3454 = vmatpush1.bf16.msra.mxu0 %v1957
        %3455 = vmatprep.subr.bf16.mxu0 %v1974
        %3456 = vmatpush1.bf16.msra.mxu0 %v1973
        %3457 = vmatprep.subr.bf16.mxu0 %v1990
        %3458 = vmatpush1.bf16.msra.mxu0 %v1989
        %3459 = vmatprep.subr.bf16.mxu0 %v2006
        %3460 = vmatpush1.bf16.msra.mxu0 %v2005
        %3461 = vmatprep.subr.bf16.mxu0 %v2022
        %3462 = vmatpush1.bf16.msra.mxu0 %v2021
        %3463 = vmatprep.subr.bf16.mxu0 %v2038
        %3464 = vmatpush1.bf16.msra.mxu0 %v2037
        %3465 = vmatprep.subr.bf16.mxu0 %v2054
        %3466 = vmatpush1.bf16.msra.mxu0 %v2053
        %3467 = vmatprep.subr.bf16.mxu0 %v2070
        %3468 = vmatpush1.bf16.msra.mxu0 %v2069
        %3469 = vmatprep.subr.bf16.mxu0 %v2086
        %3470 = vmatpush1.bf16.msra.mxu0 %v2085
        %3471 = vmatprep.mubr.bf16.mxu0 %v2362
        %3472 = vmatmul.mubr.bf16.gmra.mrb[0].mxu0 %v2361
        %v3473 = vpop.f32.mrb[0].mxu0
        %v3474 = vadd.f32 %v3433, %v3473
        %v3475 = vpop.f32.mrb[0].mxu0
        %v3476 = vadd.f32 %v3435, %v3475
        %v3477 = vpop.f32.mrb[0].mxu0
        %v3478 = vpop.f32.mrb[0].mxu0
        %3479 = vdwg.mxu0
        %3480 = vmatprep.subr.bf16.mxu0 %v2102
        %3481 = vmatpush1.bf16.msra.mxu0 %v2101
        %3482 = vmatprep.subr.bf16.mxu0 %v2118
        %3483 = vmatpush1.bf16.msra.mxu0 %v2117
        %3484 = vmatprep.subr.bf16.mxu0 %v2134
        %3485 = vmatpush1.bf16.msra.mxu0 %v2133
        %3486 = vmatprep.subr.bf16.mxu0 %v2150
        %3487 = vmatpush1.bf16.msra.mxu0 %v2149
        %3488 = vmatprep.subr.bf16.mxu0 %v2166
        %3489 = vmatpush1.bf16.msra.mxu0 %v2165
        %3490 = vmatprep.subr.bf16.mxu0 %v2182
        %3491 = vmatpush1.bf16.msra.mxu0 %v2181
        %3492 = vmatprep.subr.bf16.mxu0 %v2198
        %3493 = vmatpush1.bf16.msra.mxu0 %v2197
        %3494 = vmatprep.subr.bf16.mxu0 %v2214
        %3495 = vmatpush1.bf16.msra.mxu0 %v2213
        %3496 = vmatprep.subr.bf16.mxu0 %v2230
        %3497 = vmatpush1.bf16.msra.mxu0 %v2229
        %3498 = vmatprep.subr.bf16.mxu0 %v2246
        %3499 = vmatpush1.bf16.msra.mxu0 %v2245
        %3500 = vmatprep.subr.bf16.mxu0 %v2262
        %3501 = vmatpush1.bf16.msra.mxu0 %v2261
        %3502 = vmatprep.subr.bf16.mxu0 %v2278
        %3503 = vmatpush1.bf16.msra.mxu0 %v2277
        %3504 = vmatprep.subr.bf16.mxu0 %v2294
        %3505 = vmatpush1.bf16.msra.mxu0 %v2293
        %3506 = vmatprep.subr.bf16.mxu0 %v2310
        %3507 = vmatpush1.bf16.msra.mxu0 %v2309
        %3508 = vmatprep.subr.bf16.mxu0 %v2326
        %3509 = vmatpush1.bf16.msra.mxu0 %v2325
        %3510 = vmatprep.subr.bf16.mxu0 %v2342
        %3511 = vmatpush1.bf16.msra.mxu0 %v2341
        %3512 = vmatprep.mubr.bf16.mxu0 %v2364
        %3513 = vmatmul.mubr.bf16.gmra.mrb[0].mxu0 %v2363
        %v3514 = vpop.f32.mrb[0].mxu0
        %v3515 = vadd.f32 %v3474, %v3514
        %v3516 = vpop.f32.mrb[0].mxu0
        %v3517 = vadd.f32 %v3476, %v3516
        %v3518 = vpop.f32.mrb[0].mxu0
        %v3519 = vpop.f32.mrb[0].mxu0
        %3520 = vdwg.mxu0
        %3521 = vmatprep.subr.bf16.mxu0 %v1336
        %3522 = vmatpush1.bf16.msra.mxu0 %v1335
        %3523 = vmatprep.subr.bf16.mxu0 %v1352
        %3524 = vmatpush1.bf16.msra.mxu0 %v1351
        %3525 = vmatprep.subr.bf16.mxu0 %v1368
        %3526 = vmatpush1.bf16.msra.mxu0 %v1367
        %3527 = vmatprep.subr.bf16.mxu0 %v1384
        %3528 = vmatpush1.bf16.msra.mxu0 %v1383
        %3529 = vmatprep.subr.bf16.mxu0 %v1400
        %3530 = vmatpush1.bf16.msra.mxu0 %v1399
        %3531 = vmatprep.subr.bf16.mxu0 %v1416
        %3532 = vmatpush1.bf16.msra.mxu0 %v1415
        %3533 = vmatprep.subr.bf16.mxu0 %v1432
        %3534 = vmatpush1.bf16.msra.mxu0 %v1431
        %3535 = vmatprep.subr.bf16.mxu0 %v1448
        %3536 = vmatpush1.bf16.msra.mxu0 %v1447
        %3537 = vmatprep.subr.bf16.mxu0 %v1464
        %3538 = vmatpush1.bf16.msra.mxu0 %v1463
        %3539 = vmatprep.subr.bf16.mxu0 %v1480
        %3540 = vmatpush1.bf16.msra.mxu0 %v1479
        %3541 = vmatprep.subr.bf16.mxu0 %v1496
        %3542 = vmatpush1.bf16.msra.mxu0 %v1495
        %3543 = vmatprep.subr.bf16.mxu0 %v1512
        %3544 = vmatpush1.bf16.msra.mxu0 %v1511
        %3545 = vmatprep.subr.bf16.mxu0 %v1528
        %3546 = vmatpush1.bf16.msra.mxu0 %v1527
        %3547 = vmatprep.subr.bf16.mxu0 %v1544
        %3548 = vmatpush1.bf16.msra.mxu0 %v1543
        %3549 = vmatprep.subr.bf16.mxu0 %v1560
        %3550 = vmatpush1.bf16.msra.mxu0 %v1559
        %3551 = vmatprep.subr.bf16.mxu0 %v1576
        %3552 = vmatpush1.bf16.msra.mxu0 %v1575
        %3553 = vmatprep.mubr.bf16.mxu0 %v2358
        %3554 = vmatmul.mubr.bf16.gmra.mrb[0].mxu0 %v2357
        %v3555 = vpop.f32.mrb[0].mxu0
        %v3556 = vadd.f32 0.0, %v3555
        %v3557 = vpop.f32.mrb[0].mxu0
        %v3558 = vadd.f32 0.0, %v3557
        %v3559 = vpop.f32.mrb[0].mxu0
        %v3560 = vpop.f32.mrb[0].mxu0
        %3561 = vdwg.mxu0
        %3562 = vmatprep.subr.bf16.mxu0 %v1592
        %3563 = vmatpush1.bf16.msra.mxu0 %v1591
        %3564 = vmatprep.subr.bf16.mxu0 %v1608
        %3565 = vmatpush1.bf16.msra.mxu0 %v1607
        %3566 = vmatprep.subr.bf16.mxu0 %v1624
        %3567 = vmatpush1.bf16.msra.mxu0 %v1623
        %3568 = vmatprep.subr.bf16.mxu0 %v1640
        %3569 = vmatpush1.bf16.msra.mxu0 %v1639
        %3570 = vmatprep.subr.bf16.mxu0 %v1656
        %3571 = vmatpush1.bf16.msra.mxu0 %v1655
        %3572 = vmatprep.subr.bf16.mxu0 %v1672
        %3573 = vmatpush1.bf16.msra.mxu0 %v1671
        %3574 = vmatprep.subr.bf16.mxu0 %v1688
        %3575 = vmatpush1.bf16.msra.mxu0 %v1687
        %3576 = vmatprep.subr.bf16.mxu0 %v1704
        %3577 = vmatpush1.bf16.msra.mxu0 %v1703
        %3578 = vmatprep.subr.bf16.mxu0 %v1720
        %3579 = vmatpush1.bf16.msra.mxu0 %v1719
        %3580 = vmatprep.subr.bf16.mxu0 %v1736
        %3581 = vmatpush1.bf16.msra.mxu0 %v1735
        %3582 = vmatprep.subr.bf16.mxu0 %v1752
        %3583 = vmatpush1.bf16.msra.mxu0 %v1751
        %3584 = vmatprep.subr.bf16.mxu0 %v1768
        %3585 = vmatpush1.bf16.msra.mxu0 %v1767
        %3586 = vmatprep.subr.bf16.mxu0 %v1784
        %3587 = vmatpush1.bf16.msra.mxu0 %v1783
        %3588 = vmatprep.subr.bf16.mxu0 %v1800
        %3589 = vmatpush1.bf16.msra.mxu0 %v1799
        %3590 = vmatprep.subr.bf16.mxu0 %v1816
        %3591 = vmatpush1.bf16.msra.mxu0 %v1815
        %3592 = vmatprep.subr.bf16.mxu0 %v1832
        %3593 = vmatpush1.bf16.msra.mxu0 %v1831
        %3594 = vmatprep.mubr.bf16.mxu0 %v2360
        %3595 = vmatmul.mubr.bf16.gmra.mrb[0].mxu0 %v2359
        %v3596 = vpop.f32.mrb[0].mxu0
        %v3597 = vadd.f32 %v3556, %v3596
        %v3598 = vpop.f32.mrb[0].mxu0
        %v3599 = vadd.f32 %v3558, %v3598
        %v3600 = vpop.f32.mrb[0].mxu0
        %v3601 = vpop.f32.mrb[0].mxu0
        %3602 = vdwg.mxu0
        %3603 = vmatprep.subr.bf16.mxu0 %v1848
        %3604 = vmatpush1.bf16.msra.mxu0 %v1847
        %3605 = vmatprep.subr.bf16.mxu0 %v1864
        %3606 = vmatpush1.bf16.msra.mxu0 %v1863
        %3607 = vmatprep.subr.bf16.mxu0 %v1880
        %3608 = vmatpush1.bf16.msra.mxu0 %v1879
        %3609 = vmatprep.subr.bf16.mxu0 %v1896
        %3610 = vmatpush1.bf16.msra.mxu0 %v1895
        %3611 = vmatprep.subr.bf16.mxu0 %v1912
        %3612 = vmatpush1.bf16.msra.mxu0 %v1911
        %3613 = vmatprep.subr.bf16.mxu0 %v1928
        %3614 = vmatpush1.bf16.msra.mxu0 %v1927
        %3615 = vmatprep.subr.bf16.mxu0 %v1944
        %3616 = vmatpush1.bf16.msra.mxu0 %v1943
        %3617 = vmatprep.subr.bf16.mxu0 %v1960
        %3618 = vmatpush1.bf16.msra.mxu0 %v1959
        %3619 = vmatprep.subr.bf16.mxu0 %v1976
        %3620 = vmatpush1.bf16.msra.mxu0 %v1975
        %3621 = vmatprep.subr.bf16.mxu0 %v1992
        %3622 = vmatpush1.bf16.msra.mxu0 %v1991
        %3623 = vmatprep.subr.bf16.mxu0 %v2008
        %3624 = vmatpush1.bf16.msra.mxu0 %v2007
        %3625 = vmatprep.subr.bf16.mxu0 %v2024
        %3626 = vmatpush1.bf16.msra.mxu0 %v2023
        %3627 = vmatprep.subr.bf16.mxu0 %v2040
        %3628 = vmatpush1.bf16.msra.mxu0 %v2039
        %3629 = vmatprep.subr.bf16.mxu0 %v2056
        %3630 = vmatpush1.bf16.msra.mxu0 %v2055
        %3631 = vmatprep.subr.bf16.mxu0 %v2072
        %3632 = vmatpush1.bf16.msra.mxu0 %v2071
        %3633 = vmatprep.subr.bf16.mxu0 %v2088
        %3634 = vmatpush1.bf16.msra.mxu0 %v2087
        %3635 = vmatprep.mubr.bf16.mxu0 %v2362
        %3636 = vmatmul.mubr.bf16.gmra.mrb[0].mxu0 %v2361
        %v3637 = vpop.f32.mrb[0].mxu0
        %v3638 = vadd.f32 %v3597, %v3637
        %v3639 = vpop.f32.mrb[0].mxu0
        %v3640 = vadd.f32 %v3599, %v3639
        %v3641 = vpop.f32.mrb[0].mxu0
        %v3642 = vpop.f32.mrb[0].mxu0
        %3643 = vdwg.mxu0
        %3644 = vmatprep.subr.bf16.mxu0 %v2104
        %3645 = vmatpush1.bf16.msra.mxu0 %v2103
        %3646 = vmatprep.subr.bf16.mxu0 %v2120
        %3647 = vmatpush1.bf16.msra.mxu0 %v2119
        %3648 = vmatprep.subr.bf16.mxu0 %v2136
        %3649 = vmatpush1.bf16.msra.mxu0 %v2135
        %3650 = vmatprep.subr.bf16.mxu0 %v2152
        %3651 = vmatpush1.bf16.msra.mxu0 %v2151
        %3652 = vmatprep.subr.bf16.mxu0 %v2168
        %3653 = vmatpush1.bf16.msra.mxu0 %v2167
        %3654 = vmatprep.subr.bf16.mxu0 %v2184
        %3655 = vmatpush1.bf16.msra.mxu0 %v2183
        %3656 = vmatprep.subr.bf16.mxu0 %v2200
        %3657 = vmatpush1.bf16.msra.mxu0 %v2199
        %3658 = vmatprep.subr.bf16.mxu0 %v2216
        %3659 = vmatpush1.bf16.msra.mxu0 %v2215
        %3660 = vmatprep.subr.bf16.mxu0 %v2232
        %3661 = vmatpush1.bf16.msra.mxu0 %v2231
        %3662 = vmatprep.subr.bf16.mxu0 %v2248
        %3663 = vmatpush1.bf16.msra.mxu0 %v2247
        %3664 = vmatprep.subr.bf16.mxu0 %v2264
        %3665 = vmatpush1.bf16.msra.mxu0 %v2263
        %3666 = vmatprep.subr.bf16.mxu0 %v2280
        %3667 = vmatpush1.bf16.msra.mxu0 %v2279
        %3668 = vmatprep.subr.bf16.mxu0 %v2296
        %3669 = vmatpush1.bf16.msra.mxu0 %v2295
        %3670 = vmatprep.subr.bf16.mxu0 %v2312
        %3671 = vmatpush1.bf16.msra.mxu0 %v2311
        %3672 = vmatprep.subr.bf16.mxu0 %v2328
        %3673 = vmatpush1.bf16.msra.mxu0 %v2327
        %3674 = vmatprep.subr.bf16.mxu0 %v2344
        %3675 = vmatpush1.bf16.msra.mxu0 %v2343
        %3676 = vmatprep.mubr.bf16.mxu0 %v2364
        %3677 = vmatmul.mubr.bf16.gmra.mrb[0].mxu0 %v2363
        %v3678 = vpop.f32.mrb[0].mxu0
        %v3679 = vadd.f32 %v3638, %v3678
        %v3680 = vpop.f32.mrb[0].mxu0
        %v3681 = vadd.f32 %v3640, %v3680
        %v3682 = vpop.f32.mrb[0].mxu0
        %v3683 = vpop.f32.mrb[0].mxu0
        %3684 = vdwg.mxu0
        %v3685 = vld [vmem:[%s375] sm:$0xff]
        %v3686 = vld [vmem:[%s375 + $0x8] sm:$0xff]
        %v3689 = vlaneseq
        %v3690 = vshrl.u32 %v3689, 7
        %v3691 = vsub.s32 0, %v3690
        %v3692 = vrot.slane %v3685, %v3691
        %v3693 = vlaneseq
        %v3694 = vshrl.u32 %v3693, 7
        %v3695 = vsub.s32 1, %v3694
        %v3696 = vrot.slane %v3685, %v3695
        %v3697 = vlaneseq
        %v3698 = vshrl.u32 %v3697, 7
        %v3699 = vsub.s32 2, %v3698
        %v3700 = vrot.slane %v3685, %v3699
        %v3701 = vlaneseq
        %v3702 = vshrl.u32 %v3701, 7
        %v3703 = vsub.s32 3, %v3702
        %v3704 = vrot.slane %v3685, %v3703
        %v3705 = vlaneseq
        %v3706 = vshrl.u32 %v3705, 7
        %v3707 = vsub.s32 4, %v3706
        %v3708 = vrot.slane %v3685, %v3707
        %v3709 = vlaneseq
        %v3710 = vshrl.u32 %v3709, 7
        %v3711 = vsub.s32 5, %v3710
        %v3712 = vrot.slane %v3685, %v3711
        %v3713 = vlaneseq
        %v3714 = vshrl.u32 %v3713, 7
        %v3715 = vsub.s32 6, %v3714
        %v3716 = vrot.slane %v3685, %v3715
        %v3717 = vlaneseq
        %v3718 = vshrl.u32 %v3717, 7
        %v3719 = vsub.s32 7, %v3718
        %v3720 = vrot.slane %v3685, %v3719
        %v3721 = vlaneseq
        %v3722 = vshrl.u32 %v3721, 7
        %v3723 = vsub.s32 0, %v3722
        %v3724 = vrot.slane %v3686, %v3723
        %v3725 = vlaneseq
        %v3726 = vshrl.u32 %v3725, 7
        %v3727 = vsub.s32 1, %v3726
        %v3728 = vrot.slane %v3686, %v3727
        %v3729 = vlaneseq
        %v3730 = vshrl.u32 %v3729, 7
        %v3731 = vsub.s32 2, %v3730
        %v3732 = vrot.slane %v3686, %v3731
        %v3733 = vlaneseq
        %v3734 = vshrl.u32 %v3733, 7
        %v3735 = vsub.s32 3, %v3734
        %v3736 = vrot.slane %v3686, %v3735
        %v3737 = vlaneseq
        %v3738 = vshrl.u32 %v3737, 7
        %v3739 = vsub.s32 4, %v3738
        %v3740 = vrot.slane %v3686, %v3739
        %v3741 = vlaneseq
        %v3742 = vshrl.u32 %v3741, 7
        %v3743 = vsub.s32 5, %v3742
        %v3744 = vrot.slane %v3686, %v3743
        %v3745 = vlaneseq
        %v3746 = vshrl.u32 %v3745, 7
        %v3747 = vsub.s32 6, %v3746
        %v3748 = vrot.slane %v3686, %v3747
        %v3749 = vlaneseq
        %v3750 = vshrl.u32 %v3749, 7
        %v3751 = vsub.s32 7, %v3750
        %v3752 = vrot.slane %v3686, %v3751
        %v3769 = vmul.f32 %v2531, %v3692
        %v3770 = vmul.f32 %v2533, %v3696
        %v3771 = vmul.f32 %v2695, %v3700
        %v3772 = vmul.f32 %v2697, %v3704
        %v3773 = vmul.f32 %v2859, %v3708
        %v3774 = vmul.f32 %v2861, %v3712
        %v3775 = vmul.f32 %v3023, %v3716
        %v3776 = vmul.f32 %v3025, %v3720
        %v3777 = vmul.f32 %v3187, %v3724
        %v3778 = vmul.f32 %v3189, %v3728
        %v3779 = vmul.f32 %v3351, %v3732
        %v3780 = vmul.f32 %v3353, %v3736
        %v3781 = vmul.f32 %v3515, %v3740
        %v3782 = vmul.f32 %v3517, %v3744
        %v3783 = vmul.f32 %v3679, %v3748
        %v3784 = vmul.f32 %v3681, %v3752
        %v3785 = vld [vmem:[%s384] sm:$0xff]
        %v3786 = vld [vmem:[%s384 + $0x8] sm:$0xff]
        %v3789 = vlaneseq
        %v3790 = vshrl.u32 %v3789, 7
        %v3791 = vsub.s32 0, %v3790
        %v3792 = vrot.slane %v3785, %v3791
        %v3793 = vlaneseq
        %v3794 = vshrl.u32 %v3793, 7
        %v3795 = vsub.s32 1, %v3794
        %v3796 = vrot.slane %v3785, %v3795
        %v3797 = vlaneseq
        %v3798 = vshrl.u32 %v3797, 7
        %v3799 = vsub.s32 2, %v3798
        %v3800 = vrot.slane %v3785, %v3799
        %v3801 = vlaneseq
        %v3802 = vshrl.u32 %v3801, 7
        %v3803 = vsub.s32 3, %v3802
        %v3804 = vrot.slane %v3785, %v3803
        %v3805 = vlaneseq
        %v3806 = vshrl.u32 %v3805, 7
        %v3807 = vsub.s32 4, %v3806
        %v3808 = vrot.slane %v3785, %v3807
        %v3809 = vlaneseq
        %v3810 = vshrl.u32 %v3809, 7
        %v3811 = vsub.s32 5, %v3810
        %v3812 = vrot.slane %v3785, %v3811
        %v3813 = vlaneseq
        %v3814 = vshrl.u32 %v3813, 7
        %v3815 = vsub.s32 6, %v3814
        %v3816 = vrot.slane %v3785, %v3815
        %v3817 = vlaneseq
        %v3818 = vshrl.u32 %v3817, 7
        %v3819 = vsub.s32 7, %v3818
        %v3820 = vrot.slane %v3785, %v3819
        %v3821 = vlaneseq
        %v3822 = vshrl.u32 %v3821, 7
        %v3823 = vsub.s32 0, %v3822
        %v3824 = vrot.slane %v3786, %v3823
        %v3825 = vlaneseq
        %v3826 = vshrl.u32 %v3825, 7
        %v3827 = vsub.s32 1, %v3826
        %v3828 = vrot.slane %v3786, %v3827
        %v3829 = vlaneseq
        %v3830 = vshrl.u32 %v3829, 7
        %v3831 = vsub.s32 2, %v3830
        %v3832 = vrot.slane %v3786, %v3831
        %v3833 = vlaneseq
        %v3834 = vshrl.u32 %v3833, 7
        %v3835 = vsub.s32 3, %v3834
        %v3836 = vrot.slane %v3786, %v3835
        %v3837 = vlaneseq
        %v3838 = vshrl.u32 %v3837, 7
        %v3839 = vsub.s32 4, %v3838
        %v3840 = vrot.slane %v3786, %v3839
        %v3841 = vlaneseq
        %v3842 = vshrl.u32 %v3841, 7
        %v3843 = vsub.s32 5, %v3842
        %v3844 = vrot.slane %v3786, %v3843
        %v3845 = vlaneseq
        %v3846 = vshrl.u32 %v3845, 7
        %v3847 = vsub.s32 6, %v3846
        %v3848 = vrot.slane %v3786, %v3847
        %v3849 = vlaneseq
        %v3850 = vshrl.u32 %v3849, 7
        %v3851 = vsub.s32 7, %v3850
        %v3852 = vrot.slane %v3786, %v3851
        %v3869 = vadd.f32 %v3769, %v3792
        %v3870 = vadd.f32 %v3770, %v3796
        %v3871 = vadd.f32 %v3771, %v3800
        %v3872 = vadd.f32 %v3772, %v3804
        %v3873 = vadd.f32 %v3773, %v3808
        %v3874 = vadd.f32 %v3774, %v3812
        %v3875 = vadd.f32 %v3775, %v3816
        %v3876 = vadd.f32 %v3776, %v3820
        %v3877 = vadd.f32 %v3777, %v3824
        %v3878 = vadd.f32 %v3778, %v3828
        %v3879 = vadd.f32 %v3779, %v3832
        %v3880 = vadd.f32 %v3780, %v3836
        %v3881 = vadd.f32 %v3781, %v3840
        %v3882 = vadd.f32 %v3782, %v3844
        %v3883 = vadd.f32 %v3783, %v3848
        %v3884 = vadd.f32 %v3784, %v3852
        %v3885 = vmax.f32 %v3869, 0.0
        %v3886 = vmax.f32 %v3870, 0.0
        %v3887 = vmax.f32 %v3871, 0.0
        %v3888 = vmax.f32 %v3872, 0.0
        %v3889 = vmax.f32 %v3873, 0.0
        %v3890 = vmax.f32 %v3874, 0.0
        %v3891 = vmax.f32 %v3875, 0.0
        %v3892 = vmax.f32 %v3876, 0.0
        %v3893 = vmax.f32 %v3877, 0.0
        %v3894 = vmax.f32 %v3878, 0.0
        %v3895 = vmax.f32 %v3879, 0.0
        %v3896 = vmax.f32 %v3880, 0.0
        %v3897 = vmax.f32 %v3881, 0.0
        %v3898 = vmax.f32 %v3882, 0.0
        %v3899 = vmax.f32 %v3883, 0.0
        %v3900 = vmax.f32 %v3884, 0.0
        %v3901 = vpack.c.bf16 %v3885, %v3885
        %v3902 = vpack.c.bf16 %v3886, %v3886
        %v3903 = vpack.c.bf16 %v3887, %v3887
        %v3904 = vpack.c.bf16 %v3888, %v3888
        %v3905 = vpack.c.bf16 %v3889, %v3889
        %v3906 = vpack.c.bf16 %v3890, %v3890
        %v3907 = vpack.c.bf16 %v3891, %v3891
        %v3908 = vpack.c.bf16 %v3892, %v3892
        %v3909 = vpack.c.bf16 %v3893, %v3893
        %v3910 = vpack.c.bf16 %v3894, %v3894
        %v3911 = vpack.c.bf16 %v3895, %v3895
        %v3912 = vpack.c.bf16 %v3896, %v3896
        %v3913 = vpack.c.bf16 %v3897, %v3897
        %v3914 = vpack.c.bf16 %v3898, %v3898
        %v3915 = vpack.c.bf16 %v3899, %v3899
        %v3916 = vpack.c.bf16 %v3900, %v3900
        %v3917 = vld [vmem:[%s447] sm:$0xff]
        %v3918 = vld [vmem:[%s441] sm:$0xf]
        %v3919 = vld [vmem:[%s441 + $0x4] sm:$0xf]
        %v3920 = vld [vmem:[%s441 + $0x8] sm:$0xf]
        %v3921 = vld [vmem:[%s441 + $0xc] sm:$0xf]
        %v3922 = vld [vmem:[%s441 + $0x10] sm:$0xf]
        %v3923 = vld [vmem:[%s441 + $0x14] sm:$0xf]
        %v3924 = vld [vmem:[%s441 + $0x18] sm:$0xf]
        %v3925 = vld [vmem:[%s441 + $0x1c] sm:$0xf]
        %v3926 = vld [vmem:[%s441 + $0x20] sm:$0xf]
        %v3927 = vld [vmem:[%s441 + $0x24] sm:$0xf]
        %v3928 = vld [vmem:[%s441 + $0x28] sm:$0xf]
        %v3929 = vld [vmem:[%s441 + $0x2c] sm:$0xf]
        %v3930 = vld [vmem:[%s441 + $0x30] sm:$0xf]
        %v3931 = vld [vmem:[%s441 + $0x34] sm:$0xf]
        %v3932 = vld [vmem:[%s441 + $0x38] sm:$0xf]
        %v3933 = vld [vmem:[%s441 + $0x3c] sm:$0xf]
        %v3934 = vld [vmem:[%s441 + $0x40] sm:$0xf]
        %v3935 = vld [vmem:[%s441 + $0x44] sm:$0xf]
        %v3936 = vld [vmem:[%s441 + $0x48] sm:$0xf]
        %v3937 = vld [vmem:[%s441 + $0x4c] sm:$0xf]
        %v3938 = vld [vmem:[%s441 + $0x50] sm:$0xf]
        %v3939 = vld [vmem:[%s441 + $0x54] sm:$0xf]
        %v3940 = vld [vmem:[%s441 + $0x58] sm:$0xf]
        %v3941 = vld [vmem:[%s441 + $0x5c] sm:$0xf]
        %v3942 = vld [vmem:[%s441 + $0x60] sm:$0xf]
        %v3943 = vld [vmem:[%s441 + $0x64] sm:$0xf]
        %v3944 = vld [vmem:[%s441 + $0x68] sm:$0xf]
        %v3945 = vld [vmem:[%s441 + $0x6c] sm:$0xf]
        %v3946 = vld [vmem:[%s441 + $0x70] sm:$0xf]
        %v3947 = vld [vmem:[%s441 + $0x74] sm:$0xf]
        %v3948 = vld [vmem:[%s441 + $0x78] sm:$0xf]
        %v3949 = vld [vmem:[%s441 + $0x7c] sm:$0xf]
        %v3950 = vld [vmem:[%s441 + $0x80] sm:$0xf]
        %v3951 = vld [vmem:[%s441 + $0x84] sm:$0xf]
        %v3952 = vld [vmem:[%s441 + $0x88] sm:$0xf]
        %v3953 = vld [vmem:[%s441 + $0x8c] sm:$0xf]
        %v3954 = vld [vmem:[%s441 + $0x90] sm:$0xf]
        %v3955 = vld [vmem:[%s441 + $0x94] sm:$0xf]
        %v3956 = vld [vmem:[%s441 + $0x98] sm:$0xf]
        %v3957 = vld [vmem:[%s441 + $0x9c] sm:$0xf]
        %v3958 = vld [vmem:[%s441 + $0xa0] sm:$0xf]
        %v3959 = vld [vmem:[%s441 + $0xa4] sm:$0xf]
        %v3960 = vld [vmem:[%s441 + $0xa8] sm:$0xf]
        %v3961 = vld [vmem:[%s441 + $0xac] sm:$0xf]
        %v3962 = vld [vmem:[%s441 + $0xb0] sm:$0xf]
        %v3963 = vld [vmem:[%s441 + $0xb4] sm:$0xf]
        %v3964 = vld [vmem:[%s441 + $0xb8] sm:$0xf]
        %v3965 = vld [vmem:[%s441 + $0xbc] sm:$0xf]
        %v3966 = vld [vmem:[%s441 + $0xc0] sm:$0xf]
        %v3967 = vld [vmem:[%s441 + $0xc4] sm:$0xf]
        %v3968 = vld [vmem:[%s441 + $0xc8] sm:$0xf]
        %v3969 = vld [vmem:[%s441 + $0xcc] sm:$0xf]
        %v3970 = vld [vmem:[%s441 + $0xd0] sm:$0xf]
        %v3971 = vld [vmem:[%s441 + $0xd4] sm:$0xf]
        %v3972 = vld [vmem:[%s441 + $0xd8] sm:$0xf]
        %v3973 = vld [vmem:[%s441 + $0xdc] sm:$0xf]
        %v3974 = vld [vmem:[%s441 + $0xe0] sm:$0xf]
        %v3975 = vld [vmem:[%s441 + $0xe4] sm:$0xf]
        %v3976 = vld [vmem:[%s441 + $0xe8] sm:$0xf]
        %v3977 = vld [vmem:[%s441 + $0xec] sm:$0xf]
        %v3978 = vld [vmem:[%s441 + $0xf0] sm:$0xf]
        %v3979 = vld [vmem:[%s441 + $0xf4] sm:$0xf]
        %v3980 = vld [vmem:[%s441 + $0xf8] sm:$0xf]
        %v3981 = vld [vmem:[%s441 + $0xfc] sm:$0xf]
        %v3982 = vld [vmem:[%s441 + $0x100] sm:$0xf]
        %v3983 = vld [vmem:[%s441 + $0x104] sm:$0xf]
        %v3984 = vld [vmem:[%s441 + $0x108] sm:$0xf]
        %v3985 = vld [vmem:[%s441 + $0x10c] sm:$0xf]
        %v3986 = vld [vmem:[%s441 + $0x110] sm:$0xf]
        %v3987 = vld [vmem:[%s441 + $0x114] sm:$0xf]
        %v3988 = vld [vmem:[%s441 + $0x118] sm:$0xf]
        %v3989 = vld [vmem:[%s441 + $0x11c] sm:$0xf]
        %v3990 = vld [vmem:[%s441 + $0x120] sm:$0xf]
        %v3991 = vld [vmem:[%s441 + $0x124] sm:$0xf]
        %v3992 = vld [vmem:[%s441 + $0x128] sm:$0xf]
        %v3993 = vld [vmem:[%s441 + $0x12c] sm:$0xf]
        %v3994 = vld [vmem:[%s441 + $0x130] sm:$0xf]
        %v3995 = vld [vmem:[%s441 + $0x134] sm:$0xf]
        %v3996 = vld [vmem:[%s441 + $0x138] sm:$0xf]
        %v3997 = vld [vmem:[%s441 + $0x13c] sm:$0xf]
        %v3998 = vld [vmem:[%s441 + $0x140] sm:$0xf]
        %v3999 = vld [vmem:[%s441 + $0x144] sm:$0xf]
        %v4000 = vld [vmem:[%s441 + $0x148] sm:$0xf]
        %v4001 = vld [vmem:[%s441 + $0x14c] sm:$0xf]
        %v4002 = vld [vmem:[%s441 + $0x150] sm:$0xf]
        %v4003 = vld [vmem:[%s441 + $0x154] sm:$0xf]
        %v4004 = vld [vmem:[%s441 + $0x158] sm:$0xf]
        %v4005 = vld [vmem:[%s441 + $0x15c] sm:$0xf]
        %v4006 = vld [vmem:[%s441 + $0x160] sm:$0xf]
        %v4007 = vld [vmem:[%s441 + $0x164] sm:$0xf]
        %v4008 = vld [vmem:[%s441 + $0x168] sm:$0xf]
        %v4009 = vld [vmem:[%s441 + $0x16c] sm:$0xf]
        %v4010 = vld [vmem:[%s441 + $0x170] sm:$0xf]
        %v4011 = vld [vmem:[%s441 + $0x174] sm:$0xf]
        %v4012 = vld [vmem:[%s441 + $0x178] sm:$0xf]
        %v4013 = vld [vmem:[%s441 + $0x17c] sm:$0xf]
        %v4014 = vld [vmem:[%s441 + $0x180] sm:$0xf]
        %v4015 = vld [vmem:[%s441 + $0x184] sm:$0xf]
        %v4016 = vld [vmem:[%s441 + $0x188] sm:$0xf]
        %v4017 = vld [vmem:[%s441 + $0x18c] sm:$0xf]
        %v4018 = vld [vmem:[%s441 + $0x190] sm:$0xf]
        %v4019 = vld [vmem:[%s441 + $0x194] sm:$0xf]
        %v4020 = vld [vmem:[%s441 + $0x198] sm:$0xf]
        %v4021 = vld [vmem:[%s441 + $0x19c] sm:$0xf]
        %v4022 = vld [vmem:[%s441 + $0x1a0] sm:$0xf]
        %v4023 = vld [vmem:[%s441 + $0x1a4] sm:$0xf]
        %v4024 = vld [vmem:[%s441 + $0x1a8] sm:$0xf]
        %v4025 = vld [vmem:[%s441 + $0x1ac] sm:$0xf]
        %v4026 = vld [vmem:[%s441 + $0x1b0] sm:$0xf]
        %v4027 = vld [vmem:[%s441 + $0x1b4] sm:$0xf]
        %v4028 = vld [vmem:[%s441 + $0x1b8] sm:$0xf]
        %v4029 = vld [vmem:[%s441 + $0x1bc] sm:$0xf]
        %v4030 = vld [vmem:[%s441 + $0x1c0] sm:$0xf]
        %v4031 = vld [vmem:[%s441 + $0x1c4] sm:$0xf]
        %v4032 = vld [vmem:[%s441 + $0x1c8] sm:$0xf]
        %v4033 = vld [vmem:[%s441 + $0x1cc] sm:$0xf]
        %v4034 = vld [vmem:[%s441 + $0x1d0] sm:$0xf]
        %v4035 = vld [vmem:[%s441 + $0x1d4] sm:$0xf]
        %v4036 = vld [vmem:[%s441 + $0x1d8] sm:$0xf]
        %v4037 = vld [vmem:[%s441 + $0x1dc] sm:$0xf]
        %v4038 = vld [vmem:[%s441 + $0x1e0] sm:$0xf]
        %v4039 = vld [vmem:[%s441 + $0x1e4] sm:$0xf]
        %v4040 = vld [vmem:[%s441 + $0x1e8] sm:$0xf]
        %v4041 = vld [vmem:[%s441 + $0x1ec] sm:$0xf]
        %v4042 = vld [vmem:[%s441 + $0x1f0] sm:$0xf]
        %v4043 = vld [vmem:[%s441 + $0x1f4] sm:$0xf]
        %v4044 = vld [vmem:[%s441 + $0x1f8] sm:$0xf]
        %v4045 = vld [vmem:[%s441 + $0x1fc] sm:$0xf]
        %v4046 = vld [vmem:[%s441 + $0x200] sm:$0xf]
        %v4047 = vld [vmem:[%s441 + $0x204] sm:$0xf]
        %v4048 = vld [vmem:[%s441 + $0x208] sm:$0xf]
        %v4049 = vld [vmem:[%s441 + $0x20c] sm:$0xf]
        %v4050 = vld [vmem:[%s441 + $0x210] sm:$0xf]
        %v4051 = vld [vmem:[%s441 + $0x214] sm:$0xf]
        %v4052 = vld [vmem:[%s441 + $0x218] sm:$0xf]
        %v4053 = vld [vmem:[%s441 + $0x21c] sm:$0xf]
        %v4054 = vld [vmem:[%s441 + $0x220] sm:$0xf]
        %v4055 = vld [vmem:[%s441 + $0x224] sm:$0xf]
        %v4056 = vld [vmem:[%s441 + $0x228] sm:$0xf]
        %v4057 = vld [vmem:[%s441 + $0x22c] sm:$0xf]
        %v4058 = vld [vmem:[%s441 + $0x230] sm:$0xf]
        %v4059 = vld [vmem:[%s441 + $0x234] sm:$0xf]
        %v4060 = vld [vmem:[%s441 + $0x238] sm:$0xf]
        %v4061 = vld [vmem:[%s441 + $0x23c] sm:$0xf]
        %v4062 = vld [vmem:[%s441 + $0x240] sm:$0xf]
        %v4063 = vld [vmem:[%s441 + $0x244] sm:$0xf]
        %v4064 = vld [vmem:[%s441 + $0x248] sm:$0xf]
        %v4065 = vld [vmem:[%s441 + $0x24c] sm:$0xf]
        %v4066 = vld [vmem:[%s441 + $0x250] sm:$0xf]
        %v4067 = vld [vmem:[%s441 + $0x254] sm:$0xf]
        %v4068 = vld [vmem:[%s441 + $0x258] sm:$0xf]
        %v4069 = vld [vmem:[%s441 + $0x25c] sm:$0xf]
        %v4070 = vld [vmem:[%s441 + $0x260] sm:$0xf]
        %v4071 = vld [vmem:[%s441 + $0x264] sm:$0xf]
        %v4072 = vld [vmem:[%s441 + $0x268] sm:$0xf]
        %v4073 = vld [vmem:[%s441 + $0x26c] sm:$0xf]
        %v4074 = vld [vmem:[%s441 + $0x270] sm:$0xf]
        %v4075 = vld [vmem:[%s441 + $0x274] sm:$0xf]
        %v4076 = vld [vmem:[%s441 + $0x278] sm:$0xf]
        %v4077 = vld [vmem:[%s441 + $0x27c] sm:$0xf]
        %v4078 = vld [vmem:[%s441 + $0x280] sm:$0xf]
        %v4079 = vld [vmem:[%s441 + $0x284] sm:$0xf]
        %v4080 = vld [vmem:[%s441 + $0x288] sm:$0xf]
        %v4081 = vld [vmem:[%s441 + $0x28c] sm:$0xf]
        %v4082 = vld [vmem:[%s441 + $0x290] sm:$0xf]
        %v4083 = vld [vmem:[%s441 + $0x294] sm:$0xf]
        %v4084 = vld [vmem:[%s441 + $0x298] sm:$0xf]
        %v4085 = vld [vmem:[%s441 + $0x29c] sm:$0xf]
        %v4086 = vld [vmem:[%s441 + $0x2a0] sm:$0xf]
        %v4087 = vld [vmem:[%s441 + $0x2a4] sm:$0xf]
        %v4088 = vld [vmem:[%s441 + $0x2a8] sm:$0xf]
        %v4089 = vld [vmem:[%s441 + $0x2ac] sm:$0xf]
        %v4090 = vld [vmem:[%s441 + $0x2b0] sm:$0xf]
        %v4091 = vld [vmem:[%s441 + $0x2b4] sm:$0xf]
        %v4092 = vld [vmem:[%s441 + $0x2b8] sm:$0xf]
        %v4093 = vld [vmem:[%s441 + $0x2bc] sm:$0xf]
        %v4094 = vld [vmem:[%s441 + $0x2c0] sm:$0xf]
        %v4095 = vld [vmem:[%s441 + $0x2c4] sm:$0xf]
        %v4096 = vld [vmem:[%s441 + $0x2c8] sm:$0xf]
        %v4097 = vld [vmem:[%s441 + $0x2cc] sm:$0xf]
        %v4098 = vld [vmem:[%s441 + $0x2d0] sm:$0xf]
        %v4099 = vld [vmem:[%s441 + $0x2d4] sm:$0xf]
        %v4100 = vld [vmem:[%s441 + $0x2d8] sm:$0xf]
        %v4101 = vld [vmem:[%s441 + $0x2dc] sm:$0xf]
        %v4102 = vld [vmem:[%s441 + $0x2e0] sm:$0xf]
        %v4103 = vld [vmem:[%s441 + $0x2e4] sm:$0xf]
        %v4104 = vld [vmem:[%s441 + $0x2e8] sm:$0xf]
        %v4105 = vld [vmem:[%s441 + $0x2ec] sm:$0xf]
        %v4106 = vld [vmem:[%s441 + $0x2f0] sm:$0xf]
        %v4107 = vld [vmem:[%s441 + $0x2f4] sm:$0xf]
        %v4108 = vld [vmem:[%s441 + $0x2f8] sm:$0xf]
        %v4109 = vld [vmem:[%s441 + $0x2fc] sm:$0xf]
        %v4110 = vld [vmem:[%s441 + $0x300] sm:$0xf]
        %v4111 = vld [vmem:[%s441 + $0x304] sm:$0xf]
        %v4112 = vld [vmem:[%s441 + $0x308] sm:$0xf]
        %v4113 = vld [vmem:[%s441 + $0x30c] sm:$0xf]
        %v4114 = vld [vmem:[%s441 + $0x310] sm:$0xf]
        %v4115 = vld [vmem:[%s441 + $0x314] sm:$0xf]
        %v4116 = vld [vmem:[%s441 + $0x318] sm:$0xf]
        %v4117 = vld [vmem:[%s441 + $0x31c] sm:$0xf]
        %v4118 = vld [vmem:[%s441 + $0x320] sm:$0xf]
        %v4119 = vld [vmem:[%s441 + $0x324] sm:$0xf]
        %v4120 = vld [vmem:[%s441 + $0x328] sm:$0xf]
        %v4121 = vld [vmem:[%s441 + $0x32c] sm:$0xf]
        %v4122 = vld [vmem:[%s441 + $0x330] sm:$0xf]
        %v4123 = vld [vmem:[%s441 + $0x334] sm:$0xf]
        %v4124 = vld [vmem:[%s441 + $0x338] sm:$0xf]
        %v4125 = vld [vmem:[%s441 + $0x33c] sm:$0xf]
        %v4126 = vld [vmem:[%s441 + $0x340] sm:$0xf]
        %v4127 = vld [vmem:[%s441 + $0x344] sm:$0xf]
        %v4128 = vld [vmem:[%s441 + $0x348] sm:$0xf]
        %v4129 = vld [vmem:[%s441 + $0x34c] sm:$0xf]
        %v4130 = vld [vmem:[%s441 + $0x350] sm:$0xf]
        %v4131 = vld [vmem:[%s441 + $0x354] sm:$0xf]
        %v4132 = vld [vmem:[%s441 + $0x358] sm:$0xf]
        %v4133 = vld [vmem:[%s441 + $0x35c] sm:$0xf]
        %v4134 = vld [vmem:[%s441 + $0x360] sm:$0xf]
        %v4135 = vld [vmem:[%s441 + $0x364] sm:$0xf]
        %v4136 = vld [vmem:[%s441 + $0x368] sm:$0xf]
        %v4137 = vld [vmem:[%s441 + $0x36c] sm:$0xf]
        %v4138 = vld [vmem:[%s441 + $0x370] sm:$0xf]
        %v4139 = vld [vmem:[%s441 + $0x374] sm:$0xf]
        %v4140 = vld [vmem:[%s441 + $0x378] sm:$0xf]
        %v4141 = vld [vmem:[%s441 + $0x37c] sm:$0xf]
        %v4142 = vld [vmem:[%s441 + $0x380] sm:$0xf]
        %v4143 = vld [vmem:[%s441 + $0x384] sm:$0xf]
        %v4144 = vld [vmem:[%s441 + $0x388] sm:$0xf]
        %v4145 = vld [vmem:[%s441 + $0x38c] sm:$0xf]
        %v4146 = vld [vmem:[%s441 + $0x390] sm:$0xf]
        %v4147 = vld [vmem:[%s441 + $0x394] sm:$0xf]
        %v4148 = vld [vmem:[%s441 + $0x398] sm:$0xf]
        %v4149 = vld [vmem:[%s441 + $0x39c] sm:$0xf]
        %v4150 = vld [vmem:[%s441 + $0x3a0] sm:$0xf]
        %v4151 = vld [vmem:[%s441 + $0x3a4] sm:$0xf]
        %v4152 = vld [vmem:[%s441 + $0x3a8] sm:$0xf]
        %v4153 = vld [vmem:[%s441 + $0x3ac] sm:$0xf]
        %v4154 = vld [vmem:[%s441 + $0x3b0] sm:$0xf]
        %v4155 = vld [vmem:[%s441 + $0x3b4] sm:$0xf]
        %v4156 = vld [vmem:[%s441 + $0x3b8] sm:$0xf]
        %v4157 = vld [vmem:[%s441 + $0x3bc] sm:$0xf]
        %v4158 = vld [vmem:[%s441 + $0x3c0] sm:$0xf]
        %v4159 = vld [vmem:[%s441 + $0x3c4] sm:$0xf]
        %v4160 = vld [vmem:[%s441 + $0x3c8] sm:$0xf]
        %v4161 = vld [vmem:[%s441 + $0x3cc] sm:$0xf]
        %v4162 = vld [vmem:[%s441 + $0x3d0] sm:$0xf]
        %v4163 = vld [vmem:[%s441 + $0x3d4] sm:$0xf]
        %v4164 = vld [vmem:[%s441 + $0x3d8] sm:$0xf]
        %v4165 = vld [vmem:[%s441 + $0x3dc] sm:$0xf]
        %v4166 = vld [vmem:[%s441 + $0x3e0] sm:$0xf]
        %v4167 = vld [vmem:[%s441 + $0x3e4] sm:$0xf]
        %v4168 = vld [vmem:[%s441 + $0x3e8] sm:$0xf]
        %v4169 = vld [vmem:[%s441 + $0x3ec] sm:$0xf]
        %v4170 = vld [vmem:[%s441 + $0x3f0] sm:$0xf]
        %v4171 = vld [vmem:[%s441 + $0x3f4] sm:$0xf]
        %v4172 = vld [vmem:[%s441 + $0x3f8] sm:$0xf]
        %v4173 = vld [vmem:[%s441 + $0x3fc] sm:$0xf]
        %v4430 = vunpack.c.l.b16 %v3918
        %v4431 = vunpack.c.l.b16 %v3919
        %v4432 = vunpack.c.l.b16 %v3920
        %v4433 = vunpack.c.l.b16 %v3921
        %v4434 = vunpack.c.l.b16 %v3922
        %v4435 = vunpack.c.l.b16 %v3923
        %v4436 = vunpack.c.l.b16 %v3924
        %v4437 = vunpack.c.l.b16 %v3925
        %v4438 = vunpack.c.l.b16 %v3926
        %v4439 = vunpack.c.l.b16 %v3927
        %v4440 = vunpack.c.l.b16 %v3928
        %v4441 = vunpack.c.l.b16 %v3929
        %v4442 = vunpack.c.l.b16 %v3930
        %v4443 = vunpack.c.l.b16 %v3931
        %v4444 = vunpack.c.l.b16 %v3932
        %v4445 = vunpack.c.l.b16 %v3933
        %v4446 = vunpack.c.l.b16 %v3934
        %v4447 = vunpack.c.l.b16 %v3935
        %v4448 = vunpack.c.l.b16 %v3936
        %v4449 = vunpack.c.l.b16 %v3937
        %v4450 = vunpack.c.l.b16 %v3938
        %v4451 = vunpack.c.l.b16 %v3939
        %v4452 = vunpack.c.l.b16 %v3940
        %v4453 = vunpack.c.l.b16 %v3941
        %v4454 = vunpack.c.l.b16 %v3942
        %v4455 = vunpack.c.l.b16 %v3943
        %v4456 = vunpack.c.l.b16 %v3944
        %v4457 = vunpack.c.l.b16 %v3945
        %v4458 = vunpack.c.l.b16 %v3946
        %v4459 = vunpack.c.l.b16 %v3947
        %v4460 = vunpack.c.l.b16 %v3948
        %v4461 = vunpack.c.l.b16 %v3949
        %v4462 = vunpack.c.l.b16 %v3950
        %v4463 = vunpack.c.l.b16 %v3951
        %v4464 = vunpack.c.l.b16 %v3952
        %v4465 = vunpack.c.l.b16 %v3953
        %v4466 = vunpack.c.l.b16 %v3954
        %v4467 = vunpack.c.l.b16 %v3955
        %v4468 = vunpack.c.l.b16 %v3956
        %v4469 = vunpack.c.l.b16 %v3957
        %v4470 = vunpack.c.l.b16 %v3958
        %v4471 = vunpack.c.l.b16 %v3959
        %v4472 = vunpack.c.l.b16 %v3960
        %v4473 = vunpack.c.l.b16 %v3961
        %v4474 = vunpack.c.l.b16 %v3962
        %v4475 = vunpack.c.l.b16 %v3963
        %v4476 = vunpack.c.l.b16 %v3964
        %v4477 = vunpack.c.l.b16 %v3965
        %v4478 = vunpack.c.l.b16 %v3966
        %v4479 = vunpack.c.l.b16 %v3967
        %v4480 = vunpack.c.l.b16 %v3968
        %v4481 = vunpack.c.l.b16 %v3969
        %v4482 = vunpack.c.l.b16 %v3970
        %v4483 = vunpack.c.l.b16 %v3971
        %v4484 = vunpack.c.l.b16 %v3972
        %v4485 = vunpack.c.l.b16 %v3973
        %v4486 = vunpack.c.l.b16 %v3974
        %v4487 = vunpack.c.l.b16 %v3975
        %v4488 = vunpack.c.l.b16 %v3976
        %v4489 = vunpack.c.l.b16 %v3977
        %v4490 = vunpack.c.l.b16 %v3978
        %v4491 = vunpack.c.l.b16 %v3979
        %v4492 = vunpack.c.l.b16 %v3980
        %v4493 = vunpack.c.l.b16 %v3981
        %v4494 = vunpack.c.l.b16 %v3982
        %v4495 = vunpack.c.l.b16 %v3983
        %v4496 = vunpack.c.l.b16 %v3984
        %v4497 = vunpack.c.l.b16 %v3985
        %v4498 = vunpack.c.l.b16 %v3986
        %v4499 = vunpack.c.l.b16 %v3987
        %v4500 = vunpack.c.l.b16 %v3988
        %v4501 = vunpack.c.l.b16 %v3989
        %v4502 = vunpack.c.l.b16 %v3990
        %v4503 = vunpack.c.l.b16 %v3991
        %v4504 = vunpack.c.l.b16 %v3992
        %v4505 = vunpack.c.l.b16 %v3993
        %v4506 = vunpack.c.l.b16 %v3994
        %v4507 = vunpack.c.l.b16 %v3995
        %v4508 = vunpack.c.l.b16 %v3996
        %v4509 = vunpack.c.l.b16 %v3997
        %v4510 = vunpack.c.l.b16 %v3998
        %v4511 = vunpack.c.l.b16 %v3999
        %v4512 = vunpack.c.l.b16 %v4000
        %v4513 = vunpack.c.l.b16 %v4001
        %v4514 = vunpack.c.l.b16 %v4002
        %v4515 = vunpack.c.l.b16 %v4003
        %v4516 = vunpack.c.l.b16 %v4004
        %v4517 = vunpack.c.l.b16 %v4005
        %v4518 = vunpack.c.l.b16 %v4006
        %v4519 = vunpack.c.l.b16 %v4007
        %v4520 = vunpack.c.l.b16 %v4008
        %v4521 = vunpack.c.l.b16 %v4009
        %v4522 = vunpack.c.l.b16 %v4010
        %v4523 = vunpack.c.l.b16 %v4011
        %v4524 = vunpack.c.l.b16 %v4012
        %v4525 = vunpack.c.l.b16 %v4013
        %v4526 = vunpack.c.l.b16 %v4014
        %v4527 = vunpack.c.l.b16 %v4015
        %v4528 = vunpack.c.l.b16 %v4016
        %v4529 = vunpack.c.l.b16 %v4017
        %v4530 = vunpack.c.l.b16 %v4018
        %v4531 = vunpack.c.l.b16 %v4019
        %v4532 = vunpack.c.l.b16 %v4020
        %v4533 = vunpack.c.l.b16 %v4021
        %v4534 = vunpack.c.l.b16 %v4022
        %v4535 = vunpack.c.l.b16 %v4023
        %v4536 = vunpack.c.l.b16 %v4024
        %v4537 = vunpack.c.l.b16 %v4025
        %v4538 = vunpack.c.l.b16 %v4026
        %v4539 = vunpack.c.l.b16 %v4027
        %v4540 = vunpack.c.l.b16 %v4028
        %v4541 = vunpack.c.l.b16 %v4029
        %v4542 = vunpack.c.l.b16 %v4030
        %v4543 = vunpack.c.l.b16 %v4031
        %v4544 = vunpack.c.l.b16 %v4032
        %v4545 = vunpack.c.l.b16 %v4033
        %v4546 = vunpack.c.l.b16 %v4034
        %v4547 = vunpack.c.l.b16 %v4035
        %v4548 = vunpack.c.l.b16 %v4036
        %v4549 = vunpack.c.l.b16 %v4037
        %v4550 = vunpack.c.l.b16 %v4038
        %v4551 = vunpack.c.l.b16 %v4039
        %v4552 = vunpack.c.l.b16 %v4040
        %v4553 = vunpack.c.l.b16 %v4041
        %v4554 = vunpack.c.l.b16 %v4042
        %v4555 = vunpack.c.l.b16 %v4043
        %v4556 = vunpack.c.l.b16 %v4044
        %v4557 = vunpack.c.l.b16 %v4045
        %v4558 = vunpack.c.l.b16 %v4046
        %v4559 = vunpack.c.l.b16 %v4047
        %v4560 = vunpack.c.l.b16 %v4048
        %v4561 = vunpack.c.l.b16 %v4049
        %v4562 = vunpack.c.l.b16 %v4050
        %v4563 = vunpack.c.l.b16 %v4051
        %v4564 = vunpack.c.l.b16 %v4052
        %v4565 = vunpack.c.l.b16 %v4053
        %v4566 = vunpack.c.l.b16 %v4054
        %v4567 = vunpack.c.l.b16 %v4055
        %v4568 = vunpack.c.l.b16 %v4056
        %v4569 = vunpack.c.l.b16 %v4057
        %v4570 = vunpack.c.l.b16 %v4058
        %v4571 = vunpack.c.l.b16 %v4059
        %v4572 = vunpack.c.l.b16 %v4060
        %v4573 = vunpack.c.l.b16 %v4061
        %v4574 = vunpack.c.l.b16 %v4062
        %v4575 = vunpack.c.l.b16 %v4063
        %v4576 = vunpack.c.l.b16 %v4064
        %v4577 = vunpack.c.l.b16 %v4065
        %v4578 = vunpack.c.l.b16 %v4066
        %v4579 = vunpack.c.l.b16 %v4067
        %v4580 = vunpack.c.l.b16 %v4068
        %v4581 = vunpack.c.l.b16 %v4069
        %v4582 = vunpack.c.l.b16 %v4070
        %v4583 = vunpack.c.l.b16 %v4071
        %v4584 = vunpack.c.l.b16 %v4072
        %v4585 = vunpack.c.l.b16 %v4073
        %v4586 = vunpack.c.l.b16 %v4074
        %v4587 = vunpack.c.l.b16 %v4075
        %v4588 = vunpack.c.l.b16 %v4076
        %v4589 = vunpack.c.l.b16 %v4077
        %v4590 = vunpack.c.l.b16 %v4078
        %v4591 = vunpack.c.l.b16 %v4079
        %v4592 = vunpack.c.l.b16 %v4080
        %v4593 = vunpack.c.l.b16 %v4081
        %v4594 = vunpack.c.l.b16 %v4082
        %v4595 = vunpack.c.l.b16 %v4083
        %v4596 = vunpack.c.l.b16 %v4084
        %v4597 = vunpack.c.l.b16 %v4085
        %v4598 = vunpack.c.l.b16 %v4086
        %v4599 = vunpack.c.l.b16 %v4087
        %v4600 = vunpack.c.l.b16 %v4088
        %v4601 = vunpack.c.l.b16 %v4089
        %v4602 = vunpack.c.l.b16 %v4090
        %v4603 = vunpack.c.l.b16 %v4091
        %v4604 = vunpack.c.l.b16 %v4092
        %v4605 = vunpack.c.l.b16 %v4093
        %v4606 = vunpack.c.l.b16 %v4094
        %v4607 = vunpack.c.l.b16 %v4095
        %v4608 = vunpack.c.l.b16 %v4096
        %v4609 = vunpack.c.l.b16 %v4097
        %v4610 = vunpack.c.l.b16 %v4098
        %v4611 = vunpack.c.l.b16 %v4099
        %v4612 = vunpack.c.l.b16 %v4100
        %v4613 = vunpack.c.l.b16 %v4101
        %v4614 = vunpack.c.l.b16 %v4102
        %v4615 = vunpack.c.l.b16 %v4103
        %v4616 = vunpack.c.l.b16 %v4104
        %v4617 = vunpack.c.l.b16 %v4105
        %v4618 = vunpack.c.l.b16 %v4106
        %v4619 = vunpack.c.l.b16 %v4107
        %v4620 = vunpack.c.l.b16 %v4108
        %v4621 = vunpack.c.l.b16 %v4109
        %v4622 = vunpack.c.l.b16 %v4110
        %v4623 = vunpack.c.l.b16 %v4111
        %v4624 = vunpack.c.l.b16 %v4112
        %v4625 = vunpack.c.l.b16 %v4113
        %v4626 = vunpack.c.l.b16 %v4114
        %v4627 = vunpack.c.l.b16 %v4115
        %v4628 = vunpack.c.l.b16 %v4116
        %v4629 = vunpack.c.l.b16 %v4117
        %v4630 = vunpack.c.l.b16 %v4118
        %v4631 = vunpack.c.l.b16 %v4119
        %v4632 = vunpack.c.l.b16 %v4120
        %v4633 = vunpack.c.l.b16 %v4121
        %v4634 = vunpack.c.l.b16 %v4122
        %v4635 = vunpack.c.l.b16 %v4123
        %v4636 = vunpack.c.l.b16 %v4124
        %v4637 = vunpack.c.l.b16 %v4125
        %v4638 = vunpack.c.l.b16 %v4126
        %v4639 = vunpack.c.l.b16 %v4127
        %v4640 = vunpack.c.l.b16 %v4128
        %v4641 = vunpack.c.l.b16 %v4129
        %v4642 = vunpack.c.l.b16 %v4130
        %v4643 = vunpack.c.l.b16 %v4131
        %v4644 = vunpack.c.l.b16 %v4132
        %v4645 = vunpack.c.l.b16 %v4133
        %v4646 = vunpack.c.l.b16 %v4134
        %v4647 = vunpack.c.l.b16 %v4135
        %v4648 = vunpack.c.l.b16 %v4136
        %v4649 = vunpack.c.l.b16 %v4137
        %v4650 = vunpack.c.l.b16 %v4138
        %v4651 = vunpack.c.l.b16 %v4139
        %v4652 = vunpack.c.l.b16 %v4140
        %v4653 = vunpack.c.l.b16 %v4141
        %v4654 = vunpack.c.l.b16 %v4142
        %v4655 = vunpack.c.l.b16 %v4143
        %v4656 = vunpack.c.l.b16 %v4144
        %v4657 = vunpack.c.l.b16 %v4145
        %v4658 = vunpack.c.l.b16 %v4146
        %v4659 = vunpack.c.l.b16 %v4147
        %v4660 = vunpack.c.l.b16 %v4148
        %v4661 = vunpack.c.l.b16 %v4149
        %v4662 = vunpack.c.l.b16 %v4150
        %v4663 = vunpack.c.l.b16 %v4151
        %v4664 = vunpack.c.l.b16 %v4152
        %v4665 = vunpack.c.l.b16 %v4153
        %v4666 = vunpack.c.l.b16 %v4154
        %v4667 = vunpack.c.l.b16 %v4155
        %v4668 = vunpack.c.l.b16 %v4156
        %v4669 = vunpack.c.l.b16 %v4157
        %v4670 = vunpack.c.l.b16 %v4158
        %v4671 = vunpack.c.l.b16 %v4159
        %v4672 = vunpack.c.l.b16 %v4160
        %v4673 = vunpack.c.l.b16 %v4161
        %v4674 = vunpack.c.l.b16 %v4162
        %v4675 = vunpack.c.l.b16 %v4163
        %v4676 = vunpack.c.l.b16 %v4164
        %v4677 = vunpack.c.l.b16 %v4165
        %v4678 = vunpack.c.l.b16 %v4166
        %v4679 = vunpack.c.l.b16 %v4167
        %v4680 = vunpack.c.l.b16 %v4168
        %v4681 = vunpack.c.l.b16 %v4169
        %v4682 = vunpack.c.l.b16 %v4170
        %v4683 = vunpack.c.l.b16 %v4171
        %v4684 = vunpack.c.l.b16 %v4172
        %v4685 = vunpack.c.l.b16 %v4173
        %v4686 = vpack.c.b16 %v4431, %v4430
        %v4687 = vpack.c.b16 %v4433, %v4432
        %v4688 = vpack.c.b16 %v4435, %v4434
        %v4689 = vpack.c.b16 %v4437, %v4436
        %v4690 = vpack.c.b16 %v4439, %v4438
        %v4691 = vpack.c.b16 %v4441, %v4440
        %v4692 = vpack.c.b16 %v4443, %v4442
        %v4693 = vpack.c.b16 %v4445, %v4444
        %v4694 = vpack.c.b16 %v4447, %v4446
        %v4695 = vpack.c.b16 %v4449, %v4448
        %v4696 = vpack.c.b16 %v4451, %v4450
        %v4697 = vpack.c.b16 %v4453, %v4452
        %v4698 = vpack.c.b16 %v4455, %v4454
        %v4699 = vpack.c.b16 %v4457, %v4456
        %v4700 = vpack.c.b16 %v4459, %v4458
        %v4701 = vpack.c.b16 %v4461, %v4460
        %v4702 = vpack.c.b16 %v4463, %v4462
        %v4703 = vpack.c.b16 %v4465, %v4464
        %v4704 = vpack.c.b16 %v4467, %v4466
        %v4705 = vpack.c.b16 %v4469, %v4468
        %v4706 = vpack.c.b16 %v4471, %v4470
        %v4707 = vpack.c.b16 %v4473, %v4472
        %v4708 = vpack.c.b16 %v4475, %v4474
        %v4709 = vpack.c.b16 %v4477, %v4476
        %v4710 = vpack.c.b16 %v4479, %v4478
        %v4711 = vpack.c.b16 %v4481, %v4480
        %v4712 = vpack.c.b16 %v4483, %v4482
        %v4713 = vpack.c.b16 %v4485, %v4484
        %v4714 = vpack.c.b16 %v4487, %v4486
        %v4715 = vpack.c.b16 %v4489, %v4488
        %v4716 = vpack.c.b16 %v4491, %v4490
        %v4717 = vpack.c.b16 %v4493, %v4492
        %v4718 = vpack.c.b16 %v4495, %v4494
        %v4719 = vpack.c.b16 %v4497, %v4496
        %v4720 = vpack.c.b16 %v4499, %v4498
        %v4721 = vpack.c.b16 %v4501, %v4500
        %v4722 = vpack.c.b16 %v4503, %v4502
        %v4723 = vpack.c.b16 %v4505, %v4504
        %v4724 = vpack.c.b16 %v4507, %v4506
        %v4725 = vpack.c.b16 %v4509, %v4508
        %v4726 = vpack.c.b16 %v4511, %v4510
        %v4727 = vpack.c.b16 %v4513, %v4512
        %v4728 = vpack.c.b16 %v4515, %v4514
        %v4729 = vpack.c.b16 %v4517, %v4516
        %v4730 = vpack.c.b16 %v4519, %v4518
        %v4731 = vpack.c.b16 %v4521, %v4520
        %v4732 = vpack.c.b16 %v4523, %v4522
        %v4733 = vpack.c.b16 %v4525, %v4524
        %v4734 = vpack.c.b16 %v4527, %v4526
        %v4735 = vpack.c.b16 %v4529, %v4528
        %v4736 = vpack.c.b16 %v4531, %v4530
        %v4737 = vpack.c.b16 %v4533, %v4532
        %v4738 = vpack.c.b16 %v4535, %v4534
        %v4739 = vpack.c.b16 %v4537, %v4536
        %v4740 = vpack.c.b16 %v4539, %v4538
        %v4741 = vpack.c.b16 %v4541, %v4540
        %v4742 = vpack.c.b16 %v4543, %v4542
        %v4743 = vpack.c.b16 %v4545, %v4544
        %v4744 = vpack.c.b16 %v4547, %v4546
        %v4745 = vpack.c.b16 %v4549, %v4548
        %v4746 = vpack.c.b16 %v4551, %v4550
        %v4747 = vpack.c.b16 %v4553, %v4552
        %v4748 = vpack.c.b16 %v4555, %v4554
        %v4749 = vpack.c.b16 %v4557, %v4556
        %v4750 = vpack.c.b16 %v4559, %v4558
        %v4751 = vpack.c.b16 %v4561, %v4560
        %v4752 = vpack.c.b16 %v4563, %v4562
        %v4753 = vpack.c.b16 %v4565, %v4564
        %v4754 = vpack.c.b16 %v4567, %v4566
        %v4755 = vpack.c.b16 %v4569, %v4568
        %v4756 = vpack.c.b16 %v4571, %v4570
        %v4757 = vpack.c.b16 %v4573, %v4572
        %v4758 = vpack.c.b16 %v4575, %v4574
        %v4759 = vpack.c.b16 %v4577, %v4576
        %v4760 = vpack.c.b16 %v4579, %v4578
        %v4761 = vpack.c.b16 %v4581, %v4580
        %v4762 = vpack.c.b16 %v4583, %v4582
        %v4763 = vpack.c.b16 %v4585, %v4584
        %v4764 = vpack.c.b16 %v4587, %v4586
        %v4765 = vpack.c.b16 %v4589, %v4588
        %v4766 = vpack.c.b16 %v4591, %v4590
        %v4767 = vpack.c.b16 %v4593, %v4592
        %v4768 = vpack.c.b16 %v4595, %v4594
        %v4769 = vpack.c.b16 %v4597, %v4596
        %v4770 = vpack.c.b16 %v4599, %v4598
        %v4771 = vpack.c.b16 %v4601, %v4600
        %v4772 = vpack.c.b16 %v4603, %v4602
        %v4773 = vpack.c.b16 %v4605, %v4604
        %v4774 = vpack.c.b16 %v4607, %v4606
        %v4775 = vpack.c.b16 %v4609, %v4608
        %v4776 = vpack.c.b16 %v4611, %v4610
        %v4777 = vpack.c.b16 %v4613, %v4612
        %v4778 = vpack.c.b16 %v4615, %v4614
        %v4779 = vpack.c.b16 %v4617, %v4616
        %v4780 = vpack.c.b16 %v4619, %v4618
        %v4781 = vpack.c.b16 %v4621, %v4620
        %v4782 = vpack.c.b16 %v4623, %v4622
        %v4783 = vpack.c.b16 %v4625, %v4624
        %v4784 = vpack.c.b16 %v4627, %v4626
        %v4785 = vpack.c.b16 %v4629, %v4628
        %v4786 = vpack.c.b16 %v4631, %v4630
        %v4787 = vpack.c.b16 %v4633, %v4632
        %v4788 = vpack.c.b16 %v4635, %v4634
        %v4789 = vpack.c.b16 %v4637, %v4636
        %v4790 = vpack.c.b16 %v4639, %v4638
        %v4791 = vpack.c.b16 %v4641, %v4640
        %v4792 = vpack.c.b16 %v4643, %v4642
        %v4793 = vpack.c.b16 %v4645, %v4644
        %v4794 = vpack.c.b16 %v4647, %v4646
        %v4795 = vpack.c.b16 %v4649, %v4648
        %v4796 = vpack.c.b16 %v4651, %v4650
        %v4797 = vpack.c.b16 %v4653, %v4652
        %v4798 = vpack.c.b16 %v4655, %v4654
        %v4799 = vpack.c.b16 %v4657, %v4656
        %v4800 = vpack.c.b16 %v4659, %v4658
        %v4801 = vpack.c.b16 %v4661, %v4660
        %v4802 = vpack.c.b16 %v4663, %v4662
        %v4803 = vpack.c.b16 %v4665, %v4664
        %v4804 = vpack.c.b16 %v4667, %v4666
        %v4805 = vpack.c.b16 %v4669, %v4668
        %v4806 = vpack.c.b16 %v4671, %v4670
        %v4807 = vpack.c.b16 %v4673, %v4672
        %v4808 = vpack.c.b16 %v4675, %v4674
        %v4809 = vpack.c.b16 %v4677, %v4676
        %v4810 = vpack.c.b16 %v4679, %v4678
        %v4811 = vpack.c.b16 %v4681, %v4680
        %v4812 = vpack.c.b16 %v4683, %v4682
        %v4813 = vpack.c.b16 %v4685, %v4684
        %4942 = vmatprep.subr.bf16.mxu0 0
        %4943 = vmatpush1.bf16.msra.mxu0 %v4686
        %4944 = vmatprep.subr.bf16.mxu0 0
        %4945 = vmatpush1.bf16.msra.mxu0 %v4687
        %4946 = vmatprep.subr.bf16.mxu0 0
        %4947 = vmatpush1.bf16.msra.mxu0 %v4688
        %4948 = vmatprep.subr.bf16.mxu0 0
        %4949 = vmatpush1.bf16.msra.mxu0 %v4689
        %4950 = vmatprep.subr.bf16.mxu0 0
        %4951 = vmatpush1.bf16.msra.mxu0 %v4690
        %4952 = vmatprep.subr.bf16.mxu0 0
        %4953 = vmatpush1.bf16.msra.mxu0 %v4691
        %4954 = vmatprep.subr.bf16.mxu0 0
        %4955 = vmatpush1.bf16.msra.mxu0 %v4692
        %4956 = vmatprep.subr.bf16.mxu0 0
        %4957 = vmatpush1.bf16.msra.mxu0 %v4693
        %4958 = vmatprep.subr.bf16.mxu0 0
        %4959 = vmatpush1.bf16.msra.mxu0 %v4694
        %4960 = vmatprep.subr.bf16.mxu0 0
        %4961 = vmatpush1.bf16.msra.mxu0 %v4695
        %4962 = vmatprep.subr.bf16.mxu0 0
        %4963 = vmatpush1.bf16.msra.mxu0 %v4696
        %4964 = vmatprep.subr.bf16.mxu0 0
        %4965 = vmatpush1.bf16.msra.mxu0 %v4697
        %4966 = vmatprep.subr.bf16.mxu0 0
        %4967 = vmatpush1.bf16.msra.mxu0 %v4698
        %4968 = vmatprep.subr.bf16.mxu0 0
        %4969 = vmatpush1.bf16.msra.mxu0 %v4699
        %4970 = vmatprep.subr.bf16.mxu0 0
        %4971 = vmatpush1.bf16.msra.mxu0 %v4700
        %4972 = vmatprep.subr.bf16.mxu0 0
        %4973 = vmatpush1.bf16.msra.mxu0 %v4701
        %4974 = vmatprep.mubr.bf16.mxu0 %v3902
        %4975 = vmatmul.mubr.bf16.gmra.mrb[0].mxu0 %v3901
        %v4976 = vpop.f32.mrb[0].mxu0
        %v4977 = vadd.f32 0.0, %v4976
        %v4978 = vpop.f32.mrb[0].mxu0
        %v4979 = vpop.f32.mrb[0].mxu0
        %v4980 = vpop.f32.mrb[0].mxu0
        %4981 = vdwg.mxu0
        %4982 = vmatprep.subr.bf16.mxu0 0
        %4983 = vmatpush1.bf16.msra.mxu0 %v4702
        %4984 = vmatprep.subr.bf16.mxu0 0
        %4985 = vmatpush1.bf16.msra.mxu0 %v4703
        %4986 = vmatprep.subr.bf16.mxu0 0
        %4987 = vmatpush1.bf16.msra.mxu0 %v4704
        %4988 = vmatprep.subr.bf16.mxu0 0
        %4989 = vmatpush1.bf16.msra.mxu0 %v4705
        %4990 = vmatprep.subr.bf16.mxu0 0
        %4991 = vmatpush1.bf16.msra.mxu0 %v4706
        %4992 = vmatprep.subr.bf16.mxu0 0
        %4993 = vmatpush1.bf16.msra.mxu0 %v4707
        %4994 = vmatprep.subr.bf16.mxu0 0
        %4995 = vmatpush1.bf16.msra.mxu0 %v4708
        %4996 = vmatprep.subr.bf16.mxu0 0
        %4997 = vmatpush1.bf16.msra.mxu0 %v4709
        %4998 = vmatprep.subr.bf16.mxu0 0
        %4999 = vmatpush1.bf16.msra.mxu0 %v4710
        %5000 = vmatprep.subr.bf16.mxu0 0
        %5001 = vmatpush1.bf16.msra.mxu0 %v4711
        %5002 = vmatprep.subr.bf16.mxu0 0
        %5003 = vmatpush1.bf16.msra.mxu0 %v4712
        %5004 = vmatprep.subr.bf16.mxu0 0
        %5005 = vmatpush1.bf16.msra.mxu0 %v4713
        %5006 = vmatprep.subr.bf16.mxu0 0
        %5007 = vmatpush1.bf16.msra.mxu0 %v4714
        %5008 = vmatprep.subr.bf16.mxu0 0
        %5009 = vmatpush1.bf16.msra.mxu0 %v4715
        %5010 = vmatprep.subr.bf16.mxu0 0
        %5011 = vmatpush1.bf16.msra.mxu0 %v4716
        %5012 = vmatprep.subr.bf16.mxu0 0
        %5013 = vmatpush1.bf16.msra.mxu0 %v4717
        %5014 = vmatprep.mubr.bf16.mxu0 %v3904
        %5015 = vmatmul.mubr.bf16.gmra.mrb[0].mxu0 %v3903
        %v5016 = vpop.f32.mrb[0].mxu0
        %v5017 = vadd.f32 %v4977, %v5016
        %v5018 = vpop.f32.mrb[0].mxu0
        %v5019 = vpop.f32.mrb[0].mxu0
        %v5020 = vpop.f32.mrb[0].mxu0
        %5021 = vdwg.mxu0
        %5022 = vmatprep.subr.bf16.mxu0 0
        %5023 = vmatpush1.bf16.msra.mxu0 %v4718
        %5024 = vmatprep.subr.bf16.mxu0 0
        %5025 = vmatpush1.bf16.msra.mxu0 %v4719
        %5026 = vmatprep.subr.bf16.mxu0 0
        %5027 = vmatpush1.bf16.msra.mxu0 %v4720
        %5028 = vmatprep.subr.bf16.mxu0 0
        %5029 = vmatpush1.bf16.msra.mxu0 %v4721
        %5030 = vmatprep.subr.bf16.mxu0 0
        %5031 = vmatpush1.bf16.msra.mxu0 %v4722
        %5032 = vmatprep.subr.bf16.mxu0 0
        %5033 = vmatpush1.bf16.msra.mxu0 %v4723
        %5034 = vmatprep.subr.bf16.mxu0 0
        %5035 = vmatpush1.bf16.msra.mxu0 %v4724
        %5036 = vmatprep.subr.bf16.mxu0 0
        %5037 = vmatpush1.bf16.msra.mxu0 %v4725
        %5038 = vmatprep.subr.bf16.mxu0 0
        %5039 = vmatpush1.bf16.msra.mxu0 %v4726
        %5040 = vmatprep.subr.bf16.mxu0 0
        %5041 = vmatpush1.bf16.msra.mxu0 %v4727
        %5042 = vmatprep.subr.bf16.mxu0 0
        %5043 = vmatpush1.bf16.msra.mxu0 %v4728
        %5044 = vmatprep.subr.bf16.mxu0 0
        %5045 = vmatpush1.bf16.msra.mxu0 %v4729
        %5046 = vmatprep.subr.bf16.mxu0 0
        %5047 = vmatpush1.bf16.msra.mxu0 %v4730
        %5048 = vmatprep.subr.bf16.mxu0 0
        %5049 = vmatpush1.bf16.msra.mxu0 %v4731
        %5050 = vmatprep.subr.bf16.mxu0 0
        %5051 = vmatpush1.bf16.msra.mxu0 %v4732
        %5052 = vmatprep.subr.bf16.mxu0 0
        %5053 = vmatpush1.bf16.msra.mxu0 %v4733
        %5054 = vmatprep.mubr.bf16.mxu0 %v3906
        %5055 = vmatmul.mubr.bf16.gmra.mrb[0].mxu0 %v3905
        %v5056 = vpop.f32.mrb[0].mxu0
        %v5057 = vadd.f32 %v5017, %v5056
        %v5058 = vpop.f32.mrb[0].mxu0
        %v5059 = vpop.f32.mrb[0].mxu0
        %v5060 = vpop.f32.mrb[0].mxu0
        %5061 = vdwg.mxu0
        %5062 = vmatprep.subr.bf16.mxu0 0
        %5063 = vmatpush1.bf16.msra.mxu0 %v4734
        %5064 = vmatprep.subr.bf16.mxu0 0
        %5065 = vmatpush1.bf16.msra.mxu0 %v4735
        %5066 = vmatprep.subr.bf16.mxu0 0
        %5067 = vmatpush1.bf16.msra.mxu0 %v4736
        %5068 = vmatprep.subr.bf16.mxu0 0
        %5069 = vmatpush1.bf16.msra.mxu0 %v4737
        %5070 = vmatprep.subr.bf16.mxu0 0
        %5071 = vmatpush1.bf16.msra.mxu0 %v4738
        %5072 = vmatprep.subr.bf16.mxu0 0
        %5073 = vmatpush1.bf16.msra.mxu0 %v4739
        %5074 = vmatprep.subr.bf16.mxu0 0
        %5075 = vmatpush1.bf16.msra.mxu0 %v4740
        %5076 = vmatprep.subr.bf16.mxu0 0
        %5077 = vmatpush1.bf16.msra.mxu0 %v4741
        %5078 = vmatprep.subr.bf16.mxu0 0
        %5079 = vmatpush1.bf16.msra.mxu0 %v4742
        %5080 = vmatprep.subr.bf16.mxu0 0
        %5081 = vmatpush1.bf16.msra.mxu0 %v4743
        %5082 = vmatprep.subr.bf16.mxu0 0
        %5083 = vmatpush1.bf16.msra.mxu0 %v4744
        %5084 = vmatprep.subr.bf16.mxu0 0
        %5085 = vmatpush1.bf16.msra.mxu0 %v4745
        %5086 = vmatprep.subr.bf16.mxu0 0
        %5087 = vmatpush1.bf16.msra.mxu0 %v4746
        %5088 = vmatprep.subr.bf16.mxu0 0
        %5089 = vmatpush1.bf16.msra.mxu0 %v4747
        %5090 = vmatprep.subr.bf16.mxu0 0
        %5091 = vmatpush1.bf16.msra.mxu0 %v4748
        %5092 = vmatprep.subr.bf16.mxu0 0
        %5093 = vmatpush1.bf16.msra.mxu0 %v4749
        %5094 = vmatprep.mubr.bf16.mxu0 %v3908
        %5095 = vmatmul.mubr.bf16.gmra.mrb[0].mxu0 %v3907
        %v5096 = vpop.f32.mrb[0].mxu0
        %v5097 = vadd.f32 %v5057, %v5096
        %v5098 = vpop.f32.mrb[0].mxu0
        %v5099 = vpop.f32.mrb[0].mxu0
        %v5100 = vpop.f32.mrb[0].mxu0
        %5101 = vdwg.mxu0
        %5102 = vmatprep.subr.bf16.mxu0 0
        %5103 = vmatpush1.bf16.msra.mxu0 %v4750
        %5104 = vmatprep.subr.bf16.mxu0 0
        %5105 = vmatpush1.bf16.msra.mxu0 %v4751
        %5106 = vmatprep.subr.bf16.mxu0 0
        %5107 = vmatpush1.bf16.msra.mxu0 %v4752
        %5108 = vmatprep.subr.bf16.mxu0 0
        %5109 = vmatpush1.bf16.msra.mxu0 %v4753
        %5110 = vmatprep.subr.bf16.mxu0 0
        %5111 = vmatpush1.bf16.msra.mxu0 %v4754
        %5112 = vmatprep.subr.bf16.mxu0 0
        %5113 = vmatpush1.bf16.msra.mxu0 %v4755
        %5114 = vmatprep.subr.bf16.mxu0 0
        %5115 = vmatpush1.bf16.msra.mxu0 %v4756
        %5116 = vmatprep.subr.bf16.mxu0 0
        %5117 = vmatpush1.bf16.msra.mxu0 %v4757
        %5118 = vmatprep.subr.bf16.mxu0 0
        %5119 = vmatpush1.bf16.msra.mxu0 %v4758
        %5120 = vmatprep.subr.bf16.mxu0 0
        %5121 = vmatpush1.bf16.msra.mxu0 %v4759
        %5122 = vmatprep.subr.bf16.mxu0 0
        %5123 = vmatpush1.bf16.msra.mxu0 %v4760
        %5124 = vmatprep.subr.bf16.mxu0 0
        %5125 = vmatpush1.bf16.msra.mxu0 %v4761
        %5126 = vmatprep.subr.bf16.mxu0 0
        %5127 = vmatpush1.bf16.msra.mxu0 %v4762
        %5128 = vmatprep.subr.bf16.mxu0 0
        %5129 = vmatpush1.bf16.msra.mxu0 %v4763
        %5130 = vmatprep.subr.bf16.mxu0 0
        %5131 = vmatpush1.bf16.msra.mxu0 %v4764
        %5132 = vmatprep.subr.bf16.mxu0 0
        %5133 = vmatpush1.bf16.msra.mxu0 %v4765
        %5134 = vmatprep.mubr.bf16.mxu0 %v3910
        %5135 = vmatmul.mubr.bf16.gmra.mrb[0].mxu0 %v3909
        %v5136 = vpop.f32.mrb[0].mxu0
        %v5137 = vadd.f32 %v5097, %v5136
        %v5138 = vpop.f32.mrb[0].mxu0
        %v5139 = vpop.f32.mrb[0].mxu0
        %v5140 = vpop.f32.mrb[0].mxu0
        %5141 = vdwg.mxu0
        %5142 = vmatprep.subr.bf16.mxu0 0
        %5143 = vmatpush1.bf16.msra.mxu0 %v4766
        %5144 = vmatprep.subr.bf16.mxu0 0
        %5145 = vmatpush1.bf16.msra.mxu0 %v4767
        %5146 = vmatprep.subr.bf16.mxu0 0
        %5147 = vmatpush1.bf16.msra.mxu0 %v4768
        %5148 = vmatprep.subr.bf16.mxu0 0
        %5149 = vmatpush1.bf16.msra.mxu0 %v4769
        %5150 = vmatprep.subr.bf16.mxu0 0
        %5151 = vmatpush1.bf16.msra.mxu0 %v4770
        %5152 = vmatprep.subr.bf16.mxu0 0
        %5153 = vmatpush1.bf16.msra.mxu0 %v4771
        %5154 = vmatprep.subr.bf16.mxu0 0
        %5155 = vmatpush1.bf16.msra.mxu0 %v4772
        %5156 = vmatprep.subr.bf16.mxu0 0
        %5157 = vmatpush1.bf16.msra.mxu0 %v4773
        %5158 = vmatprep.subr.bf16.mxu0 0
        %5159 = vmatpush1.bf16.msra.mxu0 %v4774
        %5160 = vmatprep.subr.bf16.mxu0 0
        %5161 = vmatpush1.bf16.msra.mxu0 %v4775
        %5162 = vmatprep.subr.bf16.mxu0 0
        %5163 = vmatpush1.bf16.msra.mxu0 %v4776
        %5164 = vmatprep.subr.bf16.mxu0 0
        %5165 = vmatpush1.bf16.msra.mxu0 %v4777
        %5166 = vmatprep.subr.bf16.mxu0 0
        %5167 = vmatpush1.bf16.msra.mxu0 %v4778
        %5168 = vmatprep.subr.bf16.mxu0 0
        %5169 = vmatpush1.bf16.msra.mxu0 %v4779
        %5170 = vmatprep.subr.bf16.mxu0 0
        %5171 = vmatpush1.bf16.msra.mxu0 %v4780
        %5172 = vmatprep.subr.bf16.mxu0 0
        %5173 = vmatpush1.bf16.msra.mxu0 %v4781
        %5174 = vmatprep.mubr.bf16.mxu0 %v3912
        %5175 = vmatmul.mubr.bf16.gmra.mrb[0].mxu0 %v3911
        %v5176 = vpop.f32.mrb[0].mxu0
        %v5177 = vadd.f32 %v5137, %v5176
        %v5178 = vpop.f32.mrb[0].mxu0
        %v5179 = vpop.f32.mrb[0].mxu0
        %v5180 = vpop.f32.mrb[0].mxu0
        %5181 = vdwg.mxu0
        %5182 = vmatprep.subr.bf16.mxu0 0
        %5183 = vmatpush1.bf16.msra.mxu0 %v4782
        %5184 = vmatprep.subr.bf16.mxu0 0
        %5185 = vmatpush1.bf16.msra.mxu0 %v4783
        %5186 = vmatprep.subr.bf16.mxu0 0
        %5187 = vmatpush1.bf16.msra.mxu0 %v4784
        %5188 = vmatprep.subr.bf16.mxu0 0
        %5189 = vmatpush1.bf16.msra.mxu0 %v4785
        %5190 = vmatprep.subr.bf16.mxu0 0
        %5191 = vmatpush1.bf16.msra.mxu0 %v4786
        %5192 = vmatprep.subr.bf16.mxu0 0
        %5193 = vmatpush1.bf16.msra.mxu0 %v4787
        %5194 = vmatprep.subr.bf16.mxu0 0
        %5195 = vmatpush1.bf16.msra.mxu0 %v4788
        %5196 = vmatprep.subr.bf16.mxu0 0
        %5197 = vmatpush1.bf16.msra.mxu0 %v4789
        %5198 = vmatprep.subr.bf16.mxu0 0
        %5199 = vmatpush1.bf16.msra.mxu0 %v4790
        %5200 = vmatprep.subr.bf16.mxu0 0
        %5201 = vmatpush1.bf16.msra.mxu0 %v4791
        %5202 = vmatprep.subr.bf16.mxu0 0
        %5203 = vmatpush1.bf16.msra.mxu0 %v4792
        %5204 = vmatprep.subr.bf16.mxu0 0
        %5205 = vmatpush1.bf16.msra.mxu0 %v4793
        %5206 = vmatprep.subr.bf16.mxu0 0
        %5207 = vmatpush1.bf16.msra.mxu0 %v4794
        %5208 = vmatprep.subr.bf16.mxu0 0
        %5209 = vmatpush1.bf16.msra.mxu0 %v4795
        %5210 = vmatprep.subr.bf16.mxu0 0
        %5211 = vmatpush1.bf16.msra.mxu0 %v4796
        %5212 = vmatprep.subr.bf16.mxu0 0
        %5213 = vmatpush1.bf16.msra.mxu0 %v4797
        %5214 = vmatprep.mubr.bf16.mxu0 %v3914
        %5215 = vmatmul.mubr.bf16.gmra.mrb[0].mxu0 %v3913
        %v5216 = vpop.f32.mrb[0].mxu0
        %v5217 = vadd.f32 %v5177, %v5216
        %v5218 = vpop.f32.mrb[0].mxu0
        %v5219 = vpop.f32.mrb[0].mxu0
        %v5220 = vpop.f32.mrb[0].mxu0
        %5221 = vdwg.mxu0
        %5222 = vmatprep.subr.bf16.mxu0 0
        %5223 = vmatpush1.bf16.msra.mxu0 %v4798
        %5224 = vmatprep.subr.bf16.mxu0 0
        %5225 = vmatpush1.bf16.msra.mxu0 %v4799
        %5226 = vmatprep.subr.bf16.mxu0 0
        %5227 = vmatpush1.bf16.msra.mxu0 %v4800
        %5228 = vmatprep.subr.bf16.mxu0 0
        %5229 = vmatpush1.bf16.msra.mxu0 %v4801
        %5230 = vmatprep.subr.bf16.mxu0 0
        %5231 = vmatpush1.bf16.msra.mxu0 %v4802
        %5232 = vmatprep.subr.bf16.mxu0 0
        %5233 = vmatpush1.bf16.msra.mxu0 %v4803
        %5234 = vmatprep.subr.bf16.mxu0 0
        %5235 = vmatpush1.bf16.msra.mxu0 %v4804
        %5236 = vmatprep.subr.bf16.mxu0 0
        %5237 = vmatpush1.bf16.msra.mxu0 %v4805
        %5238 = vmatprep.subr.bf16.mxu0 0
        %5239 = vmatpush1.bf16.msra.mxu0 %v4806
        %5240 = vmatprep.subr.bf16.mxu0 0
        %5241 = vmatpush1.bf16.msra.mxu0 %v4807
        %5242 = vmatprep.subr.bf16.mxu0 0
        %5243 = vmatpush1.bf16.msra.mxu0 %v4808
        %5244 = vmatprep.subr.bf16.mxu0 0
        %5245 = vmatpush1.bf16.msra.mxu0 %v4809
        %5246 = vmatprep.subr.bf16.mxu0 0
        %5247 = vmatpush1.bf16.msra.mxu0 %v4810
        %5248 = vmatprep.subr.bf16.mxu0 0
        %5249 = vmatpush1.bf16.msra.mxu0 %v4811
        %5250 = vmatprep.subr.bf16.mxu0 0
        %5251 = vmatpush1.bf16.msra.mxu0 %v4812
        %5252 = vmatprep.subr.bf16.mxu0 0
        %5253 = vmatpush1.bf16.msra.mxu0 %v4813
        %5254 = vmatprep.mubr.bf16.mxu0 %v3916
        %5255 = vmatmul.mubr.bf16.gmra.mrb[0].mxu0 %v3915
        %v5256 = vpop.f32.mrb[0].mxu0
        %v5257 = vadd.f32 %v5217, %v5256
        %v5258 = vpop.f32.mrb[0].mxu0
        %v5259 = vpop.f32.mrb[0].mxu0
        %v5260 = vpop.f32.mrb[0].mxu0
        %5261 = vdwg.mxu0
        %v5262 = vadd.f32 %v3917, %v5257
        %vm5263 = vcmask 261120
        %5264 = vst.msk [vmem:[%s447] sm:$0xff] %vm5263, %v5262
        %p5265 = scmp.lt.s32.totalorder %s24, 1
        %s5266 = scalar_select %p5265, %s24, 1
        %s5267 = smul.addr %s5266, 8
        %s5268 = scalar_lea.vmem %s7, %s5267
        // Predicated region
        $region73: #{labelnet_forward.1} parent=47 // pred_check
          %p5269 = pneg %p225
        $region74: #{labelnet_forward.1} parent=47 // pred_check_branch
          %5271 = sbr.rel (%p5269) target = $region76
        $region75: #{labelnet_forward.1} parent=47 // pred_region
          _
        $region76: #{labelnet_forward.1} parent=47 // pred_fallthru
          _
      $region48: #{labelnet_forward.1} parent=5 // pred_fallthru
        _
      %p5272 = scmp.le.s32.totalorder 2, %s15
      // Predicated region
      $region77: #{labelnet_forward.1} parent=5 // pred_check
        %p5273 = pneg %p5272
      $region78: #{labelnet_forward.1} parent=5 // pred_check_branch
        %5275 = sbr.rel (%p5273) target = $region80
      $region79: #{labelnet_forward.1} parent=5 // pred_region
        %s5276 = ssub.s32 %s15, 2
        // Predicated region
        $region81: #{labelnet_forward.1} parent=79 // pred_check
          %p5277 = pneg %p231
        $region82: #{labelnet_forward.1} parent=79 // pred_check_branch
          %5279 = sbr.rel (%p5277) target = $region84
        $region83: #{labelnet_forward.1} parent=79 // pred_region
          %p5280 = scmp.lt.s32.totalorder %s26, 1
          %s5281 = scalar_select %p5280, %s26, 1
          %s5282 = smul.addr %s5281, 8
          %s5283 = scalar_lea.vmem %s7, %s5282
        $region84: #{labelnet_forward.1} parent=79 // pred_fallthru
          _
      $region80: #{labelnet_forward.1} parent=5 // pred_fallthru
        _
    $region6: #{labelnet_forward.1} parent=1 // loop_footer
      %s19 = sadd.s32 1, %s15
    $region7: #{labelnet_forward.1} parent=1 // loop_footer_branch
      %14 = sbr.rel target = $region3
    $region8: #{labelnet_forward.1} parent=1 // loop_exit
      _
    %5284 = vsyncpa [#allocation4], 1
    %s5285 = scalar_lea.sflag [#allocation4], 1
    %5286 = vsyncpa %s5285, 1
    %5287 = vsyncpa [#allocation6], 1

</llo_original>
